<compile_context>
chip_gen: v7x
topology: tpu7x:2x2x1
jax: 0.10.0
libtpu: 0.0.40
codegen_flags: <defaults>
</compile_context>

<pallas_src>
import functools

import jax
import jax.numpy as jnp
import numpy as np
from jax.experimental import pallas as pl
from jax.experimental.pallas import tpu as pltpu

EPS = 1e-5
LANE = 128
SUBLANE = 8


def _round_up(x, m):
    return (x + m - 1) // m * m


def _vmem_limit(nbytes):
    # Advisory scoped-VMEM limit: generous headroom over the multi-buffered
    # working set, capped well below v7x's 64 MiB physical VMEM per core.
    return int(min(48 * 2**20, max(16 * 2**20, 4 * nbytes)))


# ---------- pass 1: fused im2col conv + centered BN-stat partials -------------

def _conv_stats_kernel(xp_ref, w_ref, y_ref, s_ref, m2_ref, *, taps, Ho, Wo):
    # xp_ref : (1, Hp, Wp, Cin)  padded NHWC image of this batch element
    # w_ref  : (KH*KW, Cin, C8)  per-tap weights (Cout padded to C8 on sublanes)
    # y_ref  : (1, C8, Ho*Wo)    conv output, channels on sublanes, M on lanes
    # s_ref  : (1, 1, C8)        per-image channel sums (f32)
    # m2_ref : (1, 1, C8)        per-image centered sum-of-squares (f32)
    x = xp_ref[...][0]                                 # (Hp, Wp, Cin)
    mt = Ho * Wo
    cin = x.shape[-1]

    acc = None                                         # (Mt, C8) f32 accumulator
    for t, (kh, kw) in enumerate(taps):
        tap = x[kh:kh + Ho, kw:kw + Wo, :].reshape(mt, cin)
        d = jnp.dot(tap, w_ref[t], preferred_element_type=jnp.float32)
        acc = d if acc is None else acc + d

    # Centered per-image statistics (combined with Chan's formula outside).
    s = jnp.sum(acc, axis=0, keepdims=True)                         # (1, C8)
    mu = s * (1.0 / mt)
    m2 = jnp.sum(jnp.square(acc - mu), axis=0, keepdims=True)       # (1, C8)

    # Transposed store: channels on sublanes, Ho*Wo on lanes -> lane-dense vst
    # and an NCHW-ready (N, C, Ho*Wo) layout.
    y_ref[0] = acc.T.astype(y_ref.dtype)                            # (C8, Mt)
    s_ref[0] = s
    m2_ref[0] = m2


# ---------- pass 2: fused BN affine + ReLU epilogue (in place) -----------------

def _bn_relu_kernel(y_ref, a_ref, b_ref, o_ref):
    # y_ref/o_ref: (1, C8, Mt); a_ref/b_ref: (C8, 1) broadcast over lanes.
    y = y_ref[...].astype(jnp.float32)
    o_ref[...] = jnp.maximum(y * a_ref[...] + b_ref[...], 0.0).astype(o_ref.dtype)


def conv_basic_forward(x_nchw, w_oihw, gamma, beta, *, padding=1,
                       compute_dtype=None):
    """ConvBasic forward. x: (N,Cin,H,W), w: (Cout,Cin,KH,KW) -> (N,Cout,Ho,Wo)."""
    N, Cin, H, W = x_nchw.shape
    Cout, _, KH, KW = w_oihw.shape
    Ho = H + 2 * padding - KH + 1
    Wo = W + 2 * padding - KW + 1
    Hp, Wp = H + 2 * padding, W + 2 * padding
    Mt = Ho * Wo                            # per-image flattened spatial size
    M = N * Mt
    C8 = _round_up(Cout, SUBLANE)           # channels ride the sublane axis

    # ---- tiny wrapper-side prep: NHWC + spatial zero-pad (NO im2col) ----
    xp = jnp.pad(jnp.transpose(x_nchw, (0, 2, 3, 1)),
                 ((0, 0), (padding, padding), (padding, padding), (0, 0)))
    # weights as (KH*KW, Cin, C8), tap order matches the in-kernel loop.
    w_tc = jnp.transpose(w_oihw, (2, 3, 1, 0)).reshape(KH * KW, Cin, Cout)
    w_tc = jnp.pad(w_tc, ((0, 0), (0, 0), (0, C8 - Cout)))

    if compute_dtype is not None:           # bf16 operands: good on v5e/v6e/v7x
        xp = xp.astype(compute_dtype)
        w_tc = w_tc.astype(compute_dtype)
    out_dtype = jnp.dtype(x_nchw.dtype)
    mid_dtype = jnp.dtype(compute_dtype) if compute_dtype is not None else out_dtype

    taps = tuple((kh, kw) for kh in range(KH) for kw in range(KW))
    grid = (N,)
    deep_pipe = N >= 3                      # Buffered(3) only pays with >=3 steps

    def _spec(shape, imap, deep=False):
        if deep and deep_pipe:
            return pl.BlockSpec(shape, imap, pipeline_mode=pl.Buffered(3))
        return pl.BlockSpec(shape, imap)

    itm = jnp.dtype(xp.dtype).itemsize
    imi = mid_dtype.itemsize
    xp_vmem = Hp * _round_up(Wp, SUBLANE) * LANE * itm          # lane-padded block
    y_vmem = C8 * _round_up(Mt, LANE) * imi
    acc_vmem = _round_up(Mt, SUBLANE) * LANE * 4
    vmem1 = _vmem_limit(3 * xp_vmem + 2 * y_vmem + 2 * acc_vmem
                        + KH * KW * Cin * LANE * itm)

    conv_t, s_part, m2_part = pl.pallas_call(
        functools.partial(_conv_stats_kernel, taps=taps, Ho=Ho, Wo=Wo),
        out_shape=(jax.ShapeDtypeStruct((N, C8, Mt), mid_dtype),
                   jax.ShapeDtypeStruct((N, 1, C8), jnp.float32),
                   jax.ShapeDtypeStruct((N, 1, C8), jnp.float32)),
        grid=grid,
        in_specs=[_spec((1, Hp, Wp, Cin), lambda n: (n, 0, 0, 0), deep=True),
                  _spec((KH * KW, Cin, C8), lambda n: (0, 0, 0))],
        out_specs=[_spec((1, C8, Mt), lambda n: (n, 0, 0)),
                   _spec((1, 1, C8), lambda n: (n, 0, 0)),
                   _spec((1, 1, C8), lambda n: (n, 0, 0))],
        compiler_params=pltpu.CompilerParams(
            dimension_semantics=("parallel",), vmem_limit_bytes=vmem1),
    )(xp, w_tc)

    # ---- fold batch stats: Chan combine of per-image centered partials ----
    s = s_part.reshape(N, C8)
    m2 = m2_part.reshape(N, C8)
    mean_i = s / Mt
    mean = jnp.sum(s, axis=0) / M
    m2_tot = jnp.sum(m2, axis=0) + Mt * jnp.sum(jnp.square(mean_i - mean), axis=0)
    var = m2_tot / M                                   # biased train-mode variance
    inv = jax.lax.rsqrt(var + EPS)
    gamma_p = jnp.pad(gamma.astype(jnp.float32), (0, C8 - Cout))
    beta_p = jnp.pad(beta.astype(jnp.float32), (0, C8 - Cout))
    a = (gamma_p * inv).reshape(C8, 1)
    b = (beta_p - mean * gamma_p * inv).reshape(C8, 1)

    vmem2 = _vmem_limit(2 * C8 * _round_up(Mt, LANE) * (imi + out_dtype.itemsize)
                        + 4 * C8 * LANE * 4)
    alias = {0: 0} if mid_dtype == out_dtype else {}   # normalize in place

    out_t = pl.pallas_call(
        _bn_relu_kernel,
        out_shape=jax.ShapeDtypeStruct((N, C8, Mt), out_dtype),
        grid=grid,
        in_specs=[_spec((1, C8, Mt), lambda n: (n, 0, 0), deep=True),
                  _spec((C8, 1), lambda n: (0, 0)),
                  _spec((C8, 1), lambda n: (0, 0))],
        out_specs=_spec((1, C8, Mt), lambda n: (n, 0, 0)),
        input_output_aliases=alias,
        compiler_params=pltpu.CompilerParams(
            dimension_semantics=("parallel",), vmem_limit_bytes=vmem2),
    )(conv_t, a, b)

    # (N, C, Ho*Wo) -> NCHW with a slice + reshape only (no transpose pass).
    return out_t[:, :Cout, :].reshape(N, Cout, Ho, Wo)


def reference_forward(x_nchw, w_oihw, gamma, beta, *, padding=1):
    """Pure-JAX reference (conv + train-mode BN + ReLU), NCHW."""
    y = jax.lax.conv_general_dilated(
        x_nchw, w_oihw, window_strides=(1, 1),
        padding=[(padding, padding), (padding, padding)],
        dimension_numbers=("NCHW", "OIHW", "NCHW"))
    mean = jnp.mean(y, axis=(0, 2, 3), keepdims=True)
    var = jnp.mean((y - mean) ** 2, axis=(0, 2, 3), keepdims=True)
    yn = (y - mean) * jax.lax.rsqrt(var + EPS)
    yn = yn * gamma.reshape(1, -1, 1, 1) + beta.reshape(1, -1, 1, 1)
    return jnp.maximum(yn, 0.0)


if __name__ == "__main__":
    # ConvBasic(nIn=4, nOut=8, kernel=3, stride=1, padding=1) at small shapes.
    N, Cin, H, W = 2, 4, 16, 16
    Cout, KH, KW = 8, 3, 3

    key = jax.random.PRNGKey(0)
    kx, kw, kg, kb = jax.random.split(key, 4)
    x = jax.random.normal(kx, (N, Cin, H, W), dtype=jnp.float32)
    w = jax.random.normal(kw, (Cout, Cin, KH, KW), dtype=jnp.float32) / np.sqrt(Cin * KH * KW)
    gamma = 1.0 + 0.1 * jax.random.normal(kg, (Cout,), dtype=jnp.float32)
    beta = 0.1 * jax.random.normal(kb, (Cout,), dtype=jnp.float32)

    ref = reference_forward(x, w, gamma, beta, padding=1)

    # Exact f32 path (matches the PyTorch module's math).
    fwd = jax.jit(functools.partial(conv_basic_forward, padding=1))
    out = jax.block_until_ready(fwd(x, w, gamma, beta))
    np.testing.assert_allclose(np.asarray(out), np.asarray(ref), rtol=2e-4, atol=2e-4)

    # bf16-operand + bf16-intermediate path (MXU/HBM throughput on all gens);
    # f32 accumulation and f32 BN math kept.
    fwd_bf16 = jax.jit(functools.partial(conv_basic_forward, padding=1,
                                         compute_dtype=jnp.bfloat16))
    out_bf16 = jax.block_until_ready(fwd_bf16(x, w, gamma, beta))
    np.testing.assert_allclose(np.asarray(out_bf16), np.asarray(ref), rtol=1e-1, atol=1e-1)

    print("KERNEL_OK")
</pallas_src>

<mosaic_0001>
module attributes {stable_mosaic.version = 11 : i64} {
  func.func @_conv_stats_kernel(%arg0: i32, %arg1: memref<1x18x18x4xf32, #tpu.memory_space<vmem>>, %arg2: memref<9x4x8xf32, #tpu.memory_space<vmem>>, %arg3: memref<1x8x256xf32, #tpu.memory_space<vmem>>, %arg4: memref<1x1x8xf32, #tpu.memory_space<vmem>>, %arg5: memref<1x1x8xf32, #tpu.memory_space<vmem>>) attributes {dimension_semantics = [#tpu.dimension_semantics<parallel>], iteration_bounds = array<i64: 2>, scalar_prefetch = 0 : i64, scratch_operands = 0 : i64, tpu.core_type = #tpu.core_type<tc>, window_params = [{transform_indices = @transform_0, window_bounds = array<i64: 1, 18, 18, 4>}, {pipeline_mode = #tpu.pipeline_mode<synchronous>, transform_indices = @transform_1, window_bounds = array<i64: 9, 4, 8>}, {transform_indices = @transform_2, window_bounds = array<i64: 1, 8, 256>}, {transform_indices = @transform_3, window_bounds = array<i64: 1, 1, 8>}, {transform_indices = @transform_4, window_bounds = array<i64: 1, 1, 8>}]} {
    %c0 = arith.constant 0 : index
    %c0_0 = arith.constant 0 : index
    %c0_1 = arith.constant 0 : index
    %c0_2 = arith.constant 0 : index
    %0 = vector.load %arg1[%c0, %c0_0, %c0_1, %c0_2] : memref<1x18x18x4xf32, #tpu.memory_space<vmem>>, vector<1x18x18x4xf32>
    %1 = vector.shape_cast %0 : vector<1x18x18x4xf32> to vector<18x18x4xf32>
    %2 = vector.extract_strided_slice %1 {offsets = [0, 0, 0], sizes = [16, 16, 4], strides = [1, 1, 1]} : vector<18x18x4xf32> to vector<16x16x4xf32>
    %3 = vector.shape_cast %2 : vector<16x16x4xf32> to vector<256x4xf32>
    %c0_3 = arith.constant 0 : index
    %c0_4 = arith.constant 0 : index
    %c0_5 = arith.constant 0 : index
    %4 = vector.load %arg2[%c0_3, %c0_4, %c0_5] : memref<9x4x8xf32, #tpu.memory_space<vmem>>, vector<1x4x8xf32>
    %5 = vector.shape_cast %4 : vector<1x4x8xf32> to vector<4x8xf32>
    %cst = arith.constant dense<0.000000e+00> : vector<256x8xf32>
    %6 = tpu.matmul %3, %5, %cst {dimension_numbers = #tpu.dot_dimension_numbers<[1], [0], [0], [1], [0, 0, 1, 1], [], []>} : vector<256x4xf32>, vector<4x8xf32>, vector<256x8xf32> -> vector<256x8xf32>
    %7 = vector.extract_strided_slice %1 {offsets = [0, 1, 0], sizes = [16, 16, 4], strides = [1, 1, 1]} : vector<18x18x4xf32> to vector<16x16x4xf32>
    %8 = vector.shape_cast %7 : vector<16x16x4xf32> to vector<256x4xf32>
    %c1 = arith.constant 1 : index
    %c0_6 = arith.constant 0 : index
    %c0_7 = arith.constant 0 : index
    %9 = vector.load %arg2[%c1, %c0_6, %c0_7] : memref<9x4x8xf32, #tpu.memory_space<vmem>>, vector<1x4x8xf32>
    %10 = vector.shape_cast %9 : vector<1x4x8xf32> to vector<4x8xf32>
    %cst_8 = arith.constant dense<0.000000e+00> : vector<256x8xf32>
    %11 = tpu.matmul %8, %10, %cst_8 {dimension_numbers = #tpu.dot_dimension_numbers<[1], [0], [0], [1], [0, 0, 1, 1], [], []>} : vector<256x4xf32>, vector<4x8xf32>, vector<256x8xf32> -> vector<256x8xf32>
    %12 = arith.addf %6, %11 : vector<256x8xf32>
    %13 = vector.extract_strided_slice %1 {offsets = [0, 2, 0], sizes = [16, 16, 4], strides = [1, 1, 1]} : vector<18x18x4xf32> to vector<16x16x4xf32>
    %14 = vector.shape_cast %13 : vector<16x16x4xf32> to vector<256x4xf32>
    %c2 = arith.constant 2 : index
    %c0_9 = arith.constant 0 : index
    %c0_10 = arith.constant 0 : index
    %15 = vector.load %arg2[%c2, %c0_9, %c0_10] : memref<9x4x8xf32, #tpu.memory_space<vmem>>, vector<1x4x8xf32>
    %16 = vector.shape_cast %15 : vector<1x4x8xf32> to vector<4x8xf32>
    %cst_11 = arith.constant dense<0.000000e+00> : vector<256x8xf32>
    %17 = tpu.matmul %14, %16, %cst_11 {dimension_numbers = #tpu.dot_dimension_numbers<[1], [0], [0], [1], [0, 0, 1, 1], [], []>} : vector<256x4xf32>, vector<4x8xf32>, vector<256x8xf32> -> vector<256x8xf32>
    %18 = arith.addf %12, %17 : vector<256x8xf32>
    %19 = vector.extract_strided_slice %1 {offsets = [1, 0, 0], sizes = [16, 16, 4], strides = [1, 1, 1]} : vector<18x18x4xf32> to vector<16x16x4xf32>
    %20 = vector.shape_cast %19 : vector<16x16x4xf32> to vector<256x4xf32>
    %c3 = arith.constant 3 : index
    %c0_12 = arith.constant 0 : index
    %c0_13 = arith.constant 0 : index
    %21 = vector.load %arg2[%c3, %c0_12, %c0_13] : memref<9x4x8xf32, #tpu.memory_space<vmem>>, vector<1x4x8xf32>
    %22 = vector.shape_cast %21 : vector<1x4x8xf32> to vector<4x8xf32>
    %cst_14 = arith.constant dense<0.000000e+00> : vector<256x8xf32>
    %23 = tpu.matmul %20, %22, %cst_14 {dimension_numbers = #tpu.dot_dimension_numbers<[1], [0], [0], [1], [0, 0, 1, 1], [], []>} : vector<256x4xf32>, vector<4x8xf32>, vector<256x8xf32> -> vector<256x8xf32>
    %24 = arith.addf %18, %23 : vector<256x8xf32>
    %25 = vector.extract_strided_slice %1 {offsets = [1, 1, 0], sizes = [16, 16, 4], strides = [1, 1, 1]} : vector<18x18x4xf32> to vector<16x16x4xf32>
    %26 = vector.shape_cast %25 : vector<16x16x4xf32> to vector<256x4xf32>
    %c4 = arith.constant 4 : index
    %c0_15 = arith.constant 0 : index
    %c0_16 = arith.constant 0 : index
    %27 = vector.load %arg2[%c4, %c0_15, %c0_16] : memref<9x4x8xf32, #tpu.memory_space<vmem>>, vector<1x4x8xf32>
    %28 = vector.shape_cast %27 : vector<1x4x8xf32> to vector<4x8xf32>
    %cst_17 = arith.constant dense<0.000000e+00> : vector<256x8xf32>
    %29 = tpu.matmul %26, %28, %cst_17 {dimension_numbers = #tpu.dot_dimension_numbers<[1], [0], [0], [1], [0, 0, 1, 1], [], []>} : vector<256x4xf32>, vector<4x8xf32>, vector<256x8xf32> -> vector<256x8xf32>
    %30 = arith.addf %24, %29 : vector<256x8xf32>
    %31 = vector.extract_strided_slice %1 {offsets = [1, 2, 0], sizes = [16, 16, 4], strides = [1, 1, 1]} : vector<18x18x4xf32> to vector<16x16x4xf32>
    %32 = vector.shape_cast %31 : vector<16x16x4xf32> to vector<256x4xf32>
    %c5 = arith.constant 5 : index
    %c0_18 = arith.constant 0 : index
    %c0_19 = arith.constant 0 : index
    %33 = vector.load %arg2[%c5, %c0_18, %c0_19] : memref<9x4x8xf32, #tpu.memory_space<vmem>>, vector<1x4x8xf32>
    %34 = vector.shape_cast %33 : vector<1x4x8xf32> to vector<4x8xf32>
    %cst_20 = arith.constant dense<0.000000e+00> : vector<256x8xf32>
    %35 = tpu.matmul %32, %34, %cst_20 {dimension_numbers = #tpu.dot_dimension_numbers<[1], [0], [0], [1], [0, 0, 1, 1], [], []>} : vector<256x4xf32>, vector<4x8xf32>, vector<256x8xf32> -> vector<256x8xf32>
    %36 = arith.addf %30, %35 : vector<256x8xf32>
    %37 = vector.extract_strided_slice %1 {offsets = [2, 0, 0], sizes = [16, 16, 4], strides = [1, 1, 1]} : vector<18x18x4xf32> to vector<16x16x4xf32>
    %38 = vector.shape_cast %37 : vector<16x16x4xf32> to vector<256x4xf32>
    %c6 = arith.constant 6 : index
    %c0_21 = arith.constant 0 : index
    %c0_22 = arith.constant 0 : index
    %39 = vector.load %arg2[%c6, %c0_21, %c0_22] : memref<9x4x8xf32, #tpu.memory_space<vmem>>, vector<1x4x8xf32>
    %40 = vector.shape_cast %39 : vector<1x4x8xf32> to vector<4x8xf32>
    %cst_23 = arith.constant dense<0.000000e+00> : vector<256x8xf32>
    %41 = tpu.matmul %38, %40, %cst_23 {dimension_numbers = #tpu.dot_dimension_numbers<[1], [0], [0], [1], [0, 0, 1, 1], [], []>} : vector<256x4xf32>, vector<4x8xf32>, vector<256x8xf32> -> vector<256x8xf32>
    %42 = arith.addf %36, %41 : vector<256x8xf32>
    %43 = vector.extract_strided_slice %1 {offsets = [2, 1, 0], sizes = [16, 16, 4], strides = [1, 1, 1]} : vector<18x18x4xf32> to vector<16x16x4xf32>
    %44 = vector.shape_cast %43 : vector<16x16x4xf32> to vector<256x4xf32>
    %c7 = arith.constant 7 : index
    %c0_24 = arith.constant 0 : index
    %c0_25 = arith.constant 0 : index
    %45 = vector.load %arg2[%c7, %c0_24, %c0_25] : memref<9x4x8xf32, #tpu.memory_space<vmem>>, vector<1x4x8xf32>
    %46 = vector.shape_cast %45 : vector<1x4x8xf32> to vector<4x8xf32>
    %cst_26 = arith.constant dense<0.000000e+00> : vector<256x8xf32>
    %47 = tpu.matmul %44, %46, %cst_26 {dimension_numbers = #tpu.dot_dimension_numbers<[1], [0], [0], [1], [0, 0, 1, 1], [], []>} : vector<256x4xf32>, vector<4x8xf32>, vector<256x8xf32> -> vector<256x8xf32>
    %48 = arith.addf %42, %47 : vector<256x8xf32>
    %49 = vector.extract_strided_slice %1 {offsets = [2, 2, 0], sizes = [16, 16, 4], strides = [1, 1, 1]} : vector<18x18x4xf32> to vector<16x16x4xf32>
    %50 = vector.shape_cast %49 : vector<16x16x4xf32> to vector<256x4xf32>
    %c8 = arith.constant 8 : index
    %c0_27 = arith.constant 0 : index
    %c0_28 = arith.constant 0 : index
    %51 = vector.load %arg2[%c8, %c0_27, %c0_28] : memref<9x4x8xf32, #tpu.memory_space<vmem>>, vector<1x4x8xf32>
    %52 = vector.shape_cast %51 : vector<1x4x8xf32> to vector<4x8xf32>
    %cst_29 = arith.constant dense<0.000000e+00> : vector<256x8xf32>
    %53 = tpu.matmul %50, %52, %cst_29 {dimension_numbers = #tpu.dot_dimension_numbers<[1], [0], [0], [1], [0, 0, 1, 1], [], []>} : vector<256x4xf32>, vector<4x8xf32>, vector<256x8xf32> -> vector<256x8xf32>
    %54 = arith.addf %48, %53 : vector<256x8xf32>
    %cst_30 = arith.constant dense<0.000000e+00> : vector<8xf32>
    %55 = vector.multi_reduction <add>, %54, %cst_30 [0] : vector<256x8xf32> to vector<8xf32>
    %56 = vector.shape_cast %55 : vector<8xf32> to vector<1x8xf32>
    %cst_31 = arith.constant 3.906250e-03 : f32
    %57 = vector.broadcast %cst_31 : f32 to vector<1x8xf32>
    %58 = arith.mulf %56, %57 : vector<1x8xf32>
    %59 = vector.broadcast %58 : vector<1x8xf32> to vector<256x8xf32>
    %60 = arith.subf %54, %59 : vector<256x8xf32>
    %61 = arith.mulf %60, %60 : vector<256x8xf32>
    %cst_32 = arith.constant dense<0.000000e+00> : vector<8xf32>
    %62 = vector.multi_reduction <add>, %61, %cst_32 [0] : vector<256x8xf32> to vector<8xf32>
    %63 = vector.shape_cast %62 : vector<8xf32> to vector<1x8xf32>
    %64 = tpu.transpose %54, [1, 0] : vector<256x8xf32> -> vector<8x256xf32>
    %c0_33 = arith.constant 0 : index
    %c0_34 = arith.constant 0 : index
    %c0_35 = arith.constant 0 : index
    %65 = vector.load %arg3[%c0_33, %c0_34, %c0_35] : memref<1x8x256xf32, #tpu.memory_space<vmem>>, vector<1x8x256xf32>
    %66 = vector.shape_cast %65 : vector<1x8x256xf32> to vector<8x256xf32>
    %67 = vector.shape_cast %64 : vector<8x256xf32> to vector<1x8x256xf32>
    tpu.vector_store %arg3[%c0_33, %c0_34, %c0_35], %67 {strides = array<i32>} : memref<1x8x256xf32, #tpu.memory_space<vmem>>, vector<1x8x256xf32>,
    %c0_36 = arith.constant 0 : index
    %c0_37 = arith.constant 0 : index
    %c0_38 = arith.constant 0 : index
    %68 = vector.load %arg4[%c0_36, %c0_37, %c0_38] : memref<1x1x8xf32, #tpu.memory_space<vmem>>, vector<1x1x8xf32>
    %69 = vector.shape_cast %68 : vector<1x1x8xf32> to vector<1x8xf32>
    %70 = vector.shape_cast %56 : vector<1x8xf32> to vector<1x1x8xf32>
    tpu.vector_store %arg4[%c0_36, %c0_37, %c0_38], %70 {strides = array<i32>} : memref<1x1x8xf32, #tpu.memory_space<vmem>>, vector<1x1x8xf32>,
    %c0_39 = arith.constant 0 : index
    %c0_40 = arith.constant 0 : index
    %c0_41 = arith.constant 0 : index
    %71 = vector.load %arg5[%c0_39, %c0_40, %c0_41] : memref<1x1x8xf32, #tpu.memory_space<vmem>>, vector<1x1x8xf32>
    %72 = vector.shape_cast %71 : vector<1x1x8xf32> to vector<1x8xf32>
    %73 = vector.shape_cast %63 : vector<1x8xf32> to vector<1x1x8xf32>
    tpu.vector_store %arg5[%c0_39, %c0_40, %c0_41], %73 {strides = array<i32>} : memref<1x1x8xf32, #tpu.memory_space<vmem>>, vector<1x1x8xf32>,
    return
  }
  func.func @transform_0(%arg0: i32) -> (i32, i32, i32, i32) {
    %c0_i32 = arith.constant 0 : i32
    %c0_i32_0 = arith.constant 0 : i32
    %c0_i32_1 = arith.constant 0 : i32
    %c0_i32_2 = arith.constant 0 : i32
    return %arg0, %c0_i32, %c0_i32_0, %c0_i32_1 : i32, i32, i32, i32
  }
  func.func @transform_1(%arg0: i32) -> (i32, i32, i32) {
    %c0_i32 = arith.constant 0 : i32
    %c0_i32_0 = arith.constant 0 : i32
    %c0_i32_1 = arith.constant 0 : i32
    %c0_i32_2 = arith.constant 0 : i32
    return %c0_i32, %c0_i32_0, %c0_i32_1 : i32, i32, i32
  }
  func.func @transform_2(%arg0: i32) -> (i32, i32, i32) {
    %c0_i32 = arith.constant 0 : i32
    %c0_i32_0 = arith.constant 0 : i32
    %c0_i32_1 = arith.constant 0 : i32
    return %arg0, %c0_i32, %c0_i32_0 : i32, i32, i32
  }
  func.func @transform_3(%arg0: i32) -> (i32, i32, i32) {
    %c0_i32 = arith.constant 0 : i32
    %c0_i32_0 = arith.constant 0 : i32
    %c0_i32_1 = arith.constant 0 : i32
    return %arg0, %c0_i32, %c0_i32_0 : i32, i32, i32
  }
  func.func @transform_4(%arg0: i32) -> (i32, i32, i32) {
    %c0_i32 = arith.constant 0 : i32
    %c0_i32_0 = arith.constant 0 : i32
    %c0_i32_1 = arith.constant 0 : i32
    return %arg0, %c0_i32, %c0_i32_0 : i32, i32, i32
  }
}

module attributes {stable_mosaic.version = 11 : i64} {
  func.func @_bn_relu_kernel(%arg0: i32, %arg1: memref<1x8x256xf32, #tpu.memory_space<vmem>>, %arg2: memref<8x1xf32, #tpu.memory_space<vmem>>, %arg3: memref<8x1xf32, #tpu.memory_space<vmem>>, %arg4: memref<1x8x256xf32, #tpu.memory_space<vmem>>) attributes {dimension_semantics = [#tpu.dimension_semantics<parallel>], iteration_bounds = array<i64: 2>, scalar_prefetch = 0 : i64, scratch_operands = 0 : i64, tpu.core_type = #tpu.core_type<tc>, window_params = [{transform_indices = @transform_0, window_bounds = array<i64: 1, 8, 256>}, {pipeline_mode = #tpu.pipeline_mode<synchronous>, transform_indices = @transform_1, window_bounds = array<i64: 8, 1>}, {pipeline_mode = #tpu.pipeline_mode<synchronous>, transform_indices = @transform_2, window_bounds = array<i64: 8, 1>}, {transform_indices = @transform_3, window_bounds = array<i64: 1, 8, 256>}]} {
    %c0 = arith.constant 0 : index
    %c0_0 = arith.constant 0 : index
    %c0_1 = arith.constant 0 : index
    %0 = vector.load %arg1[%c0, %c0_0, %c0_1] : memref<1x8x256xf32, #tpu.memory_space<vmem>>, vector<1x8x256xf32>
    %c0_2 = arith.constant 0 : index
    %c0_3 = arith.constant 0 : index
    %1 = vector.load %arg2[%c0_2, %c0_3] : memref<8x1xf32, #tpu.memory_space<vmem>>, vector<8x1xf32>
    %2 = vector.shape_cast %1 : vector<8x1xf32> to vector<1x8x1xf32>
    %3 = vector.broadcast %2 : vector<1x8x1xf32> to vector<1x8x256xf32>
    %4 = arith.mulf %0, %3 : vector<1x8x256xf32>
    %c0_4 = arith.constant 0 : index
    %c0_5 = arith.constant 0 : index
    %5 = vector.load %arg3[%c0_4, %c0_5] : memref<8x1xf32, #tpu.memory_space<vmem>>, vector<8x1xf32>
    %6 = vector.shape_cast %5 : vector<8x1xf32> to vector<1x8x1xf32>
    %7 = vector.broadcast %6 : vector<1x8x1xf32> to vector<1x8x256xf32>
    %8 = arith.addf %4, %7 : vector<1x8x256xf32>
    %cst = arith.constant 0.000000e+00 : f32
    %9 = vector.broadcast %cst : f32 to vector<1x8x256xf32>
    %10 = arith.maximumf %8, %9 : vector<1x8x256xf32>
    %c0_6 = arith.constant 0 : index
    %c0_7 = arith.constant 0 : index
    %c0_8 = arith.constant 0 : index
    %11 = vector.load %arg4[%c0_6, %c0_7, %c0_8] : memref<1x8x256xf32, #tpu.memory_space<vmem>>, vector<1x8x256xf32>
    tpu.vector_store %arg4[%c0_6, %c0_7, %c0_8], %10 {strides = array<i32>} : memref<1x8x256xf32, #tpu.memory_space<vmem>>, vector<1x8x256xf32>,
    return
  }
  func.func @transform_0(%arg0: i32) -> (i32, i32, i32) {
    %c0_i32 = arith.constant 0 : i32
    %c0_i32_0 = arith.constant 0 : i32
    %c0_i32_1 = arith.constant 0 : i32
    return %arg0, %c0_i32, %c0_i32_0 : i32, i32, i32
  }
  func.func @transform_1(%arg0: i32) -> (i32, i32) {
    %c0_i32 = arith.constant 0 : i32
    %c0_i32_0 = arith.constant 0 : i32
    %c0_i32_1 = arith.constant 0 : i32
    return %c0_i32, %c0_i32_0 : i32, i32
  }
  func.func @transform_2(%arg0: i32) -> (i32, i32) {
    %c0_i32 = arith.constant 0 : i32
    %c0_i32_0 = arith.constant 0 : i32
    %c0_i32_1 = arith.constant 0 : i32
    return %c0_i32, %c0_i32_0 : i32, i32
  }
  func.func @transform_3(%arg0: i32) -> (i32, i32, i32) {
    %c0_i32 = arith.constant 0 : i32
    %c0_i32_0 = arith.constant 0 : i32
    %c0_i32_1 = arith.constant 0 : i32
    return %arg0, %c0_i32, %c0_i32_0 : i32, i32, i32
  }
}

</mosaic_0001>

<llo_original>
// kernel: conv_basic_forward.3
$region0: #{conv_basic_forward.3}
  #allocation0 [shape = 'u32[]', space=smem, size = 0x4, offset = 0x4, fixed_abs, tag = 'smem constant byte address 0x4 - core index']
  #allocation1 [shape = 'u32[144,128]{1,0:T(1,128)}', space=vmem, size = 0x12000, scoped, tag = 'internal scratch']
  %s0 = inlined_call_operand.vmem [shape: f32[2,8,256], index: 0, kind: input, shape index: {}, may-alias: {0,3}]
  %s1 = inlined_call_operand.vmem [shape: f32[8,1], index: 1, kind: input, shape index: {}]
  %s2 = inlined_call_operand.vmem [shape: f32[8,1], index: 2, kind: input, shape index: {}]
  %s3 = inlined_call_operand.vmem [shape: f32[2,8,256], index: 3, kind: output, shape index: {}, may-alias: {0,3}]
  %s4 = sld [smem:[#allocation0]]
  $region45: #{conv_basic_forward.3} parent=0
    _
  %s6 = ssub.s32 1, %s4
  %s7 = scalar_select 0, %s6, %s4
  loop: start=0, step=1, limit=4
  $region2: #{conv_basic_forward.3} parent=0 // loop_pre_header
    _
  $region3: #{conv_basic_forward.3} parent=0 // loop_header
    %s9 = sphi 0, %s13
    %p10 = scmp.ge.s32.totalorder %s9, 4
    %s19 = sphi 0, %s21
    %s22 = sphi 0, %s19
    %s23 = sphi 0, %s22
    %s39 = sphi 0, %s23
    %s43 = sphi 0, %s43
    %s45 = sphi 0, %s43
    %s46 = sphi 0, %s45
    %s60 = sphi 0, %s46
    %s64 = sphi 0, %s64
    %s66 = sphi 0, %s64
    %s67 = sphi 0, %s66
    %s81 = sphi 0, %s67
    %s87 = sphi 0, %s89
    %s90 = sphi 0, %s87
    %s91 = sphi 0, %s90
    %s107 = sphi 0, %s91
  $region4: #{conv_basic_forward.3} parent=0 // loop_header_branch
    %12 = sbr.rel (%p10) target = $region8
  $region5: #{conv_basic_forward.3} parent=0 // loop_body
    %s14 = ssub.s32 %s9, 1
    %s15 = ssub.s32 %s9, 2
    %s16 = sadd.s32 %s9, 1
    %s17 = ssub.s32 %s9, %s16
    %p18 = scmp.eq.s32.totalorder %s17, 0
    %s20 = sadd.s32 %s19, 1
    %s21 = scalar_select %p18, %s19, %s20
    %p24 = pneg %p18
    %p25 = scmp.eq.s32.totalorder %s9, 1
    %p26 = por %p24, %p25
    %p27 = scmp.ne.s32.totalorder %s19, %s22
    %p28 = scmp.eq.s32.totalorder %s9, 0
    %p29 = por %p27, %p28
    %p30 = scmp.ne.s32.totalorder %s19, %s22
    %p31 = scmp.eq.s32.totalorder %s14, 1
    %p32 = por %p30, %p31
    %p33 = scmp.ne.s32.totalorder %s22, %s23
    %p34 = scmp.eq.s32.totalorder %s14, 0
    %p35 = por %p33, %p34
    %p36 = scmp.ne.s32.totalorder %s22, %s23
    %p37 = scmp.eq.s32.totalorder %s15, 1
    %p38 = por %p36, %p37
    %p40 = scmp.ne.s32.totalorder %s23, %s39
    %p41 = scmp.eq.s32.totalorder %s15, 0
    %p42 = por %p40, %p41
    %s44 = sadd.s32 %s43, 1
    %p47 = scmp.eq.s32.totalorder %s9, 1
    %p48 = scmp.ne.s32.totalorder %s43, %s45
    %p49 = scmp.eq.s32.totalorder %s9, 0
    %p50 = por %p48, %p49
    %p51 = scmp.ne.s32.totalorder %s43, %s45
    %p52 = scmp.eq.s32.totalorder %s14, 1
    %p53 = por %p51, %p52
    %p54 = scmp.ne.s32.totalorder %s45, %s46
    %p55 = scmp.eq.s32.totalorder %s14, 0
    %p56 = por %p54, %p55
    %p57 = scmp.ne.s32.totalorder %s45, %s46
    %p58 = scmp.eq.s32.totalorder %s15, 1
    %p59 = por %p57, %p58
    %p61 = scmp.ne.s32.totalorder %s46, %s60
    %p62 = scmp.eq.s32.totalorder %s15, 0
    %p63 = por %p61, %p62
    %s65 = sadd.s32 %s64, 1
    %p68 = scmp.eq.s32.totalorder %s9, 1
    %p69 = scmp.ne.s32.totalorder %s64, %s66
    %p70 = scmp.eq.s32.totalorder %s9, 0
    %p71 = por %p69, %p70
    %p72 = scmp.ne.s32.totalorder %s64, %s66
    %p73 = scmp.eq.s32.totalorder %s14, 1
    %p74 = por %p72, %p73
    %p75 = scmp.ne.s32.totalorder %s66, %s67
    %p76 = scmp.eq.s32.totalorder %s14, 0
    %p77 = por %p75, %p76
    %p78 = scmp.ne.s32.totalorder %s66, %s67
    %p79 = scmp.eq.s32.totalorder %s15, 1
    %p80 = por %p78, %p79
    %p82 = scmp.ne.s32.totalorder %s67, %s81
    %p83 = scmp.eq.s32.totalorder %s15, 0
    %p84 = por %p82, %p83
    %s85 = ssub.s32 %s9, %s16
    %p86 = scmp.eq.s32.totalorder %s85, 0
    %s88 = sadd.s32 %s87, 1
    %s89 = scalar_select %p86, %s87, %s88
    %p92 = pneg %p86
    %p93 = scmp.eq.s32.totalorder %s9, 1
    %p94 = por %p92, %p93
    %p95 = scmp.ne.s32.totalorder %s87, %s90
    %p96 = scmp.eq.s32.totalorder %s9, 0
    %p97 = por %p95, %p96
    %p98 = scmp.ne.s32.totalorder %s87, %s90
    %p99 = scmp.eq.s32.totalorder %s14, 1
    %p100 = por %p98, %p99
    %p101 = scmp.ne.s32.totalorder %s90, %s91
    %p102 = scmp.eq.s32.totalorder %s14, 0
    %p103 = por %p101, %p102
    %p104 = scmp.ne.s32.totalorder %s90, %s91
    %p105 = scmp.eq.s32.totalorder %s15, 1
    %p106 = por %p104, %p105
    %p108 = scmp.ne.s32.totalorder %s91, %s107
    %p109 = scmp.eq.s32.totalorder %s15, 0
    %p110 = por %p108, %p109
    %p111 = scmp.le.s32.totalorder 1, %s9
    %p112 = scmp.lt.s32.totalorder %s9, 3
    %p113 = pnand %p111, %p112
    %p114 = pneg %p113
    // Predicated region
    $region9: #{conv_basic_forward.3} parent=5 // pred_check
      _
    $region10: #{conv_basic_forward.3} parent=5 // pred_check_branch
      %116 = sbr.rel (%p113) target = $region12
    $region11: #{conv_basic_forward.3} parent=5 // pred_region
      %s117 = ssub.s32 %s9, 1
      // Predicated region
      $region13: #{conv_basic_forward.3} parent=11 // pred_check
        %p118 = pneg %p56
      $region14: #{conv_basic_forward.3} parent=11 // pred_check_branch
        %120 = sbr.rel (%p118) target = $region16
      $region15: #{conv_basic_forward.3} parent=11 // pred_region
        _
      $region16: #{conv_basic_forward.3} parent=11 // pred_fallthru
        _
      // Predicated region
      $region17: #{conv_basic_forward.3} parent=11 // pred_check
        %p121 = pneg %p77
      $region18: #{conv_basic_forward.3} parent=11 // pred_check_branch
        %123 = sbr.rel (%p121) target = $region20
      $region19: #{conv_basic_forward.3} parent=11 // pred_region
        _
      $region20: #{conv_basic_forward.3} parent=11 // pred_fallthru
        _
    $region12: #{conv_basic_forward.3} parent=5 // pred_fallthru
      _
    %p124 = scmp.lt.s32.totalorder %s9, 2
    // Predicated region
    $region21: #{conv_basic_forward.3} parent=5 // pred_check
      %p125 = pneg %p124
    $region22: #{conv_basic_forward.3} parent=5 // pred_check_branch
      %127 = sbr.rel (%p125) target = $region24
    $region23: #{conv_basic_forward.3} parent=5 // pred_region
      // Predicated region
      $region25: #{conv_basic_forward.3} parent=23 // pred_check
        %p128 = pneg %p29
      $region26: #{conv_basic_forward.3} parent=23 // pred_check_branch
        %130 = sbr.rel (%p128) target = $region28
      $region27: #{conv_basic_forward.3} parent=23 // pred_region
        %p131 = scmp.lt.s32.totalorder %s9, 1
        %s132 = scalar_select %p131, %s9, 1
        %s133 = smul.addr %s132, 2
        %s134 = smul.addr %s133, 8
        %s135 = scalar_lea.vmem %s0, %s134
      $region28: #{conv_basic_forward.3} parent=23 // pred_fallthru
        _
    $region24: #{conv_basic_forward.3} parent=5 // pred_fallthru
      _
    %p136 = scmp.le.s32.totalorder 1, %s9
    %p137 = scmp.lt.s32.totalorder %s9, 3
    %p138 = pnand %p136, %p137
    %p139 = pneg %p138
    // Predicated region
    $region29: #{conv_basic_forward.3} parent=5 // pred_check
      _
    $region30: #{conv_basic_forward.3} parent=5 // pred_check_branch
      %141 = sbr.rel (%p138) target = $region32
    $region31: #{conv_basic_forward.3} parent=5 // pred_region
      %s142 = ssub.s32 %s9, 1
      %p143 = scmp.lt.s32.totalorder %s14, 1
      %s144 = scalar_select %p143, %s14, 1
      %s145 = smul.addr %s144, 2
      %s146 = smul.addr %s145, 8
      %s147 = scalar_lea.vmem %s0, %s146
      %p148 = pneg %p35
      %p149 = pneg %p32
      %p150 = pneg %p56
      %p151 = pneg %p53
      %p152 = pneg %p77
      %p153 = pneg %p74
      %p154 = pneg %p103
      %p155 = pneg %p100
      %p156 = scmp.lt.s32.totalorder %s14, 1
      %s157 = scalar_select %p156, %s14, 1
      %s158 = smul.addr %s157, 2
      %s159 = smul.addr %s158, 8
      %s160 = scalar_lea.vmem %s3, %s159
      %p161 = scmp.lt.s32.totalorder %s14, 1
      %s162 = scalar_select %p161, %s14, 1
      %s163 = smul.addr %s162, 2
      %s164 = smul.addr %s163, 8
      %s165 = scalar_lea.vmem %s0, %s164
      %p166 = scmp.lt.s32.totalorder %s14, 1
      %s167 = scalar_select %p166, %s14, 1
      %s168 = smul.addr %s167, 2
      %s169 = smul.addr %s168, 8
      %s170 = scalar_lea.vmem %s3, %s169
      %v171 = vld [vmem:[%s165] sm:$0xff]
      %v172 = vld [vmem:[%s165 + $0x8] sm:$0xff]
      %v173 = vld [vmem:[%s1] sm:$0xff]
      %175 = vset.pattern.permute.xlu0 0
      %176 = vperm.xlu0 %175, %v173
      %v177 = vpop.permute.xlu0 %176
      %v179 = vmul.f32 %v171, %v177
      %v180 = vmul.f32 %v172, %v177
      %v181 = vld [vmem:[%s2] sm:$0xff]
      %183 = vset.pattern.permute.xlu0 0
      %184 = vperm.xlu0 %183, %v181
      %v185 = vpop.permute.xlu0 %184
      %v187 = vadd.f32 %v179, %v185
      %v188 = vadd.f32 %v180, %v185
      %v189 = vmax.f32 %v187, 0.0
      %v190 = vmax.f32 %v188, 0.0
      %191 = vst [vmem:[%s170] sm:$0xff] %v189
      %192 = vst [vmem:[%s170 + $0x8] sm:$0xff] %v190
      %p193 = scmp.lt.s32.totalorder %s14, 1
      %s194 = scalar_select %p193, %s14, 1
      %s195 = smul.addr %s194, 2
      %s196 = smul.addr %s195, 8
      %s197 = scalar_lea.vmem %s3, %s196
      // Predicated region
      $region33: #{conv_basic_forward.3} parent=31 // pred_check
        %p198 = pneg %p100
      $region34: #{conv_basic_forward.3} parent=31 // pred_check_branch
        %200 = sbr.rel (%p198) target = $region36
      $region35: #{conv_basic_forward.3} parent=31 // pred_region
        _
      $region36: #{conv_basic_forward.3} parent=31 // pred_fallthru
        _
    $region32: #{conv_basic_forward.3} parent=5 // pred_fallthru
      _
    %p201 = scmp.le.s32.totalorder 2, %s9
    // Predicated region
    $region37: #{conv_basic_forward.3} parent=5 // pred_check
      %p202 = pneg %p201
    $region38: #{conv_basic_forward.3} parent=5 // pred_check_branch
      %204 = sbr.rel (%p202) target = $region40
    $region39: #{conv_basic_forward.3} parent=5 // pred_region
      %s205 = ssub.s32 %s9, 2
      // Predicated region
      $region41: #{conv_basic_forward.3} parent=39 // pred_check
        %p206 = pneg %p106
      $region42: #{conv_basic_forward.3} parent=39 // pred_check_branch
        %208 = sbr.rel (%p206) target = $region44
      $region43: #{conv_basic_forward.3} parent=39 // pred_region
        %p209 = scmp.lt.s32.totalorder %s15, 1
        %s210 = scalar_select %p209, %s15, 1
        %s211 = smul.addr %s210, 2
        %s212 = smul.addr %s211, 8
        %s213 = scalar_lea.vmem %s3, %s212
      $region44: #{conv_basic_forward.3} parent=39 // pred_fallthru
        _
    $region40: #{conv_basic_forward.3} parent=5 // pred_fallthru
      _
  $region6: #{conv_basic_forward.3} parent=0 // loop_footer
    %s13 = sadd.s32 1, %s9
  $region7: #{conv_basic_forward.3} parent=0 // loop_footer_branch
    %8 = sbr.rel target = $region3
  $region8: #{conv_basic_forward.3} parent=0 // loop_exit
    _

// kernel: conv_basic_forward.2
$region0: #{conv_basic_forward.2}
  #allocation0 [shape = 'u32[]', space=smem, size = 0x4, offset = 0x4, fixed_abs, tag = 'smem constant byte address 0x4 - core index']
  #allocation1 [shape = 'u32[144,128]{1,0:T(1,128)}', space=vmem, size = 0x12000, scoped, tag = 'internal scratch']
  %s0 = inlined_call_operand.vmem [shape: f32[2,18,18,4], index: 0, kind: input, shape index: {}]
  %s1 = inlined_call_operand.vmem [shape: f32[9,4,8], index: 1, kind: input, shape index: {}]
  %s2 = inlined_call_operand.vmem [shape: f32[2,8,256], index: 2, kind: output, shape index: {0}]
  %s3 = inlined_call_operand.vmem [shape: f32[2,1,8], index: 3, kind: output, shape index: {1}]
  %s4 = inlined_call_operand.vmem [shape: f32[2,1,8], index: 4, kind: output, shape index: {2}]
  %5 = xla_tuple %s2, %s3, %s4
  %s6 = sld [smem:[#allocation0]]
  $region57: #{conv_basic_forward.2} parent=0
    _
  %s8 = ssub.s32 1, %s6
  %s9 = scalar_select 0, %s8, %s6
  loop: start=0, step=1, limit=4
  $region2: #{conv_basic_forward.2} parent=0 // loop_pre_header
    _
  $region3: #{conv_basic_forward.2} parent=0 // loop_header
    %s11 = sphi 0, %s15
    %p12 = scmp.ge.s32.totalorder %s11, 4
    %s21 = sphi 0, %s23
    %s24 = sphi 0, %s21
    %s25 = sphi 0, %s24
    %s41 = sphi 0, %s25
    %s45 = sphi 0, %s45
    %s47 = sphi 0, %s45
    %s48 = sphi 0, %s47
    %s62 = sphi 0, %s48
    %s68 = sphi 0, %s70
    %s71 = sphi 0, %s68
    %s72 = sphi 0, %s71
    %s88 = sphi 0, %s72
    %s94 = sphi 0, %s96
    %s97 = sphi 0, %s94
    %s98 = sphi 0, %s97
    %s114 = sphi 0, %s98
    %s120 = sphi 0, %s122
    %s123 = sphi 0, %s120
    %s124 = sphi 0, %s123
    %s140 = sphi 0, %s124
  $region4: #{conv_basic_forward.2} parent=0 // loop_header_branch
    %14 = sbr.rel (%p12) target = $region8
  $region5: #{conv_basic_forward.2} parent=0 // loop_body
    %s16 = ssub.s32 %s11, 1
    %s17 = ssub.s32 %s11, 2
    %s18 = sadd.s32 %s11, 1
    %s19 = ssub.s32 %s11, %s18
    %p20 = scmp.eq.s32.totalorder %s19, 0
    %s22 = sadd.s32 %s21, 1
    %s23 = scalar_select %p20, %s21, %s22
    %p26 = pneg %p20
    %p27 = scmp.eq.s32.totalorder %s11, 1
    %p28 = por %p26, %p27
    %p29 = scmp.ne.s32.totalorder %s21, %s24
    %p30 = scmp.eq.s32.totalorder %s11, 0
    %p31 = por %p29, %p30
    %p32 = scmp.ne.s32.totalorder %s21, %s24
    %p33 = scmp.eq.s32.totalorder %s16, 1
    %p34 = por %p32, %p33
    %p35 = scmp.ne.s32.totalorder %s24, %s25
    %p36 = scmp.eq.s32.totalorder %s16, 0
    %p37 = por %p35, %p36
    %p38 = scmp.ne.s32.totalorder %s24, %s25
    %p39 = scmp.eq.s32.totalorder %s17, 1
    %p40 = por %p38, %p39
    %p42 = scmp.ne.s32.totalorder %s25, %s41
    %p43 = scmp.eq.s32.totalorder %s17, 0
    %p44 = por %p42, %p43
    %s46 = sadd.s32 %s45, 1
    %p49 = scmp.eq.s32.totalorder %s11, 1
    %p50 = scmp.ne.s32.totalorder %s45, %s47
    %p51 = scmp.eq.s32.totalorder %s11, 0
    %p52 = por %p50, %p51
    %p53 = scmp.ne.s32.totalorder %s45, %s47
    %p54 = scmp.eq.s32.totalorder %s16, 1
    %p55 = por %p53, %p54
    %p56 = scmp.ne.s32.totalorder %s47, %s48
    %p57 = scmp.eq.s32.totalorder %s16, 0
    %p58 = por %p56, %p57
    %p59 = scmp.ne.s32.totalorder %s47, %s48
    %p60 = scmp.eq.s32.totalorder %s17, 1
    %p61 = por %p59, %p60
    %p63 = scmp.ne.s32.totalorder %s48, %s62
    %p64 = scmp.eq.s32.totalorder %s17, 0
    %p65 = por %p63, %p64
    %s66 = ssub.s32 %s11, %s18
    %p67 = scmp.eq.s32.totalorder %s66, 0
    %s69 = sadd.s32 %s68, 1
    %s70 = scalar_select %p67, %s68, %s69
    %p73 = pneg %p67
    %p74 = scmp.eq.s32.totalorder %s11, 1
    %p75 = por %p73, %p74
    %p76 = scmp.ne.s32.totalorder %s68, %s71
    %p77 = scmp.eq.s32.totalorder %s11, 0
    %p78 = por %p76, %p77
    %p79 = scmp.ne.s32.totalorder %s68, %s71
    %p80 = scmp.eq.s32.totalorder %s16, 1
    %p81 = por %p79, %p80
    %p82 = scmp.ne.s32.totalorder %s71, %s72
    %p83 = scmp.eq.s32.totalorder %s16, 0
    %p84 = por %p82, %p83
    %p85 = scmp.ne.s32.totalorder %s71, %s72
    %p86 = scmp.eq.s32.totalorder %s17, 1
    %p87 = por %p85, %p86
    %p89 = scmp.ne.s32.totalorder %s72, %s88
    %p90 = scmp.eq.s32.totalorder %s17, 0
    %p91 = por %p89, %p90
    %s92 = ssub.s32 %s11, %s18
    %p93 = scmp.eq.s32.totalorder %s92, 0
    %s95 = sadd.s32 %s94, 1
    %s96 = scalar_select %p93, %s94, %s95
    %p99 = pneg %p93
    %p100 = scmp.eq.s32.totalorder %s11, 1
    %p101 = por %p99, %p100
    %p102 = scmp.ne.s32.totalorder %s94, %s97
    %p103 = scmp.eq.s32.totalorder %s11, 0
    %p104 = por %p102, %p103
    %p105 = scmp.ne.s32.totalorder %s94, %s97
    %p106 = scmp.eq.s32.totalorder %s16, 1
    %p107 = por %p105, %p106
    %p108 = scmp.ne.s32.totalorder %s97, %s98
    %p109 = scmp.eq.s32.totalorder %s16, 0
    %p110 = por %p108, %p109
    %p111 = scmp.ne.s32.totalorder %s97, %s98
    %p112 = scmp.eq.s32.totalorder %s17, 1
    %p113 = por %p111, %p112
    %p115 = scmp.ne.s32.totalorder %s98, %s114
    %p116 = scmp.eq.s32.totalorder %s17, 0
    %p117 = por %p115, %p116
    %s118 = ssub.s32 %s11, %s18
    %p119 = scmp.eq.s32.totalorder %s118, 0
    %s121 = sadd.s32 %s120, 1
    %s122 = scalar_select %p119, %s120, %s121
    %p125 = pneg %p119
    %p126 = scmp.eq.s32.totalorder %s11, 1
    %p127 = por %p125, %p126
    %p128 = scmp.ne.s32.totalorder %s120, %s123
    %p129 = scmp.eq.s32.totalorder %s11, 0
    %p130 = por %p128, %p129
    %p131 = scmp.ne.s32.totalorder %s120, %s123
    %p132 = scmp.eq.s32.totalorder %s16, 1
    %p133 = por %p131, %p132
    %p134 = scmp.ne.s32.totalorder %s123, %s124
    %p135 = scmp.eq.s32.totalorder %s16, 0
    %p136 = por %p134, %p135
    %p137 = scmp.ne.s32.totalorder %s123, %s124
    %p138 = scmp.eq.s32.totalorder %s17, 1
    %p139 = por %p137, %p138
    %p141 = scmp.ne.s32.totalorder %s124, %s140
    %p142 = scmp.eq.s32.totalorder %s17, 0
    %p143 = por %p141, %p142
    %p144 = scmp.le.s32.totalorder 1, %s11
    %p145 = scmp.lt.s32.totalorder %s11, 3
    %p146 = pnand %p144, %p145
    %p147 = pneg %p146
    // Predicated region
    $region9: #{conv_basic_forward.2} parent=5 // pred_check
      _
    $region10: #{conv_basic_forward.2} parent=5 // pred_check_branch
      %149 = sbr.rel (%p146) target = $region12
    $region11: #{conv_basic_forward.2} parent=5 // pred_region
      %s150 = ssub.s32 %s11, 1
      // Predicated region
      $region13: #{conv_basic_forward.2} parent=11 // pred_check
        %p151 = pneg %p58
      $region14: #{conv_basic_forward.2} parent=11 // pred_check_branch
        %153 = sbr.rel (%p151) target = $region16
      $region15: #{conv_basic_forward.2} parent=11 // pred_region
        _
      $region16: #{conv_basic_forward.2} parent=11 // pred_fallthru
        _
    $region12: #{conv_basic_forward.2} parent=5 // pred_fallthru
      _
    %p154 = scmp.lt.s32.totalorder %s11, 2
    // Predicated region
    $region17: #{conv_basic_forward.2} parent=5 // pred_check
      %p155 = pneg %p154
    $region18: #{conv_basic_forward.2} parent=5 // pred_check_branch
      %157 = sbr.rel (%p155) target = $region20
    $region19: #{conv_basic_forward.2} parent=5 // pred_region
      // Predicated region
      $region21: #{conv_basic_forward.2} parent=19 // pred_check
        %p158 = pneg %p31
      $region22: #{conv_basic_forward.2} parent=19 // pred_check_branch
        %160 = sbr.rel (%p158) target = $region24
      $region23: #{conv_basic_forward.2} parent=19 // pred_region
        %p161 = scmp.lt.s32.totalorder %s11, 1
        %s162 = scalar_select %p161, %s11, 1
        %s163 = smul.addr %s162, 54
        %s164 = smul.addr %s163, 8
        %s165 = scalar_lea.vmem %s0, %s164
      $region24: #{conv_basic_forward.2} parent=19 // pred_fallthru
        _
    $region20: #{conv_basic_forward.2} parent=5 // pred_fallthru
      _
    %p166 = scmp.le.s32.totalorder 1, %s11
    %p167 = scmp.lt.s32.totalorder %s11, 3
    %p168 = pnand %p166, %p167
    %p169 = pneg %p168
    // Predicated region
    $region25: #{conv_basic_forward.2} parent=5 // pred_check
      _
    $region26: #{conv_basic_forward.2} parent=5 // pred_check_branch
      %171 = sbr.rel (%p168) target = $region28
    $region27: #{conv_basic_forward.2} parent=5 // pred_region
      %s172 = ssub.s32 %s11, 1
      %p173 = scmp.lt.s32.totalorder %s16, 1
      %s174 = scalar_select %p173, %s16, 1
      %s175 = smul.addr %s174, 54
      %s176 = smul.addr %s175, 8
      %s177 = scalar_lea.vmem %s0, %s176
      %p178 = pneg %p37
      %p179 = pneg %p34
      %p180 = pneg %p58
      %p181 = pneg %p55
      %p182 = pneg %p84
      %p183 = pneg %p81
      %p184 = scmp.lt.s32.totalorder %s16, 1
      %s185 = scalar_select %p184, %s16, 1
      %s186 = smul.addr %s185, 2
      %s187 = smul.addr %s186, 8
      %s188 = scalar_lea.vmem %s2, %s187
      %p189 = pneg %p110
      %p190 = pneg %p107
      %p191 = scmp.lt.s32.totalorder %s16, 1
      %s192 = scalar_select %p191, %s16, 1
      %s193 = scalar_lea.vmem %s3, %s192
      %p194 = pneg %p136
      %p195 = pneg %p133
      %p196 = scmp.lt.s32.totalorder %s16, 1
      %s197 = scalar_select %p196, %s16, 1
      %s198 = scalar_lea.vmem %s4, %s197
      %p199 = scmp.lt.s32.totalorder %s16, 1
      %s200 = scalar_select %p199, %s16, 1
      %s201 = smul.addr %s200, 54
      %s202 = smul.addr %s201, 8
      %s203 = scalar_lea.vmem %s0, %s202
      %p204 = scmp.lt.s32.totalorder %s16, 1
      %s205 = scalar_select %p204, %s16, 1
      %s206 = smul.addr %s205, 2
      %s207 = smul.addr %s206, 8
      %s208 = scalar_lea.vmem %s2, %s207
      %p209 = scmp.lt.s32.totalorder %s16, 1
      %s210 = scalar_select %p209, %s16, 1
      %s211 = scalar_lea.vmem %s3, %s210
      %p212 = scmp.lt.s32.totalorder %s16, 1
      %s213 = scalar_select %p212, %s16, 1
      %s214 = scalar_lea.vmem %s4, %s213
      %v215 = vld [vmem:[%s203] sm:$0xff]
      %v216 = vld [vmem:[%s203 + $0x8] sm:$0xff]
      %v217 = vld [vmem:[%s203 + $0x10] sm:$0x3]
      %v218 = vld [vmem:[%s203 + $0x18] sm:$0xff]
      %v219 = vld [vmem:[%s203 + $0x20] sm:$0xff]
      %v220 = vld [vmem:[%s203 + $0x28] sm:$0x3]
      %v221 = vld [vmem:[%s203 + $0x30] sm:$0xff]
      %v222 = vld [vmem:[%s203 + $0x38] sm:$0xff]
      %v223 = vld [vmem:[%s203 + $0x40] sm:$0x3]
      %v224 = vld [vmem:[%s203 + $0x48] sm:$0xff]
      %v225 = vld [vmem:[%s203 + $0x50] sm:$0xff]
      %v226 = vld [vmem:[%s203 + $0x58] sm:$0x3]
      %v227 = vld [vmem:[%s203 + $0x60] sm:$0xff]
      %v228 = vld [vmem:[%s203 + $0x68] sm:$0xff]
      %v229 = vld [vmem:[%s203 + $0x70] sm:$0x3]
      %v230 = vld [vmem:[%s203 + $0x78] sm:$0xff]
      %v231 = vld [vmem:[%s203 + $0x80] sm:$0xff]
      %v232 = vld [vmem:[%s203 + $0x88] sm:$0x3]
      %v233 = vld [vmem:[%s203 + $0x90] sm:$0xff]
      %v234 = vld [vmem:[%s203 + $0x98] sm:$0xff]
      %v235 = vld [vmem:[%s203 + $0xa0] sm:$0x3]
      %v236 = vld [vmem:[%s203 + $0xa8] sm:$0xff]
      %v237 = vld [vmem:[%s203 + $0xb0] sm:$0xff]
      %v238 = vld [vmem:[%s203 + $0xb8] sm:$0x3]
      %v239 = vld [vmem:[%s203 + $0xc0] sm:$0xff]
      %v240 = vld [vmem:[%s203 + $0xc8] sm:$0xff]
      %v241 = vld [vmem:[%s203 + $0xd0] sm:$0x3]
      %v242 = vld [vmem:[%s203 + $0xd8] sm:$0xff]
      %v243 = vld [vmem:[%s203 + $0xe0] sm:$0xff]
      %v244 = vld [vmem:[%s203 + $0xe8] sm:$0x3]
      %v245 = vld [vmem:[%s203 + $0xf0] sm:$0xff]
      %v246 = vld [vmem:[%s203 + $0xf8] sm:$0xff]
      %v247 = vld [vmem:[%s203 + $0x100] sm:$0x3]
      %v248 = vld [vmem:[%s203 + $0x108] sm:$0xff]
      %v249 = vld [vmem:[%s203 + $0x110] sm:$0xff]
      %v250 = vld [vmem:[%s203 + $0x118] sm:$0x3]
      %v251 = vld [vmem:[%s203 + $0x120] sm:$0xff]
      %v252 = vld [vmem:[%s203 + $0x128] sm:$0xff]
      %v253 = vld [vmem:[%s203 + $0x130] sm:$0x3]
      %v254 = vld [vmem:[%s203 + $0x138] sm:$0xff]
      %v255 = vld [vmem:[%s203 + $0x140] sm:$0xff]
      %v256 = vld [vmem:[%s203 + $0x148] sm:$0x3]
      %v257 = vld [vmem:[%s203 + $0x150] sm:$0xff]
      %v258 = vld [vmem:[%s203 + $0x158] sm:$0xff]
      %v259 = vld [vmem:[%s203 + $0x160] sm:$0x3]
      %v260 = vld [vmem:[%s203 + $0x168] sm:$0xff]
      %v261 = vld [vmem:[%s203 + $0x170] sm:$0xff]
      %v262 = vld [vmem:[%s203 + $0x178] sm:$0x3]
      %v263 = vld [vmem:[%s203 + $0x180] sm:$0xff]
      %v264 = vld [vmem:[%s203 + $0x188] sm:$0xff]
      %v265 = vld [vmem:[%s203 + $0x190] sm:$0x3]
      %v266 = vld [vmem:[%s203 + $0x198] sm:$0xff]
      %v267 = vld [vmem:[%s203 + $0x1a0] sm:$0xff]
      %v268 = vld [vmem:[%s203 + $0x1a8] sm:$0x3]
      %v269 = vld [vmem:[%s1] sm:$0xf]
      %vm318 = vcmask 1046528
      %v319 = vrot.slane %v215, 1
      %v320 = vrot.slane %v216, 1
      %v321 = vsel %vm318, %v319, %v320
      %v322 = vrot.slane %v217, 1
      %v323 = vsel %vm318, %v320, %v322
      %v324 = vrot.slane %v218, 1
      %v325 = vrot.slane %v219, 1
      %v326 = vsel %vm318, %v324, %v325
      %v327 = vrot.slane %v220, 1
      %v328 = vsel %vm318, %v325, %v327
      %v329 = vrot.slane %v221, 1
      %v330 = vrot.slane %v222, 1
      %v331 = vsel %vm318, %v329, %v330
      %v332 = vrot.slane %v223, 1
      %v333 = vsel %vm318, %v330, %v332
      %v334 = vrot.slane %v224, 1
      %v335 = vrot.slane %v225, 1
      %v336 = vsel %vm318, %v334, %v335
      %v337 = vrot.slane %v226, 1
      %v338 = vsel %vm318, %v335, %v337
      %v339 = vrot.slane %v227, 1
      %v340 = vrot.slane %v228, 1
      %v341 = vsel %vm318, %v339, %v340
      %v342 = vrot.slane %v229, 1
      %v343 = vsel %vm318, %v340, %v342
      %v344 = vrot.slane %v230, 1
      %v345 = vrot.slane %v231, 1
      %v346 = vsel %vm318, %v344, %v345
      %v347 = vrot.slane %v232, 1
      %v348 = vsel %vm318, %v345, %v347
      %v349 = vrot.slane %v233, 1
      %v350 = vrot.slane %v234, 1
      %v351 = vsel %vm318, %v349, %v350
      %v352 = vrot.slane %v235, 1
      %v353 = vsel %vm318, %v350, %v352
      %v354 = vrot.slane %v236, 1
      %v355 = vrot.slane %v237, 1
      %v356 = vsel %vm318, %v354, %v355
      %v357 = vrot.slane %v238, 1
      %v358 = vsel %vm318, %v355, %v357
      %v359 = vrot.slane %v239, 1
      %v360 = vrot.slane %v240, 1
      %v361 = vsel %vm318, %v359, %v360
      %v362 = vrot.slane %v241, 1
      %v363 = vsel %vm318, %v360, %v362
      %v364 = vrot.slane %v242, 1
      %v365 = vrot.slane %v243, 1
      %v366 = vsel %vm318, %v364, %v365
      %v367 = vrot.slane %v244, 1
      %v368 = vsel %vm318, %v365, %v367
      %v369 = vrot.slane %v245, 1
      %v370 = vrot.slane %v246, 1
      %v371 = vsel %vm318, %v369, %v370
      %v372 = vrot.slane %v247, 1
      %v373 = vsel %vm318, %v370, %v372
      %v374 = vrot.slane %v248, 1
      %v375 = vrot.slane %v249, 1
      %v376 = vsel %vm318, %v374, %v375
      %v377 = vrot.slane %v250, 1
      %v378 = vsel %vm318, %v375, %v377
      %v379 = vrot.slane %v251, 1
      %v380 = vrot.slane %v252, 1
      %v381 = vsel %vm318, %v379, %v380
      %v382 = vrot.slane %v253, 1
      %v383 = vsel %vm318, %v380, %v382
      %v384 = vrot.slane %v254, 1
      %v385 = vrot.slane %v255, 1
      %v386 = vsel %vm318, %v384, %v385
      %v387 = vrot.slane %v256, 1
      %v388 = vsel %vm318, %v385, %v387
      %v389 = vrot.slane %v257, 1
      %v390 = vrot.slane %v258, 1
      %v391 = vsel %vm318, %v389, %v390
      %v392 = vrot.slane %v259, 1
      %v393 = vsel %vm318, %v390, %v392
      %v394 = vrot.slane %v260, 1
      %v395 = vrot.slane %v261, 1
      %v396 = vsel %vm318, %v394, %v395
      %v397 = vrot.slane %v262, 1
      %v398 = vsel %vm318, %v395, %v397
      %s399 = scalar_lea.vmem %s1, 4
      %v400 = vld [vmem:[%s399] sm:$0xf]
      %vm401 = vcmask 31744
      %v402 = vsel %vm401, %v321, 0
      %v404 = vsel %vm401, %v323, 0
      %v406 = vsel %vm401, %v326, 0
      %v408 = vsel %vm401, %v328, 0
      %v410 = vsel %vm401, %v331, 0
      %v412 = vsel %vm401, %v333, 0
      %v414 = vsel %vm401, %v336, 0
      %v416 = vsel %vm401, %v338, 0
      %v418 = vsel %vm401, %v341, 0
      %v420 = vsel %vm401, %v343, 0
      %v422 = vsel %vm401, %v346, 0
      %v424 = vsel %vm401, %v348, 0
      %v426 = vsel %vm401, %v351, 0
      %v428 = vsel %vm401, %v353, 0
      %v430 = vsel %vm401, %v356, 0
      %v432 = vsel %vm401, %v358, 0
      %v434 = vsel %vm401, %v361, 0
      %v436 = vsel %vm401, %v363, 0
      %v438 = vsel %vm401, %v366, 0
      %v440 = vsel %vm401, %v368, 0
      %v442 = vsel %vm401, %v371, 0
      %v444 = vsel %vm401, %v373, 0
      %v446 = vsel %vm401, %v376, 0
      %v448 = vsel %vm401, %v378, 0
      %v450 = vsel %vm401, %v381, 0
      %v452 = vsel %vm401, %v383, 0
      %v454 = vsel %vm401, %v386, 0
      %v456 = vsel %vm401, %v388, 0
      %v458 = vsel %vm401, %v391, 0
      %v460 = vsel %vm401, %v393, 0
      %v462 = vsel %vm401, %v396, 0
      %v464 = vsel %vm401, %v398, 0
      %vm466 = vcmask 1043456
      %v468 = vsel %vm466, %v400, 0
      %470 = vmatprep.subr.mxu0 0.0
      %471 = vmatpush1.msra.mxu0 %v468
      %472 = vmatprep.subr.mxu0 0.0
      %473 = vmatpush1.msra.mxu0 0.0
      %474 = vmatprep.subr.mxu0 0.0
      %475 = vmatpush1.msra.mxu0 0.0
      %476 = vmatprep.subr.mxu0 0.0
      %477 = vmatpush1.msra.mxu0 0.0
      %478 = vmatprep.subr.mxu0 0.0
      %479 = vmatpush1.msra.mxu0 0.0
      %480 = vmatprep.subr.mxu0 0.0
      %481 = vmatpush1.msra.mxu0 0.0
      %482 = vmatprep.subr.mxu0 0.0
      %483 = vmatpush1.msra.mxu0 0.0
      %484 = vmatprep.subr.mxu0 0.0
      %485 = vmatpush1.msra.mxu0 0.0
      %486 = vmatprep.subr.mxu0 0.0
      %487 = vmatpush1.msra.mxu0 0.0
      %488 = vmatprep.subr.mxu0 0.0
      %489 = vmatpush1.msra.mxu0 0.0
      %490 = vmatprep.subr.mxu0 0.0
      %491 = vmatpush1.msra.mxu0 0.0
      %492 = vmatprep.subr.mxu0 0.0
      %493 = vmatpush1.msra.mxu0 0.0
      %494 = vmatprep.subr.mxu0 0.0
      %495 = vmatpush1.msra.mxu0 0.0
      %496 = vmatprep.subr.mxu0 0.0
      %497 = vmatpush1.msra.mxu0 0.0
      %498 = vmatprep.subr.mxu0 0.0
      %499 = vmatpush1.msra.mxu0 0.0
      %500 = vmatprep.subr.mxu0 0.0
      %501 = vmatpush1.msra.mxu0 0.0
      %502 = vmatprep.subr.mxu0 0.0
      %503 = vmatpush1.msra.mxu0 0.0
      %504 = vmatprep.subr.mxu0 0.0
      %505 = vmatpush1.msra.mxu0 0.0
      %506 = vmatprep.subr.mxu0 0.0
      %507 = vmatpush1.msra.mxu0 0.0
      %508 = vmatprep.subr.mxu0 0.0
      %509 = vmatpush1.msra.mxu0 0.0
      %510 = vmatprep.subr.mxu0 0.0
      %511 = vmatpush1.msra.mxu0 0.0
      %512 = vmatprep.subr.mxu0 0.0
      %513 = vmatpush1.msra.mxu0 0.0
      %514 = vmatprep.subr.mxu0 0.0
      %515 = vmatpush1.msra.mxu0 0.0
      %516 = vmatprep.subr.mxu0 0.0
      %517 = vmatpush1.msra.mxu0 0.0
      %518 = vmatprep.subr.mxu0 0.0
      %519 = vmatpush1.msra.mxu0 0.0
      %520 = vmatprep.subr.mxu0 0.0
      %521 = vmatpush1.msra.mxu0 0.0
      %522 = vmatprep.subr.mxu0 0.0
      %523 = vmatpush1.msra.mxu0 0.0
      %524 = vmatprep.subr.mxu0 0.0
      %525 = vmatpush1.msra.mxu0 0.0
      %526 = vmatprep.subr.mxu0 0.0
      %527 = vmatpush1.msra.mxu0 0.0
      %528 = vmatprep.subr.mxu0 0.0
      %529 = vmatpush1.msra.mxu0 0.0
      %530 = vmatprep.subr.mxu0 0.0
      %531 = vmatpush1.msra.mxu0 0.0
      %532 = vmatprep.subr.mxu0 0.0
      %533 = vmatpush1.msra.mxu0 0.0
      %534 = vmatprep.mubr.f32.mxu0 0.0
      %535 = vmatmul.mubr.f32.gmra.mrb[0].mxu0 %v402
      %v536 = vpop.f32.mrb[0].mxu0
      %v537 = vadd.f32 0.0, %v536
      %v538 = vpop.f32.mrb[0].mxu0
      %539 = vmatprep.mubr.f32.mxu0 0.0
      %540 = vmatmul.mubr.f32.gmra.mrb[0].mxu0 %v404
      %v541 = vpop.f32.mrb[0].mxu0
      %v542 = vadd.f32 0.0, %v541
      %v543 = vpop.f32.mrb[0].mxu0
      %544 = vmatprep.mubr.f32.mxu0 0.0
      %545 = vmatmul.mubr.f32.gmra.mrb[0].mxu0 %v406
      %v546 = vpop.f32.mrb[0].mxu0
      %v547 = vadd.f32 0.0, %v546
      %v548 = vpop.f32.mrb[0].mxu0
      %549 = vmatprep.mubr.f32.mxu0 0.0
      %550 = vmatmul.mubr.f32.gmra.mrb[0].mxu0 %v408
      %v551 = vpop.f32.mrb[0].mxu0
      %v552 = vadd.f32 0.0, %v551
      %v553 = vpop.f32.mrb[0].mxu0
      %554 = vmatprep.mubr.f32.mxu0 0.0
      %555 = vmatmul.mubr.f32.gmra.mrb[0].mxu0 %v410
      %v556 = vpop.f32.mrb[0].mxu0
      %v557 = vadd.f32 0.0, %v556
      %v558 = vpop.f32.mrb[0].mxu0
      %559 = vmatprep.mubr.f32.mxu0 0.0
      %560 = vmatmul.mubr.f32.gmra.mrb[0].mxu0 %v412
      %v561 = vpop.f32.mrb[0].mxu0
      %v562 = vadd.f32 0.0, %v561
      %v563 = vpop.f32.mrb[0].mxu0
      %564 = vmatprep.mubr.f32.mxu0 0.0
      %565 = vmatmul.mubr.f32.gmra.mrb[0].mxu0 %v414
      %v566 = vpop.f32.mrb[0].mxu0
      %v567 = vadd.f32 0.0, %v566
      %v568 = vpop.f32.mrb[0].mxu0
      %569 = vmatprep.mubr.f32.mxu0 0.0
      %570 = vmatmul.mubr.f32.gmra.mrb[0].mxu0 %v416
      %v571 = vpop.f32.mrb[0].mxu0
      %v572 = vadd.f32 0.0, %v571
      %v573 = vpop.f32.mrb[0].mxu0
      %574 = vmatprep.mubr.f32.mxu0 0.0
      %575 = vmatmul.mubr.f32.gmra.mrb[0].mxu0 %v418
      %v576 = vpop.f32.mrb[0].mxu0
      %v577 = vadd.f32 0.0, %v576
      %v578 = vpop.f32.mrb[0].mxu0
      %579 = vmatprep.mubr.f32.mxu0 0.0
      %580 = vmatmul.mubr.f32.gmra.mrb[0].mxu0 %v420
      %v581 = vpop.f32.mrb[0].mxu0
      %v582 = vadd.f32 0.0, %v581
      %v583 = vpop.f32.mrb[0].mxu0
      %584 = vmatprep.mubr.f32.mxu0 0.0
      %585 = vmatmul.mubr.f32.gmra.mrb[0].mxu0 %v422
      %v586 = vpop.f32.mrb[0].mxu0
      %v587 = vadd.f32 0.0, %v586
      %v588 = vpop.f32.mrb[0].mxu0
      %589 = vmatprep.mubr.f32.mxu0 0.0
      %590 = vmatmul.mubr.f32.gmra.mrb[0].mxu0 %v424
      %v591 = vpop.f32.mrb[0].mxu0
      %v592 = vadd.f32 0.0, %v591
      %v593 = vpop.f32.mrb[0].mxu0
      %594 = vmatprep.mubr.f32.mxu0 0.0
      %595 = vmatmul.mubr.f32.gmra.mrb[0].mxu0 %v426
      %v596 = vpop.f32.mrb[0].mxu0
      %v597 = vadd.f32 0.0, %v596
      %v598 = vpop.f32.mrb[0].mxu0
      %599 = vmatprep.mubr.f32.mxu0 0.0
      %600 = vmatmul.mubr.f32.gmra.mrb[0].mxu0 %v428
      %v601 = vpop.f32.mrb[0].mxu0
      %v602 = vadd.f32 0.0, %v601
      %v603 = vpop.f32.mrb[0].mxu0
      %604 = vmatprep.mubr.f32.mxu0 0.0
      %605 = vmatmul.mubr.f32.gmra.mrb[0].mxu0 %v430
      %v606 = vpop.f32.mrb[0].mxu0
      %v607 = vadd.f32 0.0, %v606
      %v608 = vpop.f32.mrb[0].mxu0
      %609 = vmatprep.mubr.f32.mxu0 0.0
      %610 = vmatmul.mubr.f32.gmra.mrb[0].mxu0 %v432
      %v611 = vpop.f32.mrb[0].mxu0
      %v612 = vadd.f32 0.0, %v611
      %v613 = vpop.f32.mrb[0].mxu0
      %614 = vmatprep.mubr.f32.mxu0 0.0
      %615 = vmatmul.mubr.f32.gmra.mrb[0].mxu0 %v434
      %v616 = vpop.f32.mrb[0].mxu0
      %v617 = vadd.f32 0.0, %v616
      %v618 = vpop.f32.mrb[0].mxu0
      %619 = vmatprep.mubr.f32.mxu0 0.0
      %620 = vmatmul.mubr.f32.gmra.mrb[0].mxu0 %v436
      %v621 = vpop.f32.mrb[0].mxu0
      %v622 = vadd.f32 0.0, %v621
      %v623 = vpop.f32.mrb[0].mxu0
      %624 = vmatprep.mubr.f32.mxu0 0.0
      %625 = vmatmul.mubr.f32.gmra.mrb[0].mxu0 %v438
      %v626 = vpop.f32.mrb[0].mxu0
      %v627 = vadd.f32 0.0, %v626
      %v628 = vpop.f32.mrb[0].mxu0
      %629 = vmatprep.mubr.f32.mxu0 0.0
      %630 = vmatmul.mubr.f32.gmra.mrb[0].mxu0 %v440
      %v631 = vpop.f32.mrb[0].mxu0
      %v632 = vadd.f32 0.0, %v631
      %v633 = vpop.f32.mrb[0].mxu0
      %634 = vmatprep.mubr.f32.mxu0 0.0
      %635 = vmatmul.mubr.f32.gmra.mrb[0].mxu0 %v442
      %v636 = vpop.f32.mrb[0].mxu0
      %v637 = vadd.f32 0.0, %v636
      %v638 = vpop.f32.mrb[0].mxu0
      %639 = vmatprep.mubr.f32.mxu0 0.0
      %640 = vmatmul.mubr.f32.gmra.mrb[0].mxu0 %v444
      %v641 = vpop.f32.mrb[0].mxu0
      %v642 = vadd.f32 0.0, %v641
      %v643 = vpop.f32.mrb[0].mxu0
      %644 = vmatprep.mubr.f32.mxu0 0.0
      %645 = vmatmul.mubr.f32.gmra.mrb[0].mxu0 %v446
      %v646 = vpop.f32.mrb[0].mxu0
      %v647 = vadd.f32 0.0, %v646
      %v648 = vpop.f32.mrb[0].mxu0
      %649 = vmatprep.mubr.f32.mxu0 0.0
      %650 = vmatmul.mubr.f32.gmra.mrb[0].mxu0 %v448
      %v651 = vpop.f32.mrb[0].mxu0
      %v652 = vadd.f32 0.0, %v651
      %v653 = vpop.f32.mrb[0].mxu0
      %654 = vmatprep.mubr.f32.mxu0 0.0
      %655 = vmatmul.mubr.f32.gmra.mrb[0].mxu0 %v450
      %v656 = vpop.f32.mrb[0].mxu0
      %v657 = vadd.f32 0.0, %v656
      %v658 = vpop.f32.mrb[0].mxu0
      %659 = vmatprep.mubr.f32.mxu0 0.0
      %660 = vmatmul.mubr.f32.gmra.mrb[0].mxu0 %v452
      %v661 = vpop.f32.mrb[0].mxu0
      %v662 = vadd.f32 0.0, %v661
      %v663 = vpop.f32.mrb[0].mxu0
      %664 = vmatprep.mubr.f32.mxu0 0.0
      %665 = vmatmul.mubr.f32.gmra.mrb[0].mxu0 %v454
      %v666 = vpop.f32.mrb[0].mxu0
      %v667 = vadd.f32 0.0, %v666
      %v668 = vpop.f32.mrb[0].mxu0
      %669 = vmatprep.mubr.f32.mxu0 0.0
      %670 = vmatmul.mubr.f32.gmra.mrb[0].mxu0 %v456
      %v671 = vpop.f32.mrb[0].mxu0
      %v672 = vadd.f32 0.0, %v671
      %v673 = vpop.f32.mrb[0].mxu0
      %674 = vmatprep.mubr.f32.mxu0 0.0
      %675 = vmatmul.mubr.f32.gmra.mrb[0].mxu0 %v458
      %v676 = vpop.f32.mrb[0].mxu0
      %v677 = vadd.f32 0.0, %v676
      %v678 = vpop.f32.mrb[0].mxu0
      %679 = vmatprep.mubr.f32.mxu0 0.0
      %680 = vmatmul.mubr.f32.gmra.mrb[0].mxu0 %v460
      %v681 = vpop.f32.mrb[0].mxu0
      %v682 = vadd.f32 0.0, %v681
      %v683 = vpop.f32.mrb[0].mxu0
      %684 = vmatprep.mubr.f32.mxu0 0.0
      %685 = vmatmul.mubr.f32.gmra.mrb[0].mxu0 %v462
      %v686 = vpop.f32.mrb[0].mxu0
      %v687 = vadd.f32 0.0, %v686
      %v688 = vpop.f32.mrb[0].mxu0
      %689 = vmatprep.mubr.f32.mxu0 0.0
      %690 = vmatmul.mubr.f32.gmra.mrb[0].mxu0 %v464
      %v691 = vpop.f32.mrb[0].mxu0
      %v692 = vadd.f32 0.0, %v691
      %v693 = vpop.f32.mrb[0].mxu0
      %694 = vdwg.mxu0
      %v695 = vsel %vm401, %v215, 0
      %v697 = vsel %vm401, %v216, 0
      %v699 = vsel %vm401, %v218, 0
      %v701 = vsel %vm401, %v219, 0
      %v703 = vsel %vm401, %v221, 0
      %v705 = vsel %vm401, %v222, 0
      %v707 = vsel %vm401, %v224, 0
      %v709 = vsel %vm401, %v225, 0
      %v711 = vsel %vm401, %v227, 0
      %v713 = vsel %vm401, %v228, 0
      %v715 = vsel %vm401, %v230, 0
      %v717 = vsel %vm401, %v231, 0
      %v719 = vsel %vm401, %v233, 0
      %v721 = vsel %vm401, %v234, 0
      %v723 = vsel %vm401, %v236, 0
      %v725 = vsel %vm401, %v237, 0
      %v727 = vsel %vm401, %v239, 0
      %v729 = vsel %vm401, %v240, 0
      %v731 = vsel %vm401, %v242, 0
      %v733 = vsel %vm401, %v243, 0
      %v735 = vsel %vm401, %v245, 0
      %v737 = vsel %vm401, %v246, 0
      %v739 = vsel %vm401, %v248, 0
      %v741 = vsel %vm401, %v249, 0
      %v743 = vsel %vm401, %v251, 0
      %v745 = vsel %vm401, %v252, 0
      %v747 = vsel %vm401, %v254, 0
      %v749 = vsel %vm401, %v255, 0
      %v751 = vsel %vm401, %v257, 0
      %v753 = vsel %vm401, %v258, 0
      %v755 = vsel %vm401, %v260, 0
      %v757 = vsel %vm401, %v261, 0
      %v760 = vsel %vm466, %v269, 0
      %762 = vmatprep.subr.mxu0 0.0
      %763 = vmatpush1.msra.mxu0 %v760
      %764 = vmatprep.subr.mxu0 0.0
      %765 = vmatpush1.msra.mxu0 0.0
      %766 = vmatprep.subr.mxu0 0.0
      %767 = vmatpush1.msra.mxu0 0.0
      %768 = vmatprep.subr.mxu0 0.0
      %769 = vmatpush1.msra.mxu0 0.0
      %770 = vmatprep.subr.mxu0 0.0
      %771 = vmatpush1.msra.mxu0 0.0
      %772 = vmatprep.subr.mxu0 0.0
      %773 = vmatpush1.msra.mxu0 0.0
      %774 = vmatprep.subr.mxu0 0.0
      %775 = vmatpush1.msra.mxu0 0.0
      %776 = vmatprep.subr.mxu0 0.0
      %777 = vmatpush1.msra.mxu0 0.0
      %778 = vmatprep.subr.mxu0 0.0
      %779 = vmatpush1.msra.mxu0 0.0
      %780 = vmatprep.subr.mxu0 0.0
      %781 = vmatpush1.msra.mxu0 0.0
      %782 = vmatprep.subr.mxu0 0.0
      %783 = vmatpush1.msra.mxu0 0.0
      %784 = vmatprep.subr.mxu0 0.0
      %785 = vmatpush1.msra.mxu0 0.0
      %786 = vmatprep.subr.mxu0 0.0
      %787 = vmatpush1.msra.mxu0 0.0
      %788 = vmatprep.subr.mxu0 0.0
      %789 = vmatpush1.msra.mxu0 0.0
      %790 = vmatprep.subr.mxu0 0.0
      %791 = vmatpush1.msra.mxu0 0.0
      %792 = vmatprep.subr.mxu0 0.0
      %793 = vmatpush1.msra.mxu0 0.0
      %794 = vmatprep.subr.mxu0 0.0
      %795 = vmatpush1.msra.mxu0 0.0
      %796 = vmatprep.subr.mxu0 0.0
      %797 = vmatpush1.msra.mxu0 0.0
      %798 = vmatprep.subr.mxu0 0.0
      %799 = vmatpush1.msra.mxu0 0.0
      %800 = vmatprep.subr.mxu0 0.0
      %801 = vmatpush1.msra.mxu0 0.0
      %802 = vmatprep.subr.mxu0 0.0
      %803 = vmatpush1.msra.mxu0 0.0
      %804 = vmatprep.subr.mxu0 0.0
      %805 = vmatpush1.msra.mxu0 0.0
      %806 = vmatprep.subr.mxu0 0.0
      %807 = vmatpush1.msra.mxu0 0.0
      %808 = vmatprep.subr.mxu0 0.0
      %809 = vmatpush1.msra.mxu0 0.0
      %810 = vmatprep.subr.mxu0 0.0
      %811 = vmatpush1.msra.mxu0 0.0
      %812 = vmatprep.subr.mxu0 0.0
      %813 = vmatpush1.msra.mxu0 0.0
      %814 = vmatprep.subr.mxu0 0.0
      %815 = vmatpush1.msra.mxu0 0.0
      %816 = vmatprep.subr.mxu0 0.0
      %817 = vmatpush1.msra.mxu0 0.0
      %818 = vmatprep.subr.mxu0 0.0
      %819 = vmatpush1.msra.mxu0 0.0
      %820 = vmatprep.subr.mxu0 0.0
      %821 = vmatpush1.msra.mxu0 0.0
      %822 = vmatprep.subr.mxu0 0.0
      %823 = vmatpush1.msra.mxu0 0.0
      %824 = vmatprep.subr.mxu0 0.0
      %825 = vmatpush1.msra.mxu0 0.0
      %826 = vmatprep.mubr.f32.mxu0 0.0
      %827 = vmatmul.mubr.f32.gmra.mrb[0].mxu0 %v695
      %v828 = vpop.f32.mrb[0].mxu0
      %v829 = vadd.f32 %v537, %v828
      %v830 = vpop.f32.mrb[0].mxu0
      %831 = vmatprep.mubr.f32.mxu0 0.0
      %832 = vmatmul.mubr.f32.gmra.mrb[0].mxu0 %v697
      %v833 = vpop.f32.mrb[0].mxu0
      %v834 = vadd.f32 %v542, %v833
      %v835 = vpop.f32.mrb[0].mxu0
      %836 = vmatprep.mubr.f32.mxu0 0.0
      %837 = vmatmul.mubr.f32.gmra.mrb[0].mxu0 %v699
      %v838 = vpop.f32.mrb[0].mxu0
      %v839 = vadd.f32 %v547, %v838
      %v840 = vpop.f32.mrb[0].mxu0
      %841 = vmatprep.mubr.f32.mxu0 0.0
      %842 = vmatmul.mubr.f32.gmra.mrb[0].mxu0 %v701
      %v843 = vpop.f32.mrb[0].mxu0
      %v844 = vadd.f32 %v552, %v843
      %v845 = vpop.f32.mrb[0].mxu0
      %846 = vmatprep.mubr.f32.mxu0 0.0
      %847 = vmatmul.mubr.f32.gmra.mrb[0].mxu0 %v703
      %v848 = vpop.f32.mrb[0].mxu0
      %v849 = vadd.f32 %v557, %v848
      %v850 = vpop.f32.mrb[0].mxu0
      %851 = vmatprep.mubr.f32.mxu0 0.0
      %852 = vmatmul.mubr.f32.gmra.mrb[0].mxu0 %v705
      %v853 = vpop.f32.mrb[0].mxu0
      %v854 = vadd.f32 %v562, %v853
      %v855 = vpop.f32.mrb[0].mxu0
      %856 = vmatprep.mubr.f32.mxu0 0.0
      %857 = vmatmul.mubr.f32.gmra.mrb[0].mxu0 %v707
      %v858 = vpop.f32.mrb[0].mxu0
      %v859 = vadd.f32 %v567, %v858
      %v860 = vpop.f32.mrb[0].mxu0
      %861 = vmatprep.mubr.f32.mxu0 0.0
      %862 = vmatmul.mubr.f32.gmra.mrb[0].mxu0 %v709
      %v863 = vpop.f32.mrb[0].mxu0
      %v864 = vadd.f32 %v572, %v863
      %v865 = vpop.f32.mrb[0].mxu0
      %866 = vmatprep.mubr.f32.mxu0 0.0
      %867 = vmatmul.mubr.f32.gmra.mrb[0].mxu0 %v711
      %v868 = vpop.f32.mrb[0].mxu0
      %v869 = vadd.f32 %v577, %v868
      %v870 = vpop.f32.mrb[0].mxu0
      %871 = vmatprep.mubr.f32.mxu0 0.0
      %872 = vmatmul.mubr.f32.gmra.mrb[0].mxu0 %v713
      %v873 = vpop.f32.mrb[0].mxu0
      %v874 = vadd.f32 %v582, %v873
      %v875 = vpop.f32.mrb[0].mxu0
      %876 = vmatprep.mubr.f32.mxu0 0.0
      %877 = vmatmul.mubr.f32.gmra.mrb[0].mxu0 %v715
      %v878 = vpop.f32.mrb[0].mxu0
      %v879 = vadd.f32 %v587, %v878
      %v880 = vpop.f32.mrb[0].mxu0
      %881 = vmatprep.mubr.f32.mxu0 0.0
      %882 = vmatmul.mubr.f32.gmra.mrb[0].mxu0 %v717
      %v883 = vpop.f32.mrb[0].mxu0
      %v884 = vadd.f32 %v592, %v883
      %v885 = vpop.f32.mrb[0].mxu0
      %886 = vmatprep.mubr.f32.mxu0 0.0
      %887 = vmatmul.mubr.f32.gmra.mrb[0].mxu0 %v719
      %v888 = vpop.f32.mrb[0].mxu0
      %v889 = vadd.f32 %v597, %v888
      %v890 = vpop.f32.mrb[0].mxu0
      %891 = vmatprep.mubr.f32.mxu0 0.0
      %892 = vmatmul.mubr.f32.gmra.mrb[0].mxu0 %v721
      %v893 = vpop.f32.mrb[0].mxu0
      %v894 = vadd.f32 %v602, %v893
      %v895 = vpop.f32.mrb[0].mxu0
      %896 = vmatprep.mubr.f32.mxu0 0.0
      %897 = vmatmul.mubr.f32.gmra.mrb[0].mxu0 %v723
      %v898 = vpop.f32.mrb[0].mxu0
      %v899 = vadd.f32 %v607, %v898
      %v900 = vpop.f32.mrb[0].mxu0
      %901 = vmatprep.mubr.f32.mxu0 0.0
      %902 = vmatmul.mubr.f32.gmra.mrb[0].mxu0 %v725
      %v903 = vpop.f32.mrb[0].mxu0
      %v904 = vadd.f32 %v612, %v903
      %v905 = vpop.f32.mrb[0].mxu0
      %906 = vmatprep.mubr.f32.mxu0 0.0
      %907 = vmatmul.mubr.f32.gmra.mrb[0].mxu0 %v727
      %v908 = vpop.f32.mrb[0].mxu0
      %v909 = vadd.f32 %v617, %v908
      %v910 = vpop.f32.mrb[0].mxu0
      %911 = vmatprep.mubr.f32.mxu0 0.0
      %912 = vmatmul.mubr.f32.gmra.mrb[0].mxu0 %v729
      %v913 = vpop.f32.mrb[0].mxu0
      %v914 = vadd.f32 %v622, %v913
      %v915 = vpop.f32.mrb[0].mxu0
      %916 = vmatprep.mubr.f32.mxu0 0.0
      %917 = vmatmul.mubr.f32.gmra.mrb[0].mxu0 %v731
      %v918 = vpop.f32.mrb[0].mxu0
      %v919 = vadd.f32 %v627, %v918
      %v920 = vpop.f32.mrb[0].mxu0
      %921 = vmatprep.mubr.f32.mxu0 0.0
      %922 = vmatmul.mubr.f32.gmra.mrb[0].mxu0 %v733
      %v923 = vpop.f32.mrb[0].mxu0
      %v924 = vadd.f32 %v632, %v923
      %v925 = vpop.f32.mrb[0].mxu0
      %926 = vmatprep.mubr.f32.mxu0 0.0
      %927 = vmatmul.mubr.f32.gmra.mrb[0].mxu0 %v735
      %v928 = vpop.f32.mrb[0].mxu0
      %v929 = vadd.f32 %v637, %v928
      %v930 = vpop.f32.mrb[0].mxu0
      %931 = vmatprep.mubr.f32.mxu0 0.0
      %932 = vmatmul.mubr.f32.gmra.mrb[0].mxu0 %v737
      %v933 = vpop.f32.mrb[0].mxu0
      %v934 = vadd.f32 %v642, %v933
      %v935 = vpop.f32.mrb[0].mxu0
      %936 = vmatprep.mubr.f32.mxu0 0.0
      %937 = vmatmul.mubr.f32.gmra.mrb[0].mxu0 %v739
      %v938 = vpop.f32.mrb[0].mxu0
      %v939 = vadd.f32 %v647, %v938
      %v940 = vpop.f32.mrb[0].mxu0
      %941 = vmatprep.mubr.f32.mxu0 0.0
      %942 = vmatmul.mubr.f32.gmra.mrb[0].mxu0 %v741
      %v943 = vpop.f32.mrb[0].mxu0
      %v944 = vadd.f32 %v652, %v943
      %v945 = vpop.f32.mrb[0].mxu0
      %946 = vmatprep.mubr.f32.mxu0 0.0
      %947 = vmatmul.mubr.f32.gmra.mrb[0].mxu0 %v743
      %v948 = vpop.f32.mrb[0].mxu0
      %v949 = vadd.f32 %v657, %v948
      %v950 = vpop.f32.mrb[0].mxu0
      %951 = vmatprep.mubr.f32.mxu0 0.0
      %952 = vmatmul.mubr.f32.gmra.mrb[0].mxu0 %v745
      %v953 = vpop.f32.mrb[0].mxu0
      %v954 = vadd.f32 %v662, %v953
      %v955 = vpop.f32.mrb[0].mxu0
      %956 = vmatprep.mubr.f32.mxu0 0.0
      %957 = vmatmul.mubr.f32.gmra.mrb[0].mxu0 %v747
      %v958 = vpop.f32.mrb[0].mxu0
      %v959 = vadd.f32 %v667, %v958
      %v960 = vpop.f32.mrb[0].mxu0
      %961 = vmatprep.mubr.f32.mxu0 0.0
      %962 = vmatmul.mubr.f32.gmra.mrb[0].mxu0 %v749
      %v963 = vpop.f32.mrb[0].mxu0
      %v964 = vadd.f32 %v672, %v963
      %v965 = vpop.f32.mrb[0].mxu0
      %966 = vmatprep.mubr.f32.mxu0 0.0
      %967 = vmatmul.mubr.f32.gmra.mrb[0].mxu0 %v751
      %v968 = vpop.f32.mrb[0].mxu0
      %v969 = vadd.f32 %v677, %v968
      %v970 = vpop.f32.mrb[0].mxu0
      %971 = vmatprep.mubr.f32.mxu0 0.0
      %972 = vmatmul.mubr.f32.gmra.mrb[0].mxu0 %v753
      %v973 = vpop.f32.mrb[0].mxu0
      %v974 = vadd.f32 %v682, %v973
      %v975 = vpop.f32.mrb[0].mxu0
      %976 = vmatprep.mubr.f32.mxu0 0.0
      %977 = vmatmul.mubr.f32.gmra.mrb[0].mxu0 %v755
      %v978 = vpop.f32.mrb[0].mxu0
      %v979 = vadd.f32 %v687, %v978
      %v980 = vpop.f32.mrb[0].mxu0
      %981 = vmatprep.mubr.f32.mxu0 0.0
      %982 = vmatmul.mubr.f32.gmra.mrb[0].mxu0 %v757
      %v983 = vpop.f32.mrb[0].mxu0
      %v984 = vadd.f32 %v692, %v983
      %v985 = vpop.f32.mrb[0].mxu0
      %986 = vdwg.mxu0
      %vm987 = vcmask 1045504
      %v988 = vrot.slane %v215, 2
      %v989 = vrot.slane %v216, 2
      %v990 = vsel %vm987, %v988, %v989
      %v991 = vrot.slane %v217, 2
      %v992 = vsel %vm987, %v989, %v991
      %v993 = vrot.slane %v218, 2
      %v994 = vrot.slane %v219, 2
      %v995 = vsel %vm987, %v993, %v994
      %v996 = vrot.slane %v220, 2
      %v997 = vsel %vm987, %v994, %v996
      %v998 = vrot.slane %v221, 2
      %v999 = vrot.slane %v222, 2
      %v1000 = vsel %vm987, %v998, %v999
      %v1001 = vrot.slane %v223, 2
      %v1002 = vsel %vm987, %v999, %v1001
      %v1003 = vrot.slane %v224, 2
      %v1004 = vrot.slane %v225, 2
      %v1005 = vsel %vm987, %v1003, %v1004
      %v1006 = vrot.slane %v226, 2
      %v1007 = vsel %vm987, %v1004, %v1006
      %v1008 = vrot.slane %v227, 2
      %v1009 = vrot.slane %v228, 2
      %v1010 = vsel %vm987, %v1008, %v1009
      %v1011 = vrot.slane %v229, 2
      %v1012 = vsel %vm987, %v1009, %v1011
      %v1013 = vrot.slane %v230, 2
      %v1014 = vrot.slane %v231, 2
      %v1015 = vsel %vm987, %v1013, %v1014
      %v1016 = vrot.slane %v232, 2
      %v1017 = vsel %vm987, %v1014, %v1016
      %v1018 = vrot.slane %v233, 2
      %v1019 = vrot.slane %v234, 2
      %v1020 = vsel %vm987, %v1018, %v1019
      %v1021 = vrot.slane %v235, 2
      %v1022 = vsel %vm987, %v1019, %v1021
      %v1023 = vrot.slane %v236, 2
      %v1024 = vrot.slane %v237, 2
      %v1025 = vsel %vm987, %v1023, %v1024
      %v1026 = vrot.slane %v238, 2
      %v1027 = vsel %vm987, %v1024, %v1026
      %v1028 = vrot.slane %v239, 2
      %v1029 = vrot.slane %v240, 2
      %v1030 = vsel %vm987, %v1028, %v1029
      %v1031 = vrot.slane %v241, 2
      %v1032 = vsel %vm987, %v1029, %v1031
      %v1033 = vrot.slane %v242, 2
      %v1034 = vrot.slane %v243, 2
      %v1035 = vsel %vm987, %v1033, %v1034
      %v1036 = vrot.slane %v244, 2
      %v1037 = vsel %vm987, %v1034, %v1036
      %v1038 = vrot.slane %v245, 2
      %v1039 = vrot.slane %v246, 2
      %v1040 = vsel %vm987, %v1038, %v1039
      %v1041 = vrot.slane %v247, 2
      %v1042 = vsel %vm987, %v1039, %v1041
      %v1043 = vrot.slane %v248, 2
      %v1044 = vrot.slane %v249, 2
      %v1045 = vsel %vm987, %v1043, %v1044
      %v1046 = vrot.slane %v250, 2
      %v1047 = vsel %vm987, %v1044, %v1046
      %v1048 = vrot.slane %v251, 2
      %v1049 = vrot.slane %v252, 2
      %v1050 = vsel %vm987, %v1048, %v1049
      %v1051 = vrot.slane %v253, 2
      %v1052 = vsel %vm987, %v1049, %v1051
      %v1053 = vrot.slane %v254, 2
      %v1054 = vrot.slane %v255, 2
      %v1055 = vsel %vm987, %v1053, %v1054
      %v1056 = vrot.slane %v256, 2
      %v1057 = vsel %vm987, %v1054, %v1056
      %v1058 = vrot.slane %v257, 2
      %v1059 = vrot.slane %v258, 2
      %v1060 = vsel %vm987, %v1058, %v1059
      %v1061 = vrot.slane %v259, 2
      %v1062 = vsel %vm987, %v1059, %v1061
      %v1063 = vrot.slane %v260, 2
      %v1064 = vrot.slane %v261, 2
      %v1065 = vsel %vm987, %v1063, %v1064
      %v1066 = vrot.slane %v262, 2
      %v1067 = vsel %vm987, %v1064, %v1066
      %s1068 = scalar_lea.vmem %s1, 8
      %v1069 = vld [vmem:[%s1068] sm:$0xf]
      %v1070 = vsel %vm401, %v990, 0
      %v1072 = vsel %vm401, %v992, 0
      %v1074 = vsel %vm401, %v995, 0
      %v1076 = vsel %vm401, %v997, 0
      %v1078 = vsel %vm401, %v1000, 0
      %v1080 = vsel %vm401, %v1002, 0
      %v1082 = vsel %vm401, %v1005, 0
      %v1084 = vsel %vm401, %v1007, 0
      %v1086 = vsel %vm401, %v1010, 0
      %v1088 = vsel %vm401, %v1012, 0
      %v1090 = vsel %vm401, %v1015, 0
      %v1092 = vsel %vm401, %v1017, 0
      %v1094 = vsel %vm401, %v1020, 0
      %v1096 = vsel %vm401, %v1022, 0
      %v1098 = vsel %vm401, %v1025, 0
      %v1100 = vsel %vm401, %v1027, 0
      %v1102 = vsel %vm401, %v1030, 0
      %v1104 = vsel %vm401, %v1032, 0
      %v1106 = vsel %vm401, %v1035, 0
      %v1108 = vsel %vm401, %v1037, 0
      %v1110 = vsel %vm401, %v1040, 0
      %v1112 = vsel %vm401, %v1042, 0
      %v1114 = vsel %vm401, %v1045, 0
      %v1116 = vsel %vm401, %v1047, 0
      %v1118 = vsel %vm401, %v1050, 0
      %v1120 = vsel %vm401, %v1052, 0
      %v1122 = vsel %vm401, %v1055, 0
      %v1124 = vsel %vm401, %v1057, 0
      %v1126 = vsel %vm401, %v1060, 0
      %v1128 = vsel %vm401, %v1062, 0
      %v1130 = vsel %vm401, %v1065, 0
      %v1132 = vsel %vm401, %v1067, 0
      %v1135 = vsel %vm466, %v1069, 0
      %1137 = vmatprep.subr.mxu0 0.0
      %1138 = vmatpush1.msra.mxu0 %v1135
      %1139 = vmatprep.subr.mxu0 0.0
      %1140 = vmatpush1.msra.mxu0 0.0
      %1141 = vmatprep.subr.mxu0 0.0
      %1142 = vmatpush1.msra.mxu0 0.0
      %1143 = vmatprep.subr.mxu0 0.0
      %1144 = vmatpush1.msra.mxu0 0.0
      %1145 = vmatprep.subr.mxu0 0.0
      %1146 = vmatpush1.msra.mxu0 0.0
      %1147 = vmatprep.subr.mxu0 0.0
      %1148 = vmatpush1.msra.mxu0 0.0
      %1149 = vmatprep.subr.mxu0 0.0
      %1150 = vmatpush1.msra.mxu0 0.0
      %1151 = vmatprep.subr.mxu0 0.0
      %1152 = vmatpush1.msra.mxu0 0.0
      %1153 = vmatprep.subr.mxu0 0.0
      %1154 = vmatpush1.msra.mxu0 0.0
      %1155 = vmatprep.subr.mxu0 0.0
      %1156 = vmatpush1.msra.mxu0 0.0
      %1157 = vmatprep.subr.mxu0 0.0
      %1158 = vmatpush1.msra.mxu0 0.0
      %1159 = vmatprep.subr.mxu0 0.0
      %1160 = vmatpush1.msra.mxu0 0.0
      %1161 = vmatprep.subr.mxu0 0.0
      %1162 = vmatpush1.msra.mxu0 0.0
      %1163 = vmatprep.subr.mxu0 0.0
      %1164 = vmatpush1.msra.mxu0 0.0
      %1165 = vmatprep.subr.mxu0 0.0
      %1166 = vmatpush1.msra.mxu0 0.0
      %1167 = vmatprep.subr.mxu0 0.0
      %1168 = vmatpush1.msra.mxu0 0.0
      %1169 = vmatprep.subr.mxu0 0.0
      %1170 = vmatpush1.msra.mxu0 0.0
      %1171 = vmatprep.subr.mxu0 0.0
      %1172 = vmatpush1.msra.mxu0 0.0
      %1173 = vmatprep.subr.mxu0 0.0
      %1174 = vmatpush1.msra.mxu0 0.0
      %1175 = vmatprep.subr.mxu0 0.0
      %1176 = vmatpush1.msra.mxu0 0.0
      %1177 = vmatprep.subr.mxu0 0.0
      %1178 = vmatpush1.msra.mxu0 0.0
      %1179 = vmatprep.subr.mxu0 0.0
      %1180 = vmatpush1.msra.mxu0 0.0
      %1181 = vmatprep.subr.mxu0 0.0
      %1182 = vmatpush1.msra.mxu0 0.0
      %1183 = vmatprep.subr.mxu0 0.0
      %1184 = vmatpush1.msra.mxu0 0.0
      %1185 = vmatprep.subr.mxu0 0.0
      %1186 = vmatpush1.msra.mxu0 0.0
      %1187 = vmatprep.subr.mxu0 0.0
      %1188 = vmatpush1.msra.mxu0 0.0
      %1189 = vmatprep.subr.mxu0 0.0
      %1190 = vmatpush1.msra.mxu0 0.0
      %1191 = vmatprep.subr.mxu0 0.0
      %1192 = vmatpush1.msra.mxu0 0.0
      %1193 = vmatprep.subr.mxu0 0.0
      %1194 = vmatpush1.msra.mxu0 0.0
      %1195 = vmatprep.subr.mxu0 0.0
      %1196 = vmatpush1.msra.mxu0 0.0
      %1197 = vmatprep.subr.mxu0 0.0
      %1198 = vmatpush1.msra.mxu0 0.0
      %1199 = vmatprep.subr.mxu0 0.0
      %1200 = vmatpush1.msra.mxu0 0.0
      %1201 = vmatprep.mubr.f32.mxu0 0.0
      %1202 = vmatmul.mubr.f32.gmra.mrb[0].mxu0 %v1070
      %v1203 = vpop.f32.mrb[0].mxu0
      %v1204 = vadd.f32 0.0, %v1203
      %v1205 = vpop.f32.mrb[0].mxu0
      %1206 = vmatprep.mubr.f32.mxu0 0.0
      %1207 = vmatmul.mubr.f32.gmra.mrb[0].mxu0 %v1072
      %v1208 = vpop.f32.mrb[0].mxu0
      %v1209 = vadd.f32 0.0, %v1208
      %v1210 = vpop.f32.mrb[0].mxu0
      %1211 = vmatprep.mubr.f32.mxu0 0.0
      %1212 = vmatmul.mubr.f32.gmra.mrb[0].mxu0 %v1074
      %v1213 = vpop.f32.mrb[0].mxu0
      %v1214 = vadd.f32 0.0, %v1213
      %v1215 = vpop.f32.mrb[0].mxu0
      %1216 = vmatprep.mubr.f32.mxu0 0.0
      %1217 = vmatmul.mubr.f32.gmra.mrb[0].mxu0 %v1076
      %v1218 = vpop.f32.mrb[0].mxu0
      %v1219 = vadd.f32 0.0, %v1218
      %v1220 = vpop.f32.mrb[0].mxu0
      %1221 = vmatprep.mubr.f32.mxu0 0.0
      %1222 = vmatmul.mubr.f32.gmra.mrb[0].mxu0 %v1078
      %v1223 = vpop.f32.mrb[0].mxu0
      %v1224 = vadd.f32 0.0, %v1223
      %v1225 = vpop.f32.mrb[0].mxu0
      %1226 = vmatprep.mubr.f32.mxu0 0.0
      %1227 = vmatmul.mubr.f32.gmra.mrb[0].mxu0 %v1080
      %v1228 = vpop.f32.mrb[0].mxu0
      %v1229 = vadd.f32 0.0, %v1228
      %v1230 = vpop.f32.mrb[0].mxu0
      %1231 = vmatprep.mubr.f32.mxu0 0.0
      %1232 = vmatmul.mubr.f32.gmra.mrb[0].mxu0 %v1082
      %v1233 = vpop.f32.mrb[0].mxu0
      %v1234 = vadd.f32 0.0, %v1233
      %v1235 = vpop.f32.mrb[0].mxu0
      %1236 = vmatprep.mubr.f32.mxu0 0.0
      %1237 = vmatmul.mubr.f32.gmra.mrb[0].mxu0 %v1084
      %v1238 = vpop.f32.mrb[0].mxu0
      %v1239 = vadd.f32 0.0, %v1238
      %v1240 = vpop.f32.mrb[0].mxu0
      %1241 = vmatprep.mubr.f32.mxu0 0.0
      %1242 = vmatmul.mubr.f32.gmra.mrb[0].mxu0 %v1086
      %v1243 = vpop.f32.mrb[0].mxu0
      %v1244 = vadd.f32 0.0, %v1243
      %v1245 = vpop.f32.mrb[0].mxu0
      %1246 = vmatprep.mubr.f32.mxu0 0.0
      %1247 = vmatmul.mubr.f32.gmra.mrb[0].mxu0 %v1088
      %v1248 = vpop.f32.mrb[0].mxu0
      %v1249 = vadd.f32 0.0, %v1248
      %v1250 = vpop.f32.mrb[0].mxu0
      %1251 = vmatprep.mubr.f32.mxu0 0.0
      %1252 = vmatmul.mubr.f32.gmra.mrb[0].mxu0 %v1090
      %v1253 = vpop.f32.mrb[0].mxu0
      %v1254 = vadd.f32 0.0, %v1253
      %v1255 = vpop.f32.mrb[0].mxu0
      %1256 = vmatprep.mubr.f32.mxu0 0.0
      %1257 = vmatmul.mubr.f32.gmra.mrb[0].mxu0 %v1092
      %v1258 = vpop.f32.mrb[0].mxu0
      %v1259 = vadd.f32 0.0, %v1258
      %v1260 = vpop.f32.mrb[0].mxu0
      %1261 = vmatprep.mubr.f32.mxu0 0.0
      %1262 = vmatmul.mubr.f32.gmra.mrb[0].mxu0 %v1094
      %v1263 = vpop.f32.mrb[0].mxu0
      %v1264 = vadd.f32 0.0, %v1263
      %v1265 = vpop.f32.mrb[0].mxu0
      %1266 = vmatprep.mubr.f32.mxu0 0.0
      %1267 = vmatmul.mubr.f32.gmra.mrb[0].mxu0 %v1096
      %v1268 = vpop.f32.mrb[0].mxu0
      %v1269 = vadd.f32 0.0, %v1268
      %v1270 = vpop.f32.mrb[0].mxu0
      %1271 = vmatprep.mubr.f32.mxu0 0.0
      %1272 = vmatmul.mubr.f32.gmra.mrb[0].mxu0 %v1098
      %v1273 = vpop.f32.mrb[0].mxu0
      %v1274 = vadd.f32 0.0, %v1273
      %v1275 = vpop.f32.mrb[0].mxu0
      %1276 = vmatprep.mubr.f32.mxu0 0.0
      %1277 = vmatmul.mubr.f32.gmra.mrb[0].mxu0 %v1100
      %v1278 = vpop.f32.mrb[0].mxu0
      %v1279 = vadd.f32 0.0, %v1278
      %v1280 = vpop.f32.mrb[0].mxu0
      %1281 = vmatprep.mubr.f32.mxu0 0.0
      %1282 = vmatmul.mubr.f32.gmra.mrb[0].mxu0 %v1102
      %v1283 = vpop.f32.mrb[0].mxu0
      %v1284 = vadd.f32 0.0, %v1283
      %v1285 = vpop.f32.mrb[0].mxu0
      %1286 = vmatprep.mubr.f32.mxu0 0.0
      %1287 = vmatmul.mubr.f32.gmra.mrb[0].mxu0 %v1104
      %v1288 = vpop.f32.mrb[0].mxu0
      %v1289 = vadd.f32 0.0, %v1288
      %v1290 = vpop.f32.mrb[0].mxu0
      %1291 = vmatprep.mubr.f32.mxu0 0.0
      %1292 = vmatmul.mubr.f32.gmra.mrb[0].mxu0 %v1106
      %v1293 = vpop.f32.mrb[0].mxu0
      %v1294 = vadd.f32 0.0, %v1293
      %v1295 = vpop.f32.mrb[0].mxu0
      %1296 = vmatprep.mubr.f32.mxu0 0.0
      %1297 = vmatmul.mubr.f32.gmra.mrb[0].mxu0 %v1108
      %v1298 = vpop.f32.mrb[0].mxu0
      %v1299 = vadd.f32 0.0, %v1298
      %v1300 = vpop.f32.mrb[0].mxu0
      %1301 = vmatprep.mubr.f32.mxu0 0.0
      %1302 = vmatmul.mubr.f32.gmra.mrb[0].mxu0 %v1110
      %v1303 = vpop.f32.mrb[0].mxu0
      %v1304 = vadd.f32 0.0, %v1303
      %v1305 = vpop.f32.mrb[0].mxu0
      %1306 = vmatprep.mubr.f32.mxu0 0.0
      %1307 = vmatmul.mubr.f32.gmra.mrb[0].mxu0 %v1112
      %v1308 = vpop.f32.mrb[0].mxu0
      %v1309 = vadd.f32 0.0, %v1308
      %v1310 = vpop.f32.mrb[0].mxu0
      %1311 = vmatprep.mubr.f32.mxu0 0.0
      %1312 = vmatmul.mubr.f32.gmra.mrb[0].mxu0 %v1114
      %v1313 = vpop.f32.mrb[0].mxu0
      %v1314 = vadd.f32 0.0, %v1313
      %v1315 = vpop.f32.mrb[0].mxu0
      %1316 = vmatprep.mubr.f32.mxu0 0.0
      %1317 = vmatmul.mubr.f32.gmra.mrb[0].mxu0 %v1116
      %v1318 = vpop.f32.mrb[0].mxu0
      %v1319 = vadd.f32 0.0, %v1318
      %v1320 = vpop.f32.mrb[0].mxu0
      %1321 = vmatprep.mubr.f32.mxu0 0.0
      %1322 = vmatmul.mubr.f32.gmra.mrb[0].mxu0 %v1118
      %v1323 = vpop.f32.mrb[0].mxu0
      %v1324 = vadd.f32 0.0, %v1323
      %v1325 = vpop.f32.mrb[0].mxu0
      %1326 = vmatprep.mubr.f32.mxu0 0.0
      %1327 = vmatmul.mubr.f32.gmra.mrb[0].mxu0 %v1120
      %v1328 = vpop.f32.mrb[0].mxu0
      %v1329 = vadd.f32 0.0, %v1328
      %v1330 = vpop.f32.mrb[0].mxu0
      %1331 = vmatprep.mubr.f32.mxu0 0.0
      %1332 = vmatmul.mubr.f32.gmra.mrb[0].mxu0 %v1122
      %v1333 = vpop.f32.mrb[0].mxu0
      %v1334 = vadd.f32 0.0, %v1333
      %v1335 = vpop.f32.mrb[0].mxu0
      %1336 = vmatprep.mubr.f32.mxu0 0.0
      %1337 = vmatmul.mubr.f32.gmra.mrb[0].mxu0 %v1124
      %v1338 = vpop.f32.mrb[0].mxu0
      %v1339 = vadd.f32 0.0, %v1338
      %v1340 = vpop.f32.mrb[0].mxu0
      %1341 = vmatprep.mubr.f32.mxu0 0.0
      %1342 = vmatmul.mubr.f32.gmra.mrb[0].mxu0 %v1126
      %v1343 = vpop.f32.mrb[0].mxu0
      %v1344 = vadd.f32 0.0, %v1343
      %v1345 = vpop.f32.mrb[0].mxu0
      %1346 = vmatprep.mubr.f32.mxu0 0.0
      %1347 = vmatmul.mubr.f32.gmra.mrb[0].mxu0 %v1128
      %v1348 = vpop.f32.mrb[0].mxu0
      %v1349 = vadd.f32 0.0, %v1348
      %v1350 = vpop.f32.mrb[0].mxu0
      %1351 = vmatprep.mubr.f32.mxu0 0.0
      %1352 = vmatmul.mubr.f32.gmra.mrb[0].mxu0 %v1130
      %v1353 = vpop.f32.mrb[0].mxu0
      %v1354 = vadd.f32 0.0, %v1353
      %v1355 = vpop.f32.mrb[0].mxu0
      %1356 = vmatprep.mubr.f32.mxu0 0.0
      %1357 = vmatmul.mubr.f32.gmra.mrb[0].mxu0 %v1132
      %v1358 = vpop.f32.mrb[0].mxu0
      %v1359 = vadd.f32 0.0, %v1358
      %v1360 = vpop.f32.mrb[0].mxu0
      %1361 = vdwg.mxu0
      %v1362 = vadd.f32 %v829, %v1204
      %v1363 = vadd.f32 %v834, %v1209
      %v1364 = vadd.f32 %v839, %v1214
      %v1365 = vadd.f32 %v844, %v1219
      %v1366 = vadd.f32 %v849, %v1224
      %v1367 = vadd.f32 %v854, %v1229
      %v1368 = vadd.f32 %v859, %v1234
      %v1369 = vadd.f32 %v864, %v1239
      %v1370 = vadd.f32 %v869, %v1244
      %v1371 = vadd.f32 %v874, %v1249
      %v1372 = vadd.f32 %v879, %v1254
      %v1373 = vadd.f32 %v884, %v1259
      %v1374 = vadd.f32 %v889, %v1264
      %v1375 = vadd.f32 %v894, %v1269
      %v1376 = vadd.f32 %v899, %v1274
      %v1377 = vadd.f32 %v904, %v1279
      %v1378 = vadd.f32 %v909, %v1284
      %v1379 = vadd.f32 %v914, %v1289
      %v1380 = vadd.f32 %v919, %v1294
      %v1381 = vadd.f32 %v924, %v1299
      %v1382 = vadd.f32 %v929, %v1304
      %v1383 = vadd.f32 %v934, %v1309
      %v1384 = vadd.f32 %v939, %v1314
      %v1385 = vadd.f32 %v944, %v1319
      %v1386 = vadd.f32 %v949, %v1324
      %v1387 = vadd.f32 %v954, %v1329
      %v1388 = vadd.f32 %v959, %v1334
      %v1389 = vadd.f32 %v964, %v1339
      %v1390 = vadd.f32 %v969, %v1344
      %v1391 = vadd.f32 %v974, %v1349
      %v1392 = vadd.f32 %v979, %v1354
      %v1393 = vadd.f32 %v984, %v1359
      %s1394 = scalar_lea.vmem %s1, 12
      %v1395 = vld [vmem:[%s1394] sm:$0xf]
      %v1397 = vsel %vm401, %v263, 0
      %v1400 = vsel %vm401, %v264, 0
      %v1403 = vsel %vm466, %v1395, 0
      %1405 = vmatprep.subr.mxu0 0.0
      %1406 = vmatpush1.msra.mxu0 %v1403
      %1407 = vmatprep.subr.mxu0 0.0
      %1408 = vmatpush1.msra.mxu0 0.0
      %1409 = vmatprep.subr.mxu0 0.0
      %1410 = vmatpush1.msra.mxu0 0.0
      %1411 = vmatprep.subr.mxu0 0.0
      %1412 = vmatpush1.msra.mxu0 0.0
      %1413 = vmatprep.subr.mxu0 0.0
      %1414 = vmatpush1.msra.mxu0 0.0
      %1415 = vmatprep.subr.mxu0 0.0
      %1416 = vmatpush1.msra.mxu0 0.0
      %1417 = vmatprep.subr.mxu0 0.0
      %1418 = vmatpush1.msra.mxu0 0.0
      %1419 = vmatprep.subr.mxu0 0.0
      %1420 = vmatpush1.msra.mxu0 0.0
      %1421 = vmatprep.subr.mxu0 0.0
      %1422 = vmatpush1.msra.mxu0 0.0
      %1423 = vmatprep.subr.mxu0 0.0
      %1424 = vmatpush1.msra.mxu0 0.0
      %1425 = vmatprep.subr.mxu0 0.0
      %1426 = vmatpush1.msra.mxu0 0.0
      %1427 = vmatprep.subr.mxu0 0.0
      %1428 = vmatpush1.msra.mxu0 0.0
      %1429 = vmatprep.subr.mxu0 0.0
      %1430 = vmatpush1.msra.mxu0 0.0
      %1431 = vmatprep.subr.mxu0 0.0
      %1432 = vmatpush1.msra.mxu0 0.0
      %1433 = vmatprep.subr.mxu0 0.0
      %1434 = vmatpush1.msra.mxu0 0.0
      %1435 = vmatprep.subr.mxu0 0.0
      %1436 = vmatpush1.msra.mxu0 0.0
      %1437 = vmatprep.subr.mxu0 0.0
      %1438 = vmatpush1.msra.mxu0 0.0
      %1439 = vmatprep.subr.mxu0 0.0
      %1440 = vmatpush1.msra.mxu0 0.0
      %1441 = vmatprep.subr.mxu0 0.0
      %1442 = vmatpush1.msra.mxu0 0.0
      %1443 = vmatprep.subr.mxu0 0.0
      %1444 = vmatpush1.msra.mxu0 0.0
      %1445 = vmatprep.subr.mxu0 0.0
      %1446 = vmatpush1.msra.mxu0 0.0
      %1447 = vmatprep.subr.mxu0 0.0
      %1448 = vmatpush1.msra.mxu0 0.0
      %1449 = vmatprep.subr.mxu0 0.0
      %1450 = vmatpush1.msra.mxu0 0.0
      %1451 = vmatprep.subr.mxu0 0.0
      %1452 = vmatpush1.msra.mxu0 0.0
      %1453 = vmatprep.subr.mxu0 0.0
      %1454 = vmatpush1.msra.mxu0 0.0
      %1455 = vmatprep.subr.mxu0 0.0
      %1456 = vmatpush1.msra.mxu0 0.0
      %1457 = vmatprep.subr.mxu0 0.0
      %1458 = vmatpush1.msra.mxu0 0.0
      %1459 = vmatprep.subr.mxu0 0.0
      %1460 = vmatpush1.msra.mxu0 0.0
      %1461 = vmatprep.subr.mxu0 0.0
      %1462 = vmatpush1.msra.mxu0 0.0
      %1463 = vmatprep.subr.mxu0 0.0
      %1464 = vmatpush1.msra.mxu0 0.0
      %1465 = vmatprep.subr.mxu0 0.0
      %1466 = vmatpush1.msra.mxu0 0.0
      %1467 = vmatprep.subr.mxu0 0.0
      %1468 = vmatpush1.msra.mxu0 0.0
      %1469 = vmatprep.mubr.f32.mxu0 0.0
      %1470 = vmatmul.mubr.f32.gmra.mrb[0].mxu0 %v699
      %v1471 = vpop.f32.mrb[0].mxu0
      %v1472 = vadd.f32 0.0, %v1471
      %v1473 = vpop.f32.mrb[0].mxu0
      %1474 = vmatprep.mubr.f32.mxu0 0.0
      %1475 = vmatmul.mubr.f32.gmra.mrb[0].mxu0 %v701
      %v1476 = vpop.f32.mrb[0].mxu0
      %v1477 = vadd.f32 0.0, %v1476
      %v1478 = vpop.f32.mrb[0].mxu0
      %1479 = vmatprep.mubr.f32.mxu0 0.0
      %1480 = vmatmul.mubr.f32.gmra.mrb[0].mxu0 %v703
      %v1481 = vpop.f32.mrb[0].mxu0
      %v1482 = vadd.f32 0.0, %v1481
      %v1483 = vpop.f32.mrb[0].mxu0
      %1484 = vmatprep.mubr.f32.mxu0 0.0
      %1485 = vmatmul.mubr.f32.gmra.mrb[0].mxu0 %v705
      %v1486 = vpop.f32.mrb[0].mxu0
      %v1487 = vadd.f32 0.0, %v1486
      %v1488 = vpop.f32.mrb[0].mxu0
      %1489 = vmatprep.mubr.f32.mxu0 0.0
      %1490 = vmatmul.mubr.f32.gmra.mrb[0].mxu0 %v707
      %v1491 = vpop.f32.mrb[0].mxu0
      %v1492 = vadd.f32 0.0, %v1491
      %v1493 = vpop.f32.mrb[0].mxu0
      %1494 = vmatprep.mubr.f32.mxu0 0.0
      %1495 = vmatmul.mubr.f32.gmra.mrb[0].mxu0 %v709
      %v1496 = vpop.f32.mrb[0].mxu0
      %v1497 = vadd.f32 0.0, %v1496
      %v1498 = vpop.f32.mrb[0].mxu0
      %1499 = vmatprep.mubr.f32.mxu0 0.0
      %1500 = vmatmul.mubr.f32.gmra.mrb[0].mxu0 %v711
      %v1501 = vpop.f32.mrb[0].mxu0
      %v1502 = vadd.f32 0.0, %v1501
      %v1503 = vpop.f32.mrb[0].mxu0
      %1504 = vmatprep.mubr.f32.mxu0 0.0
      %1505 = vmatmul.mubr.f32.gmra.mrb[0].mxu0 %v713
      %v1506 = vpop.f32.mrb[0].mxu0
      %v1507 = vadd.f32 0.0, %v1506
      %v1508 = vpop.f32.mrb[0].mxu0
      %1509 = vmatprep.mubr.f32.mxu0 0.0
      %1510 = vmatmul.mubr.f32.gmra.mrb[0].mxu0 %v715
      %v1511 = vpop.f32.mrb[0].mxu0
      %v1512 = vadd.f32 0.0, %v1511
      %v1513 = vpop.f32.mrb[0].mxu0
      %1514 = vmatprep.mubr.f32.mxu0 0.0
      %1515 = vmatmul.mubr.f32.gmra.mrb[0].mxu0 %v717
      %v1516 = vpop.f32.mrb[0].mxu0
      %v1517 = vadd.f32 0.0, %v1516
      %v1518 = vpop.f32.mrb[0].mxu0
      %1519 = vmatprep.mubr.f32.mxu0 0.0
      %1520 = vmatmul.mubr.f32.gmra.mrb[0].mxu0 %v719
      %v1521 = vpop.f32.mrb[0].mxu0
      %v1522 = vadd.f32 0.0, %v1521
      %v1523 = vpop.f32.mrb[0].mxu0
      %1524 = vmatprep.mubr.f32.mxu0 0.0
      %1525 = vmatmul.mubr.f32.gmra.mrb[0].mxu0 %v721
      %v1526 = vpop.f32.mrb[0].mxu0
      %v1527 = vadd.f32 0.0, %v1526
      %v1528 = vpop.f32.mrb[0].mxu0
      %1529 = vmatprep.mubr.f32.mxu0 0.0
      %1530 = vmatmul.mubr.f32.gmra.mrb[0].mxu0 %v723
      %v1531 = vpop.f32.mrb[0].mxu0
      %v1532 = vadd.f32 0.0, %v1531
      %v1533 = vpop.f32.mrb[0].mxu0
      %1534 = vmatprep.mubr.f32.mxu0 0.0
      %1535 = vmatmul.mubr.f32.gmra.mrb[0].mxu0 %v725
      %v1536 = vpop.f32.mrb[0].mxu0
      %v1537 = vadd.f32 0.0, %v1536
      %v1538 = vpop.f32.mrb[0].mxu0
      %1539 = vmatprep.mubr.f32.mxu0 0.0
      %1540 = vmatmul.mubr.f32.gmra.mrb[0].mxu0 %v727
      %v1541 = vpop.f32.mrb[0].mxu0
      %v1542 = vadd.f32 0.0, %v1541
      %v1543 = vpop.f32.mrb[0].mxu0
      %1544 = vmatprep.mubr.f32.mxu0 0.0
      %1545 = vmatmul.mubr.f32.gmra.mrb[0].mxu0 %v729
      %v1546 = vpop.f32.mrb[0].mxu0
      %v1547 = vadd.f32 0.0, %v1546
      %v1548 = vpop.f32.mrb[0].mxu0
      %1549 = vmatprep.mubr.f32.mxu0 0.0
      %1550 = vmatmul.mubr.f32.gmra.mrb[0].mxu0 %v731
      %v1551 = vpop.f32.mrb[0].mxu0
      %v1552 = vadd.f32 0.0, %v1551
      %v1553 = vpop.f32.mrb[0].mxu0
      %1554 = vmatprep.mubr.f32.mxu0 0.0
      %1555 = vmatmul.mubr.f32.gmra.mrb[0].mxu0 %v733
      %v1556 = vpop.f32.mrb[0].mxu0
      %v1557 = vadd.f32 0.0, %v1556
      %v1558 = vpop.f32.mrb[0].mxu0
      %1559 = vmatprep.mubr.f32.mxu0 0.0
      %1560 = vmatmul.mubr.f32.gmra.mrb[0].mxu0 %v735
      %v1561 = vpop.f32.mrb[0].mxu0
      %v1562 = vadd.f32 0.0, %v1561
      %v1563 = vpop.f32.mrb[0].mxu0
      %1564 = vmatprep.mubr.f32.mxu0 0.0
      %1565 = vmatmul.mubr.f32.gmra.mrb[0].mxu0 %v737
      %v1566 = vpop.f32.mrb[0].mxu0
      %v1567 = vadd.f32 0.0, %v1566
      %v1568 = vpop.f32.mrb[0].mxu0
      %1569 = vmatprep.mubr.f32.mxu0 0.0
      %1570 = vmatmul.mubr.f32.gmra.mrb[0].mxu0 %v739
      %v1571 = vpop.f32.mrb[0].mxu0
      %v1572 = vadd.f32 0.0, %v1571
      %v1573 = vpop.f32.mrb[0].mxu0
      %1574 = vmatprep.mubr.f32.mxu0 0.0
      %1575 = vmatmul.mubr.f32.gmra.mrb[0].mxu0 %v741
      %v1576 = vpop.f32.mrb[0].mxu0
      %v1577 = vadd.f32 0.0, %v1576
      %v1578 = vpop.f32.mrb[0].mxu0
      %1579 = vmatprep.mubr.f32.mxu0 0.0
      %1580 = vmatmul.mubr.f32.gmra.mrb[0].mxu0 %v743
      %v1581 = vpop.f32.mrb[0].mxu0
      %v1582 = vadd.f32 0.0, %v1581
      %v1583 = vpop.f32.mrb[0].mxu0
      %1584 = vmatprep.mubr.f32.mxu0 0.0
      %1585 = vmatmul.mubr.f32.gmra.mrb[0].mxu0 %v745
      %v1586 = vpop.f32.mrb[0].mxu0
      %v1587 = vadd.f32 0.0, %v1586
      %v1588 = vpop.f32.mrb[0].mxu0
      %1589 = vmatprep.mubr.f32.mxu0 0.0
      %1590 = vmatmul.mubr.f32.gmra.mrb[0].mxu0 %v747
      %v1591 = vpop.f32.mrb[0].mxu0
      %v1592 = vadd.f32 0.0, %v1591
      %v1593 = vpop.f32.mrb[0].mxu0
      %1594 = vmatprep.mubr.f32.mxu0 0.0
      %1595 = vmatmul.mubr.f32.gmra.mrb[0].mxu0 %v749
      %v1596 = vpop.f32.mrb[0].mxu0
      %v1597 = vadd.f32 0.0, %v1596
      %v1598 = vpop.f32.mrb[0].mxu0
      %1599 = vmatprep.mubr.f32.mxu0 0.0
      %1600 = vmatmul.mubr.f32.gmra.mrb[0].mxu0 %v751
      %v1601 = vpop.f32.mrb[0].mxu0
      %v1602 = vadd.f32 0.0, %v1601
      %v1603 = vpop.f32.mrb[0].mxu0
      %1604 = vmatprep.mubr.f32.mxu0 0.0
      %1605 = vmatmul.mubr.f32.gmra.mrb[0].mxu0 %v753
      %v1606 = vpop.f32.mrb[0].mxu0
      %v1607 = vadd.f32 0.0, %v1606
      %v1608 = vpop.f32.mrb[0].mxu0
      %1609 = vmatprep.mubr.f32.mxu0 0.0
      %1610 = vmatmul.mubr.f32.gmra.mrb[0].mxu0 %v755
      %v1611 = vpop.f32.mrb[0].mxu0
      %v1612 = vadd.f32 0.0, %v1611
      %v1613 = vpop.f32.mrb[0].mxu0
      %1614 = vmatprep.mubr.f32.mxu0 0.0
      %1615 = vmatmul.mubr.f32.gmra.mrb[0].mxu0 %v757
      %v1616 = vpop.f32.mrb[0].mxu0
      %v1617 = vadd.f32 0.0, %v1616
      %v1618 = vpop.f32.mrb[0].mxu0
      %1619 = vmatprep.mubr.f32.mxu0 0.0
      %1620 = vmatmul.mubr.f32.gmra.mrb[0].mxu0 %v1397
      %v1621 = vpop.f32.mrb[0].mxu0
      %v1622 = vadd.f32 0.0, %v1621
      %v1623 = vpop.f32.mrb[0].mxu0
      %1624 = vmatprep.mubr.f32.mxu0 0.0
      %1625 = vmatmul.mubr.f32.gmra.mrb[0].mxu0 %v1400
      %v1626 = vpop.f32.mrb[0].mxu0
      %v1627 = vadd.f32 0.0, %v1626
      %v1628 = vpop.f32.mrb[0].mxu0
      %1629 = vdwg.mxu0
      %v1630 = vadd.f32 %v1362, %v1472
      %v1631 = vadd.f32 %v1363, %v1477
      %v1632 = vadd.f32 %v1364, %v1482
      %v1633 = vadd.f32 %v1365, %v1487
      %v1634 = vadd.f32 %v1366, %v1492
      %v1635 = vadd.f32 %v1367, %v1497
      %v1636 = vadd.f32 %v1368, %v1502
      %v1637 = vadd.f32 %v1369, %v1507
      %v1638 = vadd.f32 %v1370, %v1512
      %v1639 = vadd.f32 %v1371, %v1517
      %v1640 = vadd.f32 %v1372, %v1522
      %v1641 = vadd.f32 %v1373, %v1527
      %v1642 = vadd.f32 %v1374, %v1532
      %v1643 = vadd.f32 %v1375, %v1537
      %v1644 = vadd.f32 %v1376, %v1542
      %v1645 = vadd.f32 %v1377, %v1547
      %v1646 = vadd.f32 %v1378, %v1552
      %v1647 = vadd.f32 %v1379, %v1557
      %v1648 = vadd.f32 %v1380, %v1562
      %v1649 = vadd.f32 %v1381, %v1567
      %v1650 = vadd.f32 %v1382, %v1572
      %v1651 = vadd.f32 %v1383, %v1577
      %v1652 = vadd.f32 %v1384, %v1582
      %v1653 = vadd.f32 %v1385, %v1587
      %v1654 = vadd.f32 %v1386, %v1592
      %v1655 = vadd.f32 %v1387, %v1597
      %v1656 = vadd.f32 %v1388, %v1602
      %v1657 = vadd.f32 %v1389, %v1607
      %v1658 = vadd.f32 %v1390, %v1612
      %v1659 = vadd.f32 %v1391, %v1617
      %v1660 = vadd.f32 %v1392, %v1622
      %v1661 = vadd.f32 %v1393, %v1627
      %v1663 = vrot.slane %v263, 1
      %v1664 = vrot.slane %v264, 1
      %v1665 = vsel %vm318, %v1663, %v1664
      %v1666 = vrot.slane %v265, 1
      %v1667 = vsel %vm318, %v1664, %v1666
      %s1668 = scalar_lea.vmem %s1, 16
      %v1669 = vld [vmem:[%s1668] sm:$0xf]
      %v1670 = vsel %vm401, %v1665, 0
      %v1672 = vsel %vm401, %v1667, 0
      %v1675 = vsel %vm466, %v1669, 0
      %1677 = vmatprep.subr.mxu0 0.0
      %1678 = vmatpush1.msra.mxu0 %v1675
      %1679 = vmatprep.subr.mxu0 0.0
      %1680 = vmatpush1.msra.mxu0 0.0
      %1681 = vmatprep.subr.mxu0 0.0
      %1682 = vmatpush1.msra.mxu0 0.0
      %1683 = vmatprep.subr.mxu0 0.0
      %1684 = vmatpush1.msra.mxu0 0.0
      %1685 = vmatprep.subr.mxu0 0.0
      %1686 = vmatpush1.msra.mxu0 0.0
      %1687 = vmatprep.subr.mxu0 0.0
      %1688 = vmatpush1.msra.mxu0 0.0
      %1689 = vmatprep.subr.mxu0 0.0
      %1690 = vmatpush1.msra.mxu0 0.0
      %1691 = vmatprep.subr.mxu0 0.0
      %1692 = vmatpush1.msra.mxu0 0.0
      %1693 = vmatprep.subr.mxu0 0.0
      %1694 = vmatpush1.msra.mxu0 0.0
      %1695 = vmatprep.subr.mxu0 0.0
      %1696 = vmatpush1.msra.mxu0 0.0
      %1697 = vmatprep.subr.mxu0 0.0
      %1698 = vmatpush1.msra.mxu0 0.0
      %1699 = vmatprep.subr.mxu0 0.0
      %1700 = vmatpush1.msra.mxu0 0.0
      %1701 = vmatprep.subr.mxu0 0.0
      %1702 = vmatpush1.msra.mxu0 0.0
      %1703 = vmatprep.subr.mxu0 0.0
      %1704 = vmatpush1.msra.mxu0 0.0
      %1705 = vmatprep.subr.mxu0 0.0
      %1706 = vmatpush1.msra.mxu0 0.0
      %1707 = vmatprep.subr.mxu0 0.0
      %1708 = vmatpush1.msra.mxu0 0.0
      %1709 = vmatprep.subr.mxu0 0.0
      %1710 = vmatpush1.msra.mxu0 0.0
      %1711 = vmatprep.subr.mxu0 0.0
      %1712 = vmatpush1.msra.mxu0 0.0
      %1713 = vmatprep.subr.mxu0 0.0
      %1714 = vmatpush1.msra.mxu0 0.0
      %1715 = vmatprep.subr.mxu0 0.0
      %1716 = vmatpush1.msra.mxu0 0.0
      %1717 = vmatprep.subr.mxu0 0.0
      %1718 = vmatpush1.msra.mxu0 0.0
      %1719 = vmatprep.subr.mxu0 0.0
      %1720 = vmatpush1.msra.mxu0 0.0
      %1721 = vmatprep.subr.mxu0 0.0
      %1722 = vmatpush1.msra.mxu0 0.0
      %1723 = vmatprep.subr.mxu0 0.0
      %1724 = vmatpush1.msra.mxu0 0.0
      %1725 = vmatprep.subr.mxu0 0.0
      %1726 = vmatpush1.msra.mxu0 0.0
      %1727 = vmatprep.subr.mxu0 0.0
      %1728 = vmatpush1.msra.mxu0 0.0
      %1729 = vmatprep.subr.mxu0 0.0
      %1730 = vmatpush1.msra.mxu0 0.0
      %1731 = vmatprep.subr.mxu0 0.0
      %1732 = vmatpush1.msra.mxu0 0.0
      %1733 = vmatprep.subr.mxu0 0.0
      %1734 = vmatpush1.msra.mxu0 0.0
      %1735 = vmatprep.subr.mxu0 0.0
      %1736 = vmatpush1.msra.mxu0 0.0
      %1737 = vmatprep.subr.mxu0 0.0
      %1738 = vmatpush1.msra.mxu0 0.0
      %1739 = vmatprep.subr.mxu0 0.0
      %1740 = vmatpush1.msra.mxu0 0.0
      %1741 = vmatprep.mubr.f32.mxu0 0.0
      %1742 = vmatmul.mubr.f32.gmra.mrb[0].mxu0 %v406
      %v1743 = vpop.f32.mrb[0].mxu0
      %v1744 = vadd.f32 0.0, %v1743
      %v1745 = vpop.f32.mrb[0].mxu0
      %1746 = vmatprep.mubr.f32.mxu0 0.0
      %1747 = vmatmul.mubr.f32.gmra.mrb[0].mxu0 %v408
      %v1748 = vpop.f32.mrb[0].mxu0
      %v1749 = vadd.f32 0.0, %v1748
      %v1750 = vpop.f32.mrb[0].mxu0
      %1751 = vmatprep.mubr.f32.mxu0 0.0
      %1752 = vmatmul.mubr.f32.gmra.mrb[0].mxu0 %v410
      %v1753 = vpop.f32.mrb[0].mxu0
      %v1754 = vadd.f32 0.0, %v1753
      %v1755 = vpop.f32.mrb[0].mxu0
      %1756 = vmatprep.mubr.f32.mxu0 0.0
      %1757 = vmatmul.mubr.f32.gmra.mrb[0].mxu0 %v412
      %v1758 = vpop.f32.mrb[0].mxu0
      %v1759 = vadd.f32 0.0, %v1758
      %v1760 = vpop.f32.mrb[0].mxu0
      %1761 = vmatprep.mubr.f32.mxu0 0.0
      %1762 = vmatmul.mubr.f32.gmra.mrb[0].mxu0 %v414
      %v1763 = vpop.f32.mrb[0].mxu0
      %v1764 = vadd.f32 0.0, %v1763
      %v1765 = vpop.f32.mrb[0].mxu0
      %1766 = vmatprep.mubr.f32.mxu0 0.0
      %1767 = vmatmul.mubr.f32.gmra.mrb[0].mxu0 %v416
      %v1768 = vpop.f32.mrb[0].mxu0
      %v1769 = vadd.f32 0.0, %v1768
      %v1770 = vpop.f32.mrb[0].mxu0
      %1771 = vmatprep.mubr.f32.mxu0 0.0
      %1772 = vmatmul.mubr.f32.gmra.mrb[0].mxu0 %v418
      %v1773 = vpop.f32.mrb[0].mxu0
      %v1774 = vadd.f32 0.0, %v1773
      %v1775 = vpop.f32.mrb[0].mxu0
      %1776 = vmatprep.mubr.f32.mxu0 0.0
      %1777 = vmatmul.mubr.f32.gmra.mrb[0].mxu0 %v420
      %v1778 = vpop.f32.mrb[0].mxu0
      %v1779 = vadd.f32 0.0, %v1778
      %v1780 = vpop.f32.mrb[0].mxu0
      %1781 = vmatprep.mubr.f32.mxu0 0.0
      %1782 = vmatmul.mubr.f32.gmra.mrb[0].mxu0 %v422
      %v1783 = vpop.f32.mrb[0].mxu0
      %v1784 = vadd.f32 0.0, %v1783
      %v1785 = vpop.f32.mrb[0].mxu0
      %1786 = vmatprep.mubr.f32.mxu0 0.0
      %1787 = vmatmul.mubr.f32.gmra.mrb[0].mxu0 %v424
      %v1788 = vpop.f32.mrb[0].mxu0
      %v1789 = vadd.f32 0.0, %v1788
      %v1790 = vpop.f32.mrb[0].mxu0
      %1791 = vmatprep.mubr.f32.mxu0 0.0
      %1792 = vmatmul.mubr.f32.gmra.mrb[0].mxu0 %v426
      %v1793 = vpop.f32.mrb[0].mxu0
      %v1794 = vadd.f32 0.0, %v1793
      %v1795 = vpop.f32.mrb[0].mxu0
      %1796 = vmatprep.mubr.f32.mxu0 0.0
      %1797 = vmatmul.mubr.f32.gmra.mrb[0].mxu0 %v428
      %v1798 = vpop.f32.mrb[0].mxu0
      %v1799 = vadd.f32 0.0, %v1798
      %v1800 = vpop.f32.mrb[0].mxu0
      %1801 = vmatprep.mubr.f32.mxu0 0.0
      %1802 = vmatmul.mubr.f32.gmra.mrb[0].mxu0 %v430
      %v1803 = vpop.f32.mrb[0].mxu0
      %v1804 = vadd.f32 0.0, %v1803
      %v1805 = vpop.f32.mrb[0].mxu0
      %1806 = vmatprep.mubr.f32.mxu0 0.0
      %1807 = vmatmul.mubr.f32.gmra.mrb[0].mxu0 %v432
      %v1808 = vpop.f32.mrb[0].mxu0
      %v1809 = vadd.f32 0.0, %v1808
      %v1810 = vpop.f32.mrb[0].mxu0
      %1811 = vmatprep.mubr.f32.mxu0 0.0
      %1812 = vmatmul.mubr.f32.gmra.mrb[0].mxu0 %v434
      %v1813 = vpop.f32.mrb[0].mxu0
      %v1814 = vadd.f32 0.0, %v1813
      %v1815 = vpop.f32.mrb[0].mxu0
      %1816 = vmatprep.mubr.f32.mxu0 0.0
      %1817 = vmatmul.mubr.f32.gmra.mrb[0].mxu0 %v436
      %v1818 = vpop.f32.mrb[0].mxu0
      %v1819 = vadd.f32 0.0, %v1818
      %v1820 = vpop.f32.mrb[0].mxu0
      %1821 = vmatprep.mubr.f32.mxu0 0.0
      %1822 = vmatmul.mubr.f32.gmra.mrb[0].mxu0 %v438
      %v1823 = vpop.f32.mrb[0].mxu0
      %v1824 = vadd.f32 0.0, %v1823
      %v1825 = vpop.f32.mrb[0].mxu0
      %1826 = vmatprep.mubr.f32.mxu0 0.0
      %1827 = vmatmul.mubr.f32.gmra.mrb[0].mxu0 %v440
      %v1828 = vpop.f32.mrb[0].mxu0
      %v1829 = vadd.f32 0.0, %v1828
      %v1830 = vpop.f32.mrb[0].mxu0
      %1831 = vmatprep.mubr.f32.mxu0 0.0
      %1832 = vmatmul.mubr.f32.gmra.mrb[0].mxu0 %v442
      %v1833 = vpop.f32.mrb[0].mxu0
      %v1834 = vadd.f32 0.0, %v1833
      %v1835 = vpop.f32.mrb[0].mxu0
      %1836 = vmatprep.mubr.f32.mxu0 0.0
      %1837 = vmatmul.mubr.f32.gmra.mrb[0].mxu0 %v444
      %v1838 = vpop.f32.mrb[0].mxu0
      %v1839 = vadd.f32 0.0, %v1838
      %v1840 = vpop.f32.mrb[0].mxu0
      %1841 = vmatprep.mubr.f32.mxu0 0.0
      %1842 = vmatmul.mubr.f32.gmra.mrb[0].mxu0 %v446
      %v1843 = vpop.f32.mrb[0].mxu0
      %v1844 = vadd.f32 0.0, %v1843
      %v1845 = vpop.f32.mrb[0].mxu0
      %1846 = vmatprep.mubr.f32.mxu0 0.0
      %1847 = vmatmul.mubr.f32.gmra.mrb[0].mxu0 %v448
      %v1848 = vpop.f32.mrb[0].mxu0
      %v1849 = vadd.f32 0.0, %v1848
      %v1850 = vpop.f32.mrb[0].mxu0
      %1851 = vmatprep.mubr.f32.mxu0 0.0
      %1852 = vmatmul.mubr.f32.gmra.mrb[0].mxu0 %v450
      %v1853 = vpop.f32.mrb[0].mxu0
      %v1854 = vadd.f32 0.0, %v1853
      %v1855 = vpop.f32.mrb[0].mxu0
      %1856 = vmatprep.mubr.f32.mxu0 0.0
      %1857 = vmatmul.mubr.f32.gmra.mrb[0].mxu0 %v452
      %v1858 = vpop.f32.mrb[0].mxu0
      %v1859 = vadd.f32 0.0, %v1858
      %v1860 = vpop.f32.mrb[0].mxu0
      %1861 = vmatprep.mubr.f32.mxu0 0.0
      %1862 = vmatmul.mubr.f32.gmra.mrb[0].mxu0 %v454
      %v1863 = vpop.f32.mrb[0].mxu0
      %v1864 = vadd.f32 0.0, %v1863
      %v1865 = vpop.f32.mrb[0].mxu0
      %1866 = vmatprep.mubr.f32.mxu0 0.0
      %1867 = vmatmul.mubr.f32.gmra.mrb[0].mxu0 %v456
      %v1868 = vpop.f32.mrb[0].mxu0
      %v1869 = vadd.f32 0.0, %v1868
      %v1870 = vpop.f32.mrb[0].mxu0
      %1871 = vmatprep.mubr.f32.mxu0 0.0
      %1872 = vmatmul.mubr.f32.gmra.mrb[0].mxu0 %v458
      %v1873 = vpop.f32.mrb[0].mxu0
      %v1874 = vadd.f32 0.0, %v1873
      %v1875 = vpop.f32.mrb[0].mxu0
      %1876 = vmatprep.mubr.f32.mxu0 0.0
      %1877 = vmatmul.mubr.f32.gmra.mrb[0].mxu0 %v460
      %v1878 = vpop.f32.mrb[0].mxu0
      %v1879 = vadd.f32 0.0, %v1878
      %v1880 = vpop.f32.mrb[0].mxu0
      %1881 = vmatprep.mubr.f32.mxu0 0.0
      %1882 = vmatmul.mubr.f32.gmra.mrb[0].mxu0 %v462
      %v1883 = vpop.f32.mrb[0].mxu0
      %v1884 = vadd.f32 0.0, %v1883
      %v1885 = vpop.f32.mrb[0].mxu0
      %1886 = vmatprep.mubr.f32.mxu0 0.0
      %1887 = vmatmul.mubr.f32.gmra.mrb[0].mxu0 %v464
      %v1888 = vpop.f32.mrb[0].mxu0
      %v1889 = vadd.f32 0.0, %v1888
      %v1890 = vpop.f32.mrb[0].mxu0
      %1891 = vmatprep.mubr.f32.mxu0 0.0
      %1892 = vmatmul.mubr.f32.gmra.mrb[0].mxu0 %v1670
      %v1893 = vpop.f32.mrb[0].mxu0
      %v1894 = vadd.f32 0.0, %v1893
      %v1895 = vpop.f32.mrb[0].mxu0
      %1896 = vmatprep.mubr.f32.mxu0 0.0
      %1897 = vmatmul.mubr.f32.gmra.mrb[0].mxu0 %v1672
      %v1898 = vpop.f32.mrb[0].mxu0
      %v1899 = vadd.f32 0.0, %v1898
      %v1900 = vpop.f32.mrb[0].mxu0
      %1901 = vdwg.mxu0
      %v1902 = vadd.f32 %v1630, %v1744
      %v1903 = vadd.f32 %v1631, %v1749
      %v1904 = vadd.f32 %v1632, %v1754
      %v1905 = vadd.f32 %v1633, %v1759
      %v1906 = vadd.f32 %v1634, %v1764
      %v1907 = vadd.f32 %v1635, %v1769
      %v1908 = vadd.f32 %v1636, %v1774
      %v1909 = vadd.f32 %v1637, %v1779
      %v1910 = vadd.f32 %v1638, %v1784
      %v1911 = vadd.f32 %v1639, %v1789
      %v1912 = vadd.f32 %v1640, %v1794
      %v1913 = vadd.f32 %v1641, %v1799
      %v1914 = vadd.f32 %v1642, %v1804
      %v1915 = vadd.f32 %v1643, %v1809
      %v1916 = vadd.f32 %v1644, %v1814
      %v1917 = vadd.f32 %v1645, %v1819
      %v1918 = vadd.f32 %v1646, %v1824
      %v1919 = vadd.f32 %v1647, %v1829
      %v1920 = vadd.f32 %v1648, %v1834
      %v1921 = vadd.f32 %v1649, %v1839
      %v1922 = vadd.f32 %v1650, %v1844
      %v1923 = vadd.f32 %v1651, %v1849
      %v1924 = vadd.f32 %v1652, %v1854
      %v1925 = vadd.f32 %v1653, %v1859
      %v1926 = vadd.f32 %v1654, %v1864
      %v1927 = vadd.f32 %v1655, %v1869
      %v1928 = vadd.f32 %v1656, %v1874
      %v1929 = vadd.f32 %v1657, %v1879
      %v1930 = vadd.f32 %v1658, %v1884
      %v1931 = vadd.f32 %v1659, %v1889
      %v1932 = vadd.f32 %v1660, %v1894
      %v1933 = vadd.f32 %v1661, %v1899
      %v1934 = vrot.slane %v263, 2
      %v1935 = vrot.slane %v264, 2
      %v1936 = vsel %vm987, %v1934, %v1935
      %v1937 = vrot.slane %v265, 2
      %v1938 = vsel %vm987, %v1935, %v1937
      %s1939 = scalar_lea.vmem %s1, 20
      %v1940 = vld [vmem:[%s1939] sm:$0xf]
      %v1941 = vsel %vm401, %v1936, 0
      %v1943 = vsel %vm401, %v1938, 0
      %v1946 = vsel %vm466, %v1940, 0
      %1948 = vmatprep.subr.mxu0 0.0
      %1949 = vmatpush1.msra.mxu0 %v1946
      %1950 = vmatprep.subr.mxu0 0.0
      %1951 = vmatpush1.msra.mxu0 0.0
      %1952 = vmatprep.subr.mxu0 0.0
      %1953 = vmatpush1.msra.mxu0 0.0
      %1954 = vmatprep.subr.mxu0 0.0
      %1955 = vmatpush1.msra.mxu0 0.0
      %1956 = vmatprep.subr.mxu0 0.0
      %1957 = vmatpush1.msra.mxu0 0.0
      %1958 = vmatprep.subr.mxu0 0.0
      %1959 = vmatpush1.msra.mxu0 0.0
      %1960 = vmatprep.subr.mxu0 0.0
      %1961 = vmatpush1.msra.mxu0 0.0
      %1962 = vmatprep.subr.mxu0 0.0
      %1963 = vmatpush1.msra.mxu0 0.0
      %1964 = vmatprep.subr.mxu0 0.0
      %1965 = vmatpush1.msra.mxu0 0.0
      %1966 = vmatprep.subr.mxu0 0.0
      %1967 = vmatpush1.msra.mxu0 0.0
      %1968 = vmatprep.subr.mxu0 0.0
      %1969 = vmatpush1.msra.mxu0 0.0
      %1970 = vmatprep.subr.mxu0 0.0
      %1971 = vmatpush1.msra.mxu0 0.0
      %1972 = vmatprep.subr.mxu0 0.0
      %1973 = vmatpush1.msra.mxu0 0.0
      %1974 = vmatprep.subr.mxu0 0.0
      %1975 = vmatpush1.msra.mxu0 0.0
      %1976 = vmatprep.subr.mxu0 0.0
      %1977 = vmatpush1.msra.mxu0 0.0
      %1978 = vmatprep.subr.mxu0 0.0
      %1979 = vmatpush1.msra.mxu0 0.0
      %1980 = vmatprep.subr.mxu0 0.0
      %1981 = vmatpush1.msra.mxu0 0.0
      %1982 = vmatprep.subr.mxu0 0.0
      %1983 = vmatpush1.msra.mxu0 0.0
      %1984 = vmatprep.subr.mxu0 0.0
      %1985 = vmatpush1.msra.mxu0 0.0
      %1986 = vmatprep.subr.mxu0 0.0
      %1987 = vmatpush1.msra.mxu0 0.0
      %1988 = vmatprep.subr.mxu0 0.0
      %1989 = vmatpush1.msra.mxu0 0.0
      %1990 = vmatprep.subr.mxu0 0.0
      %1991 = vmatpush1.msra.mxu0 0.0
      %1992 = vmatprep.subr.mxu0 0.0
      %1993 = vmatpush1.msra.mxu0 0.0
      %1994 = vmatprep.subr.mxu0 0.0
      %1995 = vmatpush1.msra.mxu0 0.0
      %1996 = vmatprep.subr.mxu0 0.0
      %1997 = vmatpush1.msra.mxu0 0.0
      %1998 = vmatprep.subr.mxu0 0.0
      %1999 = vmatpush1.msra.mxu0 0.0
      %2000 = vmatprep.subr.mxu0 0.0
      %2001 = vmatpush1.msra.mxu0 0.0
      %2002 = vmatprep.subr.mxu0 0.0
      %2003 = vmatpush1.msra.mxu0 0.0
      %2004 = vmatprep.subr.mxu0 0.0
      %2005 = vmatpush1.msra.mxu0 0.0
      %2006 = vmatprep.subr.mxu0 0.0
      %2007 = vmatpush1.msra.mxu0 0.0
      %2008 = vmatprep.subr.mxu0 0.0
      %2009 = vmatpush1.msra.mxu0 0.0
      %2010 = vmatprep.subr.mxu0 0.0
      %2011 = vmatpush1.msra.mxu0 0.0
      %2012 = vmatprep.mubr.f32.mxu0 0.0
      %2013 = vmatmul.mubr.f32.gmra.mrb[0].mxu0 %v1074
      %v2014 = vpop.f32.mrb[0].mxu0
      %v2015 = vadd.f32 0.0, %v2014
      %v2016 = vpop.f32.mrb[0].mxu0
      %2017 = vmatprep.mubr.f32.mxu0 0.0
      %2018 = vmatmul.mubr.f32.gmra.mrb[0].mxu0 %v1076
      %v2019 = vpop.f32.mrb[0].mxu0
      %v2020 = vadd.f32 0.0, %v2019
      %v2021 = vpop.f32.mrb[0].mxu0
      %2022 = vmatprep.mubr.f32.mxu0 0.0
      %2023 = vmatmul.mubr.f32.gmra.mrb[0].mxu0 %v1078
      %v2024 = vpop.f32.mrb[0].mxu0
      %v2025 = vadd.f32 0.0, %v2024
      %v2026 = vpop.f32.mrb[0].mxu0
      %2027 = vmatprep.mubr.f32.mxu0 0.0
      %2028 = vmatmul.mubr.f32.gmra.mrb[0].mxu0 %v1080
      %v2029 = vpop.f32.mrb[0].mxu0
      %v2030 = vadd.f32 0.0, %v2029
      %v2031 = vpop.f32.mrb[0].mxu0
      %2032 = vmatprep.mubr.f32.mxu0 0.0
      %2033 = vmatmul.mubr.f32.gmra.mrb[0].mxu0 %v1082
      %v2034 = vpop.f32.mrb[0].mxu0
      %v2035 = vadd.f32 0.0, %v2034
      %v2036 = vpop.f32.mrb[0].mxu0
      %2037 = vmatprep.mubr.f32.mxu0 0.0
      %2038 = vmatmul.mubr.f32.gmra.mrb[0].mxu0 %v1084
      %v2039 = vpop.f32.mrb[0].mxu0
      %v2040 = vadd.f32 0.0, %v2039
      %v2041 = vpop.f32.mrb[0].mxu0
      %2042 = vmatprep.mubr.f32.mxu0 0.0
      %2043 = vmatmul.mubr.f32.gmra.mrb[0].mxu0 %v1086
      %v2044 = vpop.f32.mrb[0].mxu0
      %v2045 = vadd.f32 0.0, %v2044
      %v2046 = vpop.f32.mrb[0].mxu0
      %2047 = vmatprep.mubr.f32.mxu0 0.0
      %2048 = vmatmul.mubr.f32.gmra.mrb[0].mxu0 %v1088
      %v2049 = vpop.f32.mrb[0].mxu0
      %v2050 = vadd.f32 0.0, %v2049
      %v2051 = vpop.f32.mrb[0].mxu0
      %2052 = vmatprep.mubr.f32.mxu0 0.0
      %2053 = vmatmul.mubr.f32.gmra.mrb[0].mxu0 %v1090
      %v2054 = vpop.f32.mrb[0].mxu0
      %v2055 = vadd.f32 0.0, %v2054
      %v2056 = vpop.f32.mrb[0].mxu0
      %2057 = vmatprep.mubr.f32.mxu0 0.0
      %2058 = vmatmul.mubr.f32.gmra.mrb[0].mxu0 %v1092
      %v2059 = vpop.f32.mrb[0].mxu0
      %v2060 = vadd.f32 0.0, %v2059
      %v2061 = vpop.f32.mrb[0].mxu0
      %2062 = vmatprep.mubr.f32.mxu0 0.0
      %2063 = vmatmul.mubr.f32.gmra.mrb[0].mxu0 %v1094
      %v2064 = vpop.f32.mrb[0].mxu0
      %v2065 = vadd.f32 0.0, %v2064
      %v2066 = vpop.f32.mrb[0].mxu0
      %2067 = vmatprep.mubr.f32.mxu0 0.0
      %2068 = vmatmul.mubr.f32.gmra.mrb[0].mxu0 %v1096
      %v2069 = vpop.f32.mrb[0].mxu0
      %v2070 = vadd.f32 0.0, %v2069
      %v2071 = vpop.f32.mrb[0].mxu0
      %2072 = vmatprep.mubr.f32.mxu0 0.0
      %2073 = vmatmul.mubr.f32.gmra.mrb[0].mxu0 %v1098
      %v2074 = vpop.f32.mrb[0].mxu0
      %v2075 = vadd.f32 0.0, %v2074
      %v2076 = vpop.f32.mrb[0].mxu0
      %2077 = vmatprep.mubr.f32.mxu0 0.0
      %2078 = vmatmul.mubr.f32.gmra.mrb[0].mxu0 %v1100
      %v2079 = vpop.f32.mrb[0].mxu0
      %v2080 = vadd.f32 0.0, %v2079
      %v2081 = vpop.f32.mrb[0].mxu0
      %2082 = vmatprep.mubr.f32.mxu0 0.0
      %2083 = vmatmul.mubr.f32.gmra.mrb[0].mxu0 %v1102
      %v2084 = vpop.f32.mrb[0].mxu0
      %v2085 = vadd.f32 0.0, %v2084
      %v2086 = vpop.f32.mrb[0].mxu0
      %2087 = vmatprep.mubr.f32.mxu0 0.0
      %2088 = vmatmul.mubr.f32.gmra.mrb[0].mxu0 %v1104
      %v2089 = vpop.f32.mrb[0].mxu0
      %v2090 = vadd.f32 0.0, %v2089
      %v2091 = vpop.f32.mrb[0].mxu0
      %2092 = vmatprep.mubr.f32.mxu0 0.0
      %2093 = vmatmul.mubr.f32.gmra.mrb[0].mxu0 %v1106
      %v2094 = vpop.f32.mrb[0].mxu0
      %v2095 = vadd.f32 0.0, %v2094
      %v2096 = vpop.f32.mrb[0].mxu0
      %2097 = vmatprep.mubr.f32.mxu0 0.0
      %2098 = vmatmul.mubr.f32.gmra.mrb[0].mxu0 %v1108
      %v2099 = vpop.f32.mrb[0].mxu0
      %v2100 = vadd.f32 0.0, %v2099
      %v2101 = vpop.f32.mrb[0].mxu0
      %2102 = vmatprep.mubr.f32.mxu0 0.0
      %2103 = vmatmul.mubr.f32.gmra.mrb[0].mxu0 %v1110
      %v2104 = vpop.f32.mrb[0].mxu0
      %v2105 = vadd.f32 0.0, %v2104
      %v2106 = vpop.f32.mrb[0].mxu0
      %2107 = vmatprep.mubr.f32.mxu0 0.0
      %2108 = vmatmul.mubr.f32.gmra.mrb[0].mxu0 %v1112
      %v2109 = vpop.f32.mrb[0].mxu0
      %v2110 = vadd.f32 0.0, %v2109
      %v2111 = vpop.f32.mrb[0].mxu0
      %2112 = vmatprep.mubr.f32.mxu0 0.0
      %2113 = vmatmul.mubr.f32.gmra.mrb[0].mxu0 %v1114
      %v2114 = vpop.f32.mrb[0].mxu0
      %v2115 = vadd.f32 0.0, %v2114
      %v2116 = vpop.f32.mrb[0].mxu0
      %2117 = vmatprep.mubr.f32.mxu0 0.0
      %2118 = vmatmul.mubr.f32.gmra.mrb[0].mxu0 %v1116
      %v2119 = vpop.f32.mrb[0].mxu0
      %v2120 = vadd.f32 0.0, %v2119
      %v2121 = vpop.f32.mrb[0].mxu0
      %2122 = vmatprep.mubr.f32.mxu0 0.0
      %2123 = vmatmul.mubr.f32.gmra.mrb[0].mxu0 %v1118
      %v2124 = vpop.f32.mrb[0].mxu0
      %v2125 = vadd.f32 0.0, %v2124
      %v2126 = vpop.f32.mrb[0].mxu0
      %2127 = vmatprep.mubr.f32.mxu0 0.0
      %2128 = vmatmul.mubr.f32.gmra.mrb[0].mxu0 %v1120
      %v2129 = vpop.f32.mrb[0].mxu0
      %v2130 = vadd.f32 0.0, %v2129
      %v2131 = vpop.f32.mrb[0].mxu0
      %2132 = vmatprep.mubr.f32.mxu0 0.0
      %2133 = vmatmul.mubr.f32.gmra.mrb[0].mxu0 %v1122
      %v2134 = vpop.f32.mrb[0].mxu0
      %v2135 = vadd.f32 0.0, %v2134
      %v2136 = vpop.f32.mrb[0].mxu0
      %2137 = vmatprep.mubr.f32.mxu0 0.0
      %2138 = vmatmul.mubr.f32.gmra.mrb[0].mxu0 %v1124
      %v2139 = vpop.f32.mrb[0].mxu0
      %v2140 = vadd.f32 0.0, %v2139
      %v2141 = vpop.f32.mrb[0].mxu0
      %2142 = vmatprep.mubr.f32.mxu0 0.0
      %2143 = vmatmul.mubr.f32.gmra.mrb[0].mxu0 %v1126
      %v2144 = vpop.f32.mrb[0].mxu0
      %v2145 = vadd.f32 0.0, %v2144
      %v2146 = vpop.f32.mrb[0].mxu0
      %2147 = vmatprep.mubr.f32.mxu0 0.0
      %2148 = vmatmul.mubr.f32.gmra.mrb[0].mxu0 %v1128
      %v2149 = vpop.f32.mrb[0].mxu0
      %v2150 = vadd.f32 0.0, %v2149
      %v2151 = vpop.f32.mrb[0].mxu0
      %2152 = vmatprep.mubr.f32.mxu0 0.0
      %2153 = vmatmul.mubr.f32.gmra.mrb[0].mxu0 %v1130
      %v2154 = vpop.f32.mrb[0].mxu0
      %v2155 = vadd.f32 0.0, %v2154
      %v2156 = vpop.f32.mrb[0].mxu0
      %2157 = vmatprep.mubr.f32.mxu0 0.0
      %2158 = vmatmul.mubr.f32.gmra.mrb[0].mxu0 %v1132
      %v2159 = vpop.f32.mrb[0].mxu0
      %v2160 = vadd.f32 0.0, %v2159
      %v2161 = vpop.f32.mrb[0].mxu0
      %2162 = vmatprep.mubr.f32.mxu0 0.0
      %2163 = vmatmul.mubr.f32.gmra.mrb[0].mxu0 %v1941
      %v2164 = vpop.f32.mrb[0].mxu0
      %v2165 = vadd.f32 0.0, %v2164
      %v2166 = vpop.f32.mrb[0].mxu0
      %2167 = vmatprep.mubr.f32.mxu0 0.0
      %2168 = vmatmul.mubr.f32.gmra.mrb[0].mxu0 %v1943
      %v2169 = vpop.f32.mrb[0].mxu0
      %v2170 = vadd.f32 0.0, %v2169
      %v2171 = vpop.f32.mrb[0].mxu0
      %2172 = vdwg.mxu0
      %v2173 = vadd.f32 %v1902, %v2015
      %v2174 = vadd.f32 %v1903, %v2020
      %v2175 = vadd.f32 %v1904, %v2025
      %v2176 = vadd.f32 %v1905, %v2030
      %v2177 = vadd.f32 %v1906, %v2035
      %v2178 = vadd.f32 %v1907, %v2040
      %v2179 = vadd.f32 %v1908, %v2045
      %v2180 = vadd.f32 %v1909, %v2050
      %v2181 = vadd.f32 %v1910, %v2055
      %v2182 = vadd.f32 %v1911, %v2060
      %v2183 = vadd.f32 %v1912, %v2065
      %v2184 = vadd.f32 %v1913, %v2070
      %v2185 = vadd.f32 %v1914, %v2075
      %v2186 = vadd.f32 %v1915, %v2080
      %v2187 = vadd.f32 %v1916, %v2085
      %v2188 = vadd.f32 %v1917, %v2090
      %v2189 = vadd.f32 %v1918, %v2095
      %v2190 = vadd.f32 %v1919, %v2100
      %v2191 = vadd.f32 %v1920, %v2105
      %v2192 = vadd.f32 %v1921, %v2110
      %v2193 = vadd.f32 %v1922, %v2115
      %v2194 = vadd.f32 %v1923, %v2120
      %v2195 = vadd.f32 %v1924, %v2125
      %v2196 = vadd.f32 %v1925, %v2130
      %v2197 = vadd.f32 %v1926, %v2135
      %v2198 = vadd.f32 %v1927, %v2140
      %v2199 = vadd.f32 %v1928, %v2145
      %v2200 = vadd.f32 %v1929, %v2150
      %v2201 = vadd.f32 %v1930, %v2155
      %v2202 = vadd.f32 %v1931, %v2160
      %v2203 = vadd.f32 %v1932, %v2165
      %v2204 = vadd.f32 %v1933, %v2170
      %s2205 = scalar_lea.vmem %s1, 24
      %v2206 = vld [vmem:[%s2205] sm:$0xf]
      %v2208 = vsel %vm401, %v266, 0
      %v2211 = vsel %vm401, %v267, 0
      %v2214 = vsel %vm466, %v2206, 0
      %2216 = vmatprep.subr.mxu0 0.0
      %2217 = vmatpush1.msra.mxu0 %v2214
      %2218 = vmatprep.subr.mxu0 0.0
      %2219 = vmatpush1.msra.mxu0 0.0
      %2220 = vmatprep.subr.mxu0 0.0
      %2221 = vmatpush1.msra.mxu0 0.0
      %2222 = vmatprep.subr.mxu0 0.0
      %2223 = vmatpush1.msra.mxu0 0.0
      %2224 = vmatprep.subr.mxu0 0.0
      %2225 = vmatpush1.msra.mxu0 0.0
      %2226 = vmatprep.subr.mxu0 0.0
      %2227 = vmatpush1.msra.mxu0 0.0
      %2228 = vmatprep.subr.mxu0 0.0
      %2229 = vmatpush1.msra.mxu0 0.0
      %2230 = vmatprep.subr.mxu0 0.0
      %2231 = vmatpush1.msra.mxu0 0.0
      %2232 = vmatprep.subr.mxu0 0.0
      %2233 = vmatpush1.msra.mxu0 0.0
      %2234 = vmatprep.subr.mxu0 0.0
      %2235 = vmatpush1.msra.mxu0 0.0
      %2236 = vmatprep.subr.mxu0 0.0
      %2237 = vmatpush1.msra.mxu0 0.0
      %2238 = vmatprep.subr.mxu0 0.0
      %2239 = vmatpush1.msra.mxu0 0.0
      %2240 = vmatprep.subr.mxu0 0.0
      %2241 = vmatpush1.msra.mxu0 0.0
      %2242 = vmatprep.subr.mxu0 0.0
      %2243 = vmatpush1.msra.mxu0 0.0
      %2244 = vmatprep.subr.mxu0 0.0
      %2245 = vmatpush1.msra.mxu0 0.0
      %2246 = vmatprep.subr.mxu0 0.0
      %2247 = vmatpush1.msra.mxu0 0.0
      %2248 = vmatprep.subr.mxu0 0.0
      %2249 = vmatpush1.msra.mxu0 0.0
      %2250 = vmatprep.subr.mxu0 0.0
      %2251 = vmatpush1.msra.mxu0 0.0
      %2252 = vmatprep.subr.mxu0 0.0
      %2253 = vmatpush1.msra.mxu0 0.0
      %2254 = vmatprep.subr.mxu0 0.0
      %2255 = vmatpush1.msra.mxu0 0.0
      %2256 = vmatprep.subr.mxu0 0.0
      %2257 = vmatpush1.msra.mxu0 0.0
      %2258 = vmatprep.subr.mxu0 0.0
      %2259 = vmatpush1.msra.mxu0 0.0
      %2260 = vmatprep.subr.mxu0 0.0
      %2261 = vmatpush1.msra.mxu0 0.0
      %2262 = vmatprep.subr.mxu0 0.0
      %2263 = vmatpush1.msra.mxu0 0.0
      %2264 = vmatprep.subr.mxu0 0.0
      %2265 = vmatpush1.msra.mxu0 0.0
      %2266 = vmatprep.subr.mxu0 0.0
      %2267 = vmatpush1.msra.mxu0 0.0
      %2268 = vmatprep.subr.mxu0 0.0
      %2269 = vmatpush1.msra.mxu0 0.0
      %2270 = vmatprep.subr.mxu0 0.0
      %2271 = vmatpush1.msra.mxu0 0.0
      %2272 = vmatprep.subr.mxu0 0.0
      %2273 = vmatpush1.msra.mxu0 0.0
      %2274 = vmatprep.subr.mxu0 0.0
      %2275 = vmatpush1.msra.mxu0 0.0
      %2276 = vmatprep.subr.mxu0 0.0
      %2277 = vmatpush1.msra.mxu0 0.0
      %2278 = vmatprep.subr.mxu0 0.0
      %2279 = vmatpush1.msra.mxu0 0.0
      %2280 = vmatprep.mubr.f32.mxu0 0.0
      %2281 = vmatmul.mubr.f32.gmra.mrb[0].mxu0 %v703
      %v2282 = vpop.f32.mrb[0].mxu0
      %v2283 = vadd.f32 0.0, %v2282
      %v2284 = vpop.f32.mrb[0].mxu0
      %2285 = vmatprep.mubr.f32.mxu0 0.0
      %2286 = vmatmul.mubr.f32.gmra.mrb[0].mxu0 %v705
      %v2287 = vpop.f32.mrb[0].mxu0
      %v2288 = vadd.f32 0.0, %v2287
      %v2289 = vpop.f32.mrb[0].mxu0
      %2290 = vmatprep.mubr.f32.mxu0 0.0
      %2291 = vmatmul.mubr.f32.gmra.mrb[0].mxu0 %v707
      %v2292 = vpop.f32.mrb[0].mxu0
      %v2293 = vadd.f32 0.0, %v2292
      %v2294 = vpop.f32.mrb[0].mxu0
      %2295 = vmatprep.mubr.f32.mxu0 0.0
      %2296 = vmatmul.mubr.f32.gmra.mrb[0].mxu0 %v709
      %v2297 = vpop.f32.mrb[0].mxu0
      %v2298 = vadd.f32 0.0, %v2297
      %v2299 = vpop.f32.mrb[0].mxu0
      %2300 = vmatprep.mubr.f32.mxu0 0.0
      %2301 = vmatmul.mubr.f32.gmra.mrb[0].mxu0 %v711
      %v2302 = vpop.f32.mrb[0].mxu0
      %v2303 = vadd.f32 0.0, %v2302
      %v2304 = vpop.f32.mrb[0].mxu0
      %2305 = vmatprep.mubr.f32.mxu0 0.0
      %2306 = vmatmul.mubr.f32.gmra.mrb[0].mxu0 %v713
      %v2307 = vpop.f32.mrb[0].mxu0
      %v2308 = vadd.f32 0.0, %v2307
      %v2309 = vpop.f32.mrb[0].mxu0
      %2310 = vmatprep.mubr.f32.mxu0 0.0
      %2311 = vmatmul.mubr.f32.gmra.mrb[0].mxu0 %v715
      %v2312 = vpop.f32.mrb[0].mxu0
      %v2313 = vadd.f32 0.0, %v2312
      %v2314 = vpop.f32.mrb[0].mxu0
      %2315 = vmatprep.mubr.f32.mxu0 0.0
      %2316 = vmatmul.mubr.f32.gmra.mrb[0].mxu0 %v717
      %v2317 = vpop.f32.mrb[0].mxu0
      %v2318 = vadd.f32 0.0, %v2317
      %v2319 = vpop.f32.mrb[0].mxu0
      %2320 = vmatprep.mubr.f32.mxu0 0.0
      %2321 = vmatmul.mubr.f32.gmra.mrb[0].mxu0 %v719
      %v2322 = vpop.f32.mrb[0].mxu0
      %v2323 = vadd.f32 0.0, %v2322
      %v2324 = vpop.f32.mrb[0].mxu0
      %2325 = vmatprep.mubr.f32.mxu0 0.0
      %2326 = vmatmul.mubr.f32.gmra.mrb[0].mxu0 %v721
      %v2327 = vpop.f32.mrb[0].mxu0
      %v2328 = vadd.f32 0.0, %v2327
      %v2329 = vpop.f32.mrb[0].mxu0
      %2330 = vmatprep.mubr.f32.mxu0 0.0
      %2331 = vmatmul.mubr.f32.gmra.mrb[0].mxu0 %v723
      %v2332 = vpop.f32.mrb[0].mxu0
      %v2333 = vadd.f32 0.0, %v2332
      %v2334 = vpop.f32.mrb[0].mxu0
      %2335 = vmatprep.mubr.f32.mxu0 0.0
      %2336 = vmatmul.mubr.f32.gmra.mrb[0].mxu0 %v725
      %v2337 = vpop.f32.mrb[0].mxu0
      %v2338 = vadd.f32 0.0, %v2337
      %v2339 = vpop.f32.mrb[0].mxu0
      %2340 = vmatprep.mubr.f32.mxu0 0.0
      %2341 = vmatmul.mubr.f32.gmra.mrb[0].mxu0 %v727
      %v2342 = vpop.f32.mrb[0].mxu0
      %v2343 = vadd.f32 0.0, %v2342
      %v2344 = vpop.f32.mrb[0].mxu0
      %2345 = vmatprep.mubr.f32.mxu0 0.0
      %2346 = vmatmul.mubr.f32.gmra.mrb[0].mxu0 %v729
      %v2347 = vpop.f32.mrb[0].mxu0
      %v2348 = vadd.f32 0.0, %v2347
      %v2349 = vpop.f32.mrb[0].mxu0
      %2350 = vmatprep.mubr.f32.mxu0 0.0
      %2351 = vmatmul.mubr.f32.gmra.mrb[0].mxu0 %v731
      %v2352 = vpop.f32.mrb[0].mxu0
      %v2353 = vadd.f32 0.0, %v2352
      %v2354 = vpop.f32.mrb[0].mxu0
      %2355 = vmatprep.mubr.f32.mxu0 0.0
      %2356 = vmatmul.mubr.f32.gmra.mrb[0].mxu0 %v733
      %v2357 = vpop.f32.mrb[0].mxu0
      %v2358 = vadd.f32 0.0, %v2357
      %v2359 = vpop.f32.mrb[0].mxu0
      %2360 = vmatprep.mubr.f32.mxu0 0.0
      %2361 = vmatmul.mubr.f32.gmra.mrb[0].mxu0 %v735
      %v2362 = vpop.f32.mrb[0].mxu0
      %v2363 = vadd.f32 0.0, %v2362
      %v2364 = vpop.f32.mrb[0].mxu0
      %2365 = vmatprep.mubr.f32.mxu0 0.0
      %2366 = vmatmul.mubr.f32.gmra.mrb[0].mxu0 %v737
      %v2367 = vpop.f32.mrb[0].mxu0
      %v2368 = vadd.f32 0.0, %v2367
      %v2369 = vpop.f32.mrb[0].mxu0
      %2370 = vmatprep.mubr.f32.mxu0 0.0
      %2371 = vmatmul.mubr.f32.gmra.mrb[0].mxu0 %v739
      %v2372 = vpop.f32.mrb[0].mxu0
      %v2373 = vadd.f32 0.0, %v2372
      %v2374 = vpop.f32.mrb[0].mxu0
      %2375 = vmatprep.mubr.f32.mxu0 0.0
      %2376 = vmatmul.mubr.f32.gmra.mrb[0].mxu0 %v741
      %v2377 = vpop.f32.mrb[0].mxu0
      %v2378 = vadd.f32 0.0, %v2377
      %v2379 = vpop.f32.mrb[0].mxu0
      %2380 = vmatprep.mubr.f32.mxu0 0.0
      %2381 = vmatmul.mubr.f32.gmra.mrb[0].mxu0 %v743
      %v2382 = vpop.f32.mrb[0].mxu0
      %v2383 = vadd.f32 0.0, %v2382
      %v2384 = vpop.f32.mrb[0].mxu0
      %2385 = vmatprep.mubr.f32.mxu0 0.0
      %2386 = vmatmul.mubr.f32.gmra.mrb[0].mxu0 %v745
      %v2387 = vpop.f32.mrb[0].mxu0
      %v2388 = vadd.f32 0.0, %v2387
      %v2389 = vpop.f32.mrb[0].mxu0
      %2390 = vmatprep.mubr.f32.mxu0 0.0
      %2391 = vmatmul.mubr.f32.gmra.mrb[0].mxu0 %v747
      %v2392 = vpop.f32.mrb[0].mxu0
      %v2393 = vadd.f32 0.0, %v2392
      %v2394 = vpop.f32.mrb[0].mxu0
      %2395 = vmatprep.mubr.f32.mxu0 0.0
      %2396 = vmatmul.mubr.f32.gmra.mrb[0].mxu0 %v749
      %v2397 = vpop.f32.mrb[0].mxu0
      %v2398 = vadd.f32 0.0, %v2397
      %v2399 = vpop.f32.mrb[0].mxu0
      %2400 = vmatprep.mubr.f32.mxu0 0.0
      %2401 = vmatmul.mubr.f32.gmra.mrb[0].mxu0 %v751
      %v2402 = vpop.f32.mrb[0].mxu0
      %v2403 = vadd.f32 0.0, %v2402
      %v2404 = vpop.f32.mrb[0].mxu0
      %2405 = vmatprep.mubr.f32.mxu0 0.0
      %2406 = vmatmul.mubr.f32.gmra.mrb[0].mxu0 %v753
      %v2407 = vpop.f32.mrb[0].mxu0
      %v2408 = vadd.f32 0.0, %v2407
      %v2409 = vpop.f32.mrb[0].mxu0
      %2410 = vmatprep.mubr.f32.mxu0 0.0
      %2411 = vmatmul.mubr.f32.gmra.mrb[0].mxu0 %v755
      %v2412 = vpop.f32.mrb[0].mxu0
      %v2413 = vadd.f32 0.0, %v2412
      %v2414 = vpop.f32.mrb[0].mxu0
      %2415 = vmatprep.mubr.f32.mxu0 0.0
      %2416 = vmatmul.mubr.f32.gmra.mrb[0].mxu0 %v757
      %v2417 = vpop.f32.mrb[0].mxu0
      %v2418 = vadd.f32 0.0, %v2417
      %v2419 = vpop.f32.mrb[0].mxu0
      %2420 = vmatprep.mubr.f32.mxu0 0.0
      %2421 = vmatmul.mubr.f32.gmra.mrb[0].mxu0 %v1397
      %v2422 = vpop.f32.mrb[0].mxu0
      %v2423 = vadd.f32 0.0, %v2422
      %v2424 = vpop.f32.mrb[0].mxu0
      %2425 = vmatprep.mubr.f32.mxu0 0.0
      %2426 = vmatmul.mubr.f32.gmra.mrb[0].mxu0 %v1400
      %v2427 = vpop.f32.mrb[0].mxu0
      %v2428 = vadd.f32 0.0, %v2427
      %v2429 = vpop.f32.mrb[0].mxu0
      %2430 = vmatprep.mubr.f32.mxu0 0.0
      %2431 = vmatmul.mubr.f32.gmra.mrb[0].mxu0 %v2208
      %v2432 = vpop.f32.mrb[0].mxu0
      %v2433 = vadd.f32 0.0, %v2432
      %v2434 = vpop.f32.mrb[0].mxu0
      %2435 = vmatprep.mubr.f32.mxu0 0.0
      %2436 = vmatmul.mubr.f32.gmra.mrb[0].mxu0 %v2211
      %v2437 = vpop.f32.mrb[0].mxu0
      %v2438 = vadd.f32 0.0, %v2437
      %v2439 = vpop.f32.mrb[0].mxu0
      %2440 = vdwg.mxu0
      %v2441 = vadd.f32 %v2173, %v2283
      %v2442 = vadd.f32 %v2174, %v2288
      %v2443 = vadd.f32 %v2175, %v2293
      %v2444 = vadd.f32 %v2176, %v2298
      %v2445 = vadd.f32 %v2177, %v2303
      %v2446 = vadd.f32 %v2178, %v2308
      %v2447 = vadd.f32 %v2179, %v2313
      %v2448 = vadd.f32 %v2180, %v2318
      %v2449 = vadd.f32 %v2181, %v2323
      %v2450 = vadd.f32 %v2182, %v2328
      %v2451 = vadd.f32 %v2183, %v2333
      %v2452 = vadd.f32 %v2184, %v2338
      %v2453 = vadd.f32 %v2185, %v2343
      %v2454 = vadd.f32 %v2186, %v2348
      %v2455 = vadd.f32 %v2187, %v2353
      %v2456 = vadd.f32 %v2188, %v2358
      %v2457 = vadd.f32 %v2189, %v2363
      %v2458 = vadd.f32 %v2190, %v2368
      %v2459 = vadd.f32 %v2191, %v2373
      %v2460 = vadd.f32 %v2192, %v2378
      %v2461 = vadd.f32 %v2193, %v2383
      %v2462 = vadd.f32 %v2194, %v2388
      %v2463 = vadd.f32 %v2195, %v2393
      %v2464 = vadd.f32 %v2196, %v2398
      %v2465 = vadd.f32 %v2197, %v2403
      %v2466 = vadd.f32 %v2198, %v2408
      %v2467 = vadd.f32 %v2199, %v2413
      %v2468 = vadd.f32 %v2200, %v2418
      %v2469 = vadd.f32 %v2201, %v2423
      %v2470 = vadd.f32 %v2202, %v2428
      %v2471 = vadd.f32 %v2203, %v2433
      %v2472 = vadd.f32 %v2204, %v2438
      %v2474 = vrot.slane %v266, 1
      %v2475 = vrot.slane %v267, 1
      %v2476 = vsel %vm318, %v2474, %v2475
      %v2477 = vrot.slane %v268, 1
      %v2478 = vsel %vm318, %v2475, %v2477
      %s2479 = scalar_lea.vmem %s1, 28
      %v2480 = vld [vmem:[%s2479] sm:$0xf]
      %v2481 = vsel %vm401, %v2476, 0
      %v2483 = vsel %vm401, %v2478, 0
      %v2486 = vsel %vm466, %v2480, 0
      %2488 = vmatprep.subr.mxu0 0.0
      %2489 = vmatpush1.msra.mxu0 %v2486
      %2490 = vmatprep.subr.mxu0 0.0
      %2491 = vmatpush1.msra.mxu0 0.0
      %2492 = vmatprep.subr.mxu0 0.0
      %2493 = vmatpush1.msra.mxu0 0.0
      %2494 = vmatprep.subr.mxu0 0.0
      %2495 = vmatpush1.msra.mxu0 0.0
      %2496 = vmatprep.subr.mxu0 0.0
      %2497 = vmatpush1.msra.mxu0 0.0
      %2498 = vmatprep.subr.mxu0 0.0
      %2499 = vmatpush1.msra.mxu0 0.0
      %2500 = vmatprep.subr.mxu0 0.0
      %2501 = vmatpush1.msra.mxu0 0.0
      %2502 = vmatprep.subr.mxu0 0.0
      %2503 = vmatpush1.msra.mxu0 0.0
      %2504 = vmatprep.subr.mxu0 0.0
      %2505 = vmatpush1.msra.mxu0 0.0
      %2506 = vmatprep.subr.mxu0 0.0
      %2507 = vmatpush1.msra.mxu0 0.0
      %2508 = vmatprep.subr.mxu0 0.0
      %2509 = vmatpush1.msra.mxu0 0.0
      %2510 = vmatprep.subr.mxu0 0.0
      %2511 = vmatpush1.msra.mxu0 0.0
      %2512 = vmatprep.subr.mxu0 0.0
      %2513 = vmatpush1.msra.mxu0 0.0
      %2514 = vmatprep.subr.mxu0 0.0
      %2515 = vmatpush1.msra.mxu0 0.0
      %2516 = vmatprep.subr.mxu0 0.0
      %2517 = vmatpush1.msra.mxu0 0.0
      %2518 = vmatprep.subr.mxu0 0.0
      %2519 = vmatpush1.msra.mxu0 0.0
      %2520 = vmatprep.subr.mxu0 0.0
      %2521 = vmatpush1.msra.mxu0 0.0
      %2522 = vmatprep.subr.mxu0 0.0
      %2523 = vmatpush1.msra.mxu0 0.0
      %2524 = vmatprep.subr.mxu0 0.0
      %2525 = vmatpush1.msra.mxu0 0.0
      %2526 = vmatprep.subr.mxu0 0.0
      %2527 = vmatpush1.msra.mxu0 0.0
      %2528 = vmatprep.subr.mxu0 0.0
      %2529 = vmatpush1.msra.mxu0 0.0
      %2530 = vmatprep.subr.mxu0 0.0
      %2531 = vmatpush1.msra.mxu0 0.0
      %2532 = vmatprep.subr.mxu0 0.0
      %2533 = vmatpush1.msra.mxu0 0.0
      %2534 = vmatprep.subr.mxu0 0.0
      %2535 = vmatpush1.msra.mxu0 0.0
      %2536 = vmatprep.subr.mxu0 0.0
      %2537 = vmatpush1.msra.mxu0 0.0
      %2538 = vmatprep.subr.mxu0 0.0
      %2539 = vmatpush1.msra.mxu0 0.0
      %2540 = vmatprep.subr.mxu0 0.0
      %2541 = vmatpush1.msra.mxu0 0.0
      %2542 = vmatprep.subr.mxu0 0.0
      %2543 = vmatpush1.msra.mxu0 0.0
      %2544 = vmatprep.subr.mxu0 0.0
      %2545 = vmatpush1.msra.mxu0 0.0
      %2546 = vmatprep.subr.mxu0 0.0
      %2547 = vmatpush1.msra.mxu0 0.0
      %2548 = vmatprep.subr.mxu0 0.0
      %2549 = vmatpush1.msra.mxu0 0.0
      %2550 = vmatprep.subr.mxu0 0.0
      %2551 = vmatpush1.msra.mxu0 0.0
      %2552 = vmatprep.mubr.f32.mxu0 0.0
      %2553 = vmatmul.mubr.f32.gmra.mrb[0].mxu0 %v410
      %v2554 = vpop.f32.mrb[0].mxu0
      %v2555 = vadd.f32 0.0, %v2554
      %v2556 = vpop.f32.mrb[0].mxu0
      %2557 = vmatprep.mubr.f32.mxu0 0.0
      %2558 = vmatmul.mubr.f32.gmra.mrb[0].mxu0 %v412
      %v2559 = vpop.f32.mrb[0].mxu0
      %v2560 = vadd.f32 0.0, %v2559
      %v2561 = vpop.f32.mrb[0].mxu0
      %2562 = vmatprep.mubr.f32.mxu0 0.0
      %2563 = vmatmul.mubr.f32.gmra.mrb[0].mxu0 %v414
      %v2564 = vpop.f32.mrb[0].mxu0
      %v2565 = vadd.f32 0.0, %v2564
      %v2566 = vpop.f32.mrb[0].mxu0
      %2567 = vmatprep.mubr.f32.mxu0 0.0
      %2568 = vmatmul.mubr.f32.gmra.mrb[0].mxu0 %v416
      %v2569 = vpop.f32.mrb[0].mxu0
      %v2570 = vadd.f32 0.0, %v2569
      %v2571 = vpop.f32.mrb[0].mxu0
      %2572 = vmatprep.mubr.f32.mxu0 0.0
      %2573 = vmatmul.mubr.f32.gmra.mrb[0].mxu0 %v418
      %v2574 = vpop.f32.mrb[0].mxu0
      %v2575 = vadd.f32 0.0, %v2574
      %v2576 = vpop.f32.mrb[0].mxu0
      %2577 = vmatprep.mubr.f32.mxu0 0.0
      %2578 = vmatmul.mubr.f32.gmra.mrb[0].mxu0 %v420
      %v2579 = vpop.f32.mrb[0].mxu0
      %v2580 = vadd.f32 0.0, %v2579
      %v2581 = vpop.f32.mrb[0].mxu0
      %2582 = vmatprep.mubr.f32.mxu0 0.0
      %2583 = vmatmul.mubr.f32.gmra.mrb[0].mxu0 %v422
      %v2584 = vpop.f32.mrb[0].mxu0
      %v2585 = vadd.f32 0.0, %v2584
      %v2586 = vpop.f32.mrb[0].mxu0
      %2587 = vmatprep.mubr.f32.mxu0 0.0
      %2588 = vmatmul.mubr.f32.gmra.mrb[0].mxu0 %v424
      %v2589 = vpop.f32.mrb[0].mxu0
      %v2590 = vadd.f32 0.0, %v2589
      %v2591 = vpop.f32.mrb[0].mxu0
      %2592 = vmatprep.mubr.f32.mxu0 0.0
      %2593 = vmatmul.mubr.f32.gmra.mrb[0].mxu0 %v426
      %v2594 = vpop.f32.mrb[0].mxu0
      %v2595 = vadd.f32 0.0, %v2594
      %v2596 = vpop.f32.mrb[0].mxu0
      %2597 = vmatprep.mubr.f32.mxu0 0.0
      %2598 = vmatmul.mubr.f32.gmra.mrb[0].mxu0 %v428
      %v2599 = vpop.f32.mrb[0].mxu0
      %v2600 = vadd.f32 0.0, %v2599
      %v2601 = vpop.f32.mrb[0].mxu0
      %2602 = vmatprep.mubr.f32.mxu0 0.0
      %2603 = vmatmul.mubr.f32.gmra.mrb[0].mxu0 %v430
      %v2604 = vpop.f32.mrb[0].mxu0
      %v2605 = vadd.f32 0.0, %v2604
      %v2606 = vpop.f32.mrb[0].mxu0
      %2607 = vmatprep.mubr.f32.mxu0 0.0
      %2608 = vmatmul.mubr.f32.gmra.mrb[0].mxu0 %v432
      %v2609 = vpop.f32.mrb[0].mxu0
      %v2610 = vadd.f32 0.0, %v2609
      %v2611 = vpop.f32.mrb[0].mxu0
      %2612 = vmatprep.mubr.f32.mxu0 0.0
      %2613 = vmatmul.mubr.f32.gmra.mrb[0].mxu0 %v434
      %v2614 = vpop.f32.mrb[0].mxu0
      %v2615 = vadd.f32 0.0, %v2614
      %v2616 = vpop.f32.mrb[0].mxu0
      %2617 = vmatprep.mubr.f32.mxu0 0.0
      %2618 = vmatmul.mubr.f32.gmra.mrb[0].mxu0 %v436
      %v2619 = vpop.f32.mrb[0].mxu0
      %v2620 = vadd.f32 0.0, %v2619
      %v2621 = vpop.f32.mrb[0].mxu0
      %2622 = vmatprep.mubr.f32.mxu0 0.0
      %2623 = vmatmul.mubr.f32.gmra.mrb[0].mxu0 %v438
      %v2624 = vpop.f32.mrb[0].mxu0
      %v2625 = vadd.f32 0.0, %v2624
      %v2626 = vpop.f32.mrb[0].mxu0
      %2627 = vmatprep.mubr.f32.mxu0 0.0
      %2628 = vmatmul.mubr.f32.gmra.mrb[0].mxu0 %v440
      %v2629 = vpop.f32.mrb[0].mxu0
      %v2630 = vadd.f32 0.0, %v2629
      %v2631 = vpop.f32.mrb[0].mxu0
      %2632 = vmatprep.mubr.f32.mxu0 0.0
      %2633 = vmatmul.mubr.f32.gmra.mrb[0].mxu0 %v442
      %v2634 = vpop.f32.mrb[0].mxu0
      %v2635 = vadd.f32 0.0, %v2634
      %v2636 = vpop.f32.mrb[0].mxu0
      %2637 = vmatprep.mubr.f32.mxu0 0.0
      %2638 = vmatmul.mubr.f32.gmra.mrb[0].mxu0 %v444
      %v2639 = vpop.f32.mrb[0].mxu0
      %v2640 = vadd.f32 0.0, %v2639
      %v2641 = vpop.f32.mrb[0].mxu0
      %2642 = vmatprep.mubr.f32.mxu0 0.0
      %2643 = vmatmul.mubr.f32.gmra.mrb[0].mxu0 %v446
      %v2644 = vpop.f32.mrb[0].mxu0
      %v2645 = vadd.f32 0.0, %v2644
      %v2646 = vpop.f32.mrb[0].mxu0
      %2647 = vmatprep.mubr.f32.mxu0 0.0
      %2648 = vmatmul.mubr.f32.gmra.mrb[0].mxu0 %v448
      %v2649 = vpop.f32.mrb[0].mxu0
      %v2650 = vadd.f32 0.0, %v2649
      %v2651 = vpop.f32.mrb[0].mxu0
      %2652 = vmatprep.mubr.f32.mxu0 0.0
      %2653 = vmatmul.mubr.f32.gmra.mrb[0].mxu0 %v450
      %v2654 = vpop.f32.mrb[0].mxu0
      %v2655 = vadd.f32 0.0, %v2654
      %v2656 = vpop.f32.mrb[0].mxu0
      %2657 = vmatprep.mubr.f32.mxu0 0.0
      %2658 = vmatmul.mubr.f32.gmra.mrb[0].mxu0 %v452
      %v2659 = vpop.f32.mrb[0].mxu0
      %v2660 = vadd.f32 0.0, %v2659
      %v2661 = vpop.f32.mrb[0].mxu0
      %2662 = vmatprep.mubr.f32.mxu0 0.0
      %2663 = vmatmul.mubr.f32.gmra.mrb[0].mxu0 %v454
      %v2664 = vpop.f32.mrb[0].mxu0
      %v2665 = vadd.f32 0.0, %v2664
      %v2666 = vpop.f32.mrb[0].mxu0
      %2667 = vmatprep.mubr.f32.mxu0 0.0
      %2668 = vmatmul.mubr.f32.gmra.mrb[0].mxu0 %v456
      %v2669 = vpop.f32.mrb[0].mxu0
      %v2670 = vadd.f32 0.0, %v2669
      %v2671 = vpop.f32.mrb[0].mxu0
      %2672 = vmatprep.mubr.f32.mxu0 0.0
      %2673 = vmatmul.mubr.f32.gmra.mrb[0].mxu0 %v458
      %v2674 = vpop.f32.mrb[0].mxu0
      %v2675 = vadd.f32 0.0, %v2674
      %v2676 = vpop.f32.mrb[0].mxu0
      %2677 = vmatprep.mubr.f32.mxu0 0.0
      %2678 = vmatmul.mubr.f32.gmra.mrb[0].mxu0 %v460
      %v2679 = vpop.f32.mrb[0].mxu0
      %v2680 = vadd.f32 0.0, %v2679
      %v2681 = vpop.f32.mrb[0].mxu0
      %2682 = vmatprep.mubr.f32.mxu0 0.0
      %2683 = vmatmul.mubr.f32.gmra.mrb[0].mxu0 %v462
      %v2684 = vpop.f32.mrb[0].mxu0
      %v2685 = vadd.f32 0.0, %v2684
      %v2686 = vpop.f32.mrb[0].mxu0
      %2687 = vmatprep.mubr.f32.mxu0 0.0
      %2688 = vmatmul.mubr.f32.gmra.mrb[0].mxu0 %v464
      %v2689 = vpop.f32.mrb[0].mxu0
      %v2690 = vadd.f32 0.0, %v2689
      %v2691 = vpop.f32.mrb[0].mxu0
      %2692 = vmatprep.mubr.f32.mxu0 0.0
      %2693 = vmatmul.mubr.f32.gmra.mrb[0].mxu0 %v1670
      %v2694 = vpop.f32.mrb[0].mxu0
      %v2695 = vadd.f32 0.0, %v2694
      %v2696 = vpop.f32.mrb[0].mxu0
      %2697 = vmatprep.mubr.f32.mxu0 0.0
      %2698 = vmatmul.mubr.f32.gmra.mrb[0].mxu0 %v1672
      %v2699 = vpop.f32.mrb[0].mxu0
      %v2700 = vadd.f32 0.0, %v2699
      %v2701 = vpop.f32.mrb[0].mxu0
      %2702 = vmatprep.mubr.f32.mxu0 0.0
      %2703 = vmatmul.mubr.f32.gmra.mrb[0].mxu0 %v2481
      %v2704 = vpop.f32.mrb[0].mxu0
      %v2705 = vadd.f32 0.0, %v2704
      %v2706 = vpop.f32.mrb[0].mxu0
      %2707 = vmatprep.mubr.f32.mxu0 0.0
      %2708 = vmatmul.mubr.f32.gmra.mrb[0].mxu0 %v2483
      %v2709 = vpop.f32.mrb[0].mxu0
      %v2710 = vadd.f32 0.0, %v2709
      %v2711 = vpop.f32.mrb[0].mxu0
      %2712 = vdwg.mxu0
      %v2713 = vadd.f32 %v2441, %v2555
      %v2714 = vadd.f32 %v2442, %v2560
      %v2715 = vadd.f32 %v2443, %v2565
      %v2716 = vadd.f32 %v2444, %v2570
      %v2717 = vadd.f32 %v2445, %v2575
      %v2718 = vadd.f32 %v2446, %v2580
      %v2719 = vadd.f32 %v2447, %v2585
      %v2720 = vadd.f32 %v2448, %v2590
      %v2721 = vadd.f32 %v2449, %v2595
      %v2722 = vadd.f32 %v2450, %v2600
      %v2723 = vadd.f32 %v2451, %v2605
      %v2724 = vadd.f32 %v2452, %v2610
      %v2725 = vadd.f32 %v2453, %v2615
      %v2726 = vadd.f32 %v2454, %v2620
      %v2727 = vadd.f32 %v2455, %v2625
      %v2728 = vadd.f32 %v2456, %v2630
      %v2729 = vadd.f32 %v2457, %v2635
      %v2730 = vadd.f32 %v2458, %v2640
      %v2731 = vadd.f32 %v2459, %v2645
      %v2732 = vadd.f32 %v2460, %v2650
      %v2733 = vadd.f32 %v2461, %v2655
      %v2734 = vadd.f32 %v2462, %v2660
      %v2735 = vadd.f32 %v2463, %v2665
      %v2736 = vadd.f32 %v2464, %v2670
      %v2737 = vadd.f32 %v2465, %v2675
      %v2738 = vadd.f32 %v2466, %v2680
      %v2739 = vadd.f32 %v2467, %v2685
      %v2740 = vadd.f32 %v2468, %v2690
      %v2741 = vadd.f32 %v2469, %v2695
      %v2742 = vadd.f32 %v2470, %v2700
      %v2743 = vadd.f32 %v2471, %v2705
      %v2744 = vadd.f32 %v2472, %v2710
      %v2745 = vrot.slane %v266, 2
      %v2746 = vrot.slane %v267, 2
      %v2747 = vsel %vm987, %v2745, %v2746
      %v2748 = vrot.slane %v268, 2
      %v2749 = vsel %vm987, %v2746, %v2748
      %s2750 = scalar_lea.vmem %s1, 32
      %v2751 = vld [vmem:[%s2750] sm:$0xf]
      %v2752 = vsel %vm401, %v2747, 0
      %v2754 = vsel %vm401, %v2749, 0
      %v2757 = vsel %vm466, %v2751, 0
      %2759 = vmatprep.subr.mxu0 0.0
      %2760 = vmatpush1.msra.mxu0 %v2757
      %2761 = vmatprep.subr.mxu0 0.0
      %2762 = vmatpush1.msra.mxu0 0.0
      %2763 = vmatprep.subr.mxu0 0.0
      %2764 = vmatpush1.msra.mxu0 0.0
      %2765 = vmatprep.subr.mxu0 0.0
      %2766 = vmatpush1.msra.mxu0 0.0
      %2767 = vmatprep.subr.mxu0 0.0
      %2768 = vmatpush1.msra.mxu0 0.0
      %2769 = vmatprep.subr.mxu0 0.0
      %2770 = vmatpush1.msra.mxu0 0.0
      %2771 = vmatprep.subr.mxu0 0.0
      %2772 = vmatpush1.msra.mxu0 0.0
      %2773 = vmatprep.subr.mxu0 0.0
      %2774 = vmatpush1.msra.mxu0 0.0
      %2775 = vmatprep.subr.mxu0 0.0
      %2776 = vmatpush1.msra.mxu0 0.0
      %2777 = vmatprep.subr.mxu0 0.0
      %2778 = vmatpush1.msra.mxu0 0.0
      %2779 = vmatprep.subr.mxu0 0.0
      %2780 = vmatpush1.msra.mxu0 0.0
      %2781 = vmatprep.subr.mxu0 0.0
      %2782 = vmatpush1.msra.mxu0 0.0
      %2783 = vmatprep.subr.mxu0 0.0
      %2784 = vmatpush1.msra.mxu0 0.0
      %2785 = vmatprep.subr.mxu0 0.0
      %2786 = vmatpush1.msra.mxu0 0.0
      %2787 = vmatprep.subr.mxu0 0.0
      %2788 = vmatpush1.msra.mxu0 0.0
      %2789 = vmatprep.subr.mxu0 0.0
      %2790 = vmatpush1.msra.mxu0 0.0
      %2791 = vmatprep.subr.mxu0 0.0
      %2792 = vmatpush1.msra.mxu0 0.0
      %2793 = vmatprep.subr.mxu0 0.0
      %2794 = vmatpush1.msra.mxu0 0.0
      %2795 = vmatprep.subr.mxu0 0.0
      %2796 = vmatpush1.msra.mxu0 0.0
      %2797 = vmatprep.subr.mxu0 0.0
      %2798 = vmatpush1.msra.mxu0 0.0
      %2799 = vmatprep.subr.mxu0 0.0
      %2800 = vmatpush1.msra.mxu0 0.0
      %2801 = vmatprep.subr.mxu0 0.0
      %2802 = vmatpush1.msra.mxu0 0.0
      %2803 = vmatprep.subr.mxu0 0.0
      %2804 = vmatpush1.msra.mxu0 0.0
      %2805 = vmatprep.subr.mxu0 0.0
      %2806 = vmatpush1.msra.mxu0 0.0
      %2807 = vmatprep.subr.mxu0 0.0
      %2808 = vmatpush1.msra.mxu0 0.0
      %2809 = vmatprep.subr.mxu0 0.0
      %2810 = vmatpush1.msra.mxu0 0.0
      %2811 = vmatprep.subr.mxu0 0.0
      %2812 = vmatpush1.msra.mxu0 0.0
      %2813 = vmatprep.subr.mxu0 0.0
      %2814 = vmatpush1.msra.mxu0 0.0
      %2815 = vmatprep.subr.mxu0 0.0
      %2816 = vmatpush1.msra.mxu0 0.0
      %2817 = vmatprep.subr.mxu0 0.0
      %2818 = vmatpush1.msra.mxu0 0.0
      %2819 = vmatprep.subr.mxu0 0.0
      %2820 = vmatpush1.msra.mxu0 0.0
      %2821 = vmatprep.subr.mxu0 0.0
      %2822 = vmatpush1.msra.mxu0 0.0
      %2823 = vmatprep.mubr.f32.mxu0 0.0
      %2824 = vmatmul.mubr.f32.gmra.mrb[0].mxu0 %v1078
      %v2825 = vpop.f32.mrb[0].mxu0
      %v2826 = vadd.f32 0.0, %v2825
      %v2827 = vpop.f32.mrb[0].mxu0
      %2828 = vmatprep.mubr.f32.mxu0 0.0
      %2829 = vmatmul.mubr.f32.gmra.mrb[0].mxu0 %v1080
      %v2830 = vpop.f32.mrb[0].mxu0
      %v2831 = vadd.f32 0.0, %v2830
      %v2832 = vpop.f32.mrb[0].mxu0
      %2833 = vmatprep.mubr.f32.mxu0 0.0
      %2834 = vmatmul.mubr.f32.gmra.mrb[0].mxu0 %v1082
      %v2835 = vpop.f32.mrb[0].mxu0
      %v2836 = vadd.f32 0.0, %v2835
      %v2837 = vpop.f32.mrb[0].mxu0
      %2838 = vmatprep.mubr.f32.mxu0 0.0
      %2839 = vmatmul.mubr.f32.gmra.mrb[0].mxu0 %v1084
      %v2840 = vpop.f32.mrb[0].mxu0
      %v2841 = vadd.f32 0.0, %v2840
      %v2842 = vpop.f32.mrb[0].mxu0
      %2843 = vmatprep.mubr.f32.mxu0 0.0
      %2844 = vmatmul.mubr.f32.gmra.mrb[0].mxu0 %v1086
      %v2845 = vpop.f32.mrb[0].mxu0
      %v2846 = vadd.f32 0.0, %v2845
      %v2847 = vpop.f32.mrb[0].mxu0
      %2848 = vmatprep.mubr.f32.mxu0 0.0
      %2849 = vmatmul.mubr.f32.gmra.mrb[0].mxu0 %v1088
      %v2850 = vpop.f32.mrb[0].mxu0
      %v2851 = vadd.f32 0.0, %v2850
      %v2852 = vpop.f32.mrb[0].mxu0
      %2853 = vmatprep.mubr.f32.mxu0 0.0
      %2854 = vmatmul.mubr.f32.gmra.mrb[0].mxu0 %v1090
      %v2855 = vpop.f32.mrb[0].mxu0
      %v2856 = vadd.f32 0.0, %v2855
      %v2857 = vpop.f32.mrb[0].mxu0
      %2858 = vmatprep.mubr.f32.mxu0 0.0
      %2859 = vmatmul.mubr.f32.gmra.mrb[0].mxu0 %v1092
      %v2860 = vpop.f32.mrb[0].mxu0
      %v2861 = vadd.f32 0.0, %v2860
      %v2862 = vpop.f32.mrb[0].mxu0
      %2863 = vmatprep.mubr.f32.mxu0 0.0
      %2864 = vmatmul.mubr.f32.gmra.mrb[0].mxu0 %v1094
      %v2865 = vpop.f32.mrb[0].mxu0
      %v2866 = vadd.f32 0.0, %v2865
      %v2867 = vpop.f32.mrb[0].mxu0
      %2868 = vmatprep.mubr.f32.mxu0 0.0
      %2869 = vmatmul.mubr.f32.gmra.mrb[0].mxu0 %v1096
      %v2870 = vpop.f32.mrb[0].mxu0
      %v2871 = vadd.f32 0.0, %v2870
      %v2872 = vpop.f32.mrb[0].mxu0
      %2873 = vmatprep.mubr.f32.mxu0 0.0
      %2874 = vmatmul.mubr.f32.gmra.mrb[0].mxu0 %v1098
      %v2875 = vpop.f32.mrb[0].mxu0
      %v2876 = vadd.f32 0.0, %v2875
      %v2877 = vpop.f32.mrb[0].mxu0
      %2878 = vmatprep.mubr.f32.mxu0 0.0
      %2879 = vmatmul.mubr.f32.gmra.mrb[0].mxu0 %v1100
      %v2880 = vpop.f32.mrb[0].mxu0
      %v2881 = vadd.f32 0.0, %v2880
      %v2882 = vpop.f32.mrb[0].mxu0
      %2883 = vmatprep.mubr.f32.mxu0 0.0
      %2884 = vmatmul.mubr.f32.gmra.mrb[0].mxu0 %v1102
      %v2885 = vpop.f32.mrb[0].mxu0
      %v2886 = vadd.f32 0.0, %v2885
      %v2887 = vpop.f32.mrb[0].mxu0
      %2888 = vmatprep.mubr.f32.mxu0 0.0
      %2889 = vmatmul.mubr.f32.gmra.mrb[0].mxu0 %v1104
      %v2890 = vpop.f32.mrb[0].mxu0
      %v2891 = vadd.f32 0.0, %v2890
      %v2892 = vpop.f32.mrb[0].mxu0
      %2893 = vmatprep.mubr.f32.mxu0 0.0
      %2894 = vmatmul.mubr.f32.gmra.mrb[0].mxu0 %v1106
      %v2895 = vpop.f32.mrb[0].mxu0
      %v2896 = vadd.f32 0.0, %v2895
      %v2897 = vpop.f32.mrb[0].mxu0
      %2898 = vmatprep.mubr.f32.mxu0 0.0
      %2899 = vmatmul.mubr.f32.gmra.mrb[0].mxu0 %v1108
      %v2900 = vpop.f32.mrb[0].mxu0
      %v2901 = vadd.f32 0.0, %v2900
      %v2902 = vpop.f32.mrb[0].mxu0
      %2903 = vmatprep.mubr.f32.mxu0 0.0
      %2904 = vmatmul.mubr.f32.gmra.mrb[0].mxu0 %v1110
      %v2905 = vpop.f32.mrb[0].mxu0
      %v2906 = vadd.f32 0.0, %v2905
      %v2907 = vpop.f32.mrb[0].mxu0
      %2908 = vmatprep.mubr.f32.mxu0 0.0
      %2909 = vmatmul.mubr.f32.gmra.mrb[0].mxu0 %v1112
      %v2910 = vpop.f32.mrb[0].mxu0
      %v2911 = vadd.f32 0.0, %v2910
      %v2912 = vpop.f32.mrb[0].mxu0
      %2913 = vmatprep.mubr.f32.mxu0 0.0
      %2914 = vmatmul.mubr.f32.gmra.mrb[0].mxu0 %v1114
      %v2915 = vpop.f32.mrb[0].mxu0
      %v2916 = vadd.f32 0.0, %v2915
      %v2917 = vpop.f32.mrb[0].mxu0
      %2918 = vmatprep.mubr.f32.mxu0 0.0
      %2919 = vmatmul.mubr.f32.gmra.mrb[0].mxu0 %v1116
      %v2920 = vpop.f32.mrb[0].mxu0
      %v2921 = vadd.f32 0.0, %v2920
      %v2922 = vpop.f32.mrb[0].mxu0
      %2923 = vmatprep.mubr.f32.mxu0 0.0
      %2924 = vmatmul.mubr.f32.gmra.mrb[0].mxu0 %v1118
      %v2925 = vpop.f32.mrb[0].mxu0
      %v2926 = vadd.f32 0.0, %v2925
      %v2927 = vpop.f32.mrb[0].mxu0
      %2928 = vmatprep.mubr.f32.mxu0 0.0
      %2929 = vmatmul.mubr.f32.gmra.mrb[0].mxu0 %v1120
      %v2930 = vpop.f32.mrb[0].mxu0
      %v2931 = vadd.f32 0.0, %v2930
      %v2932 = vpop.f32.mrb[0].mxu0
      %2933 = vmatprep.mubr.f32.mxu0 0.0
      %2934 = vmatmul.mubr.f32.gmra.mrb[0].mxu0 %v1122
      %v2935 = vpop.f32.mrb[0].mxu0
      %v2936 = vadd.f32 0.0, %v2935
      %v2937 = vpop.f32.mrb[0].mxu0
      %2938 = vmatprep.mubr.f32.mxu0 0.0
      %2939 = vmatmul.mubr.f32.gmra.mrb[0].mxu0 %v1124
      %v2940 = vpop.f32.mrb[0].mxu0
      %v2941 = vadd.f32 0.0, %v2940
      %v2942 = vpop.f32.mrb[0].mxu0
      %2943 = vmatprep.mubr.f32.mxu0 0.0
      %2944 = vmatmul.mubr.f32.gmra.mrb[0].mxu0 %v1126
      %v2945 = vpop.f32.mrb[0].mxu0
      %v2946 = vadd.f32 0.0, %v2945
      %v2947 = vpop.f32.mrb[0].mxu0
      %2948 = vmatprep.mubr.f32.mxu0 0.0
      %2949 = vmatmul.mubr.f32.gmra.mrb[0].mxu0 %v1128
      %v2950 = vpop.f32.mrb[0].mxu0
      %v2951 = vadd.f32 0.0, %v2950
      %v2952 = vpop.f32.mrb[0].mxu0
      %2953 = vmatprep.mubr.f32.mxu0 0.0
      %2954 = vmatmul.mubr.f32.gmra.mrb[0].mxu0 %v1130
      %v2955 = vpop.f32.mrb[0].mxu0
      %v2956 = vadd.f32 0.0, %v2955
      %v2957 = vpop.f32.mrb[0].mxu0
      %2958 = vmatprep.mubr.f32.mxu0 0.0
      %2959 = vmatmul.mubr.f32.gmra.mrb[0].mxu0 %v1132
      %v2960 = vpop.f32.mrb[0].mxu0
      %v2961 = vadd.f32 0.0, %v2960
      %v2962 = vpop.f32.mrb[0].mxu0
      %2963 = vmatprep.mubr.f32.mxu0 0.0
      %2964 = vmatmul.mubr.f32.gmra.mrb[0].mxu0 %v1941
      %v2965 = vpop.f32.mrb[0].mxu0
      %v2966 = vadd.f32 0.0, %v2965
      %v2967 = vpop.f32.mrb[0].mxu0
      %2968 = vmatprep.mubr.f32.mxu0 0.0
      %2969 = vmatmul.mubr.f32.gmra.mrb[0].mxu0 %v1943
      %v2970 = vpop.f32.mrb[0].mxu0
      %v2971 = vadd.f32 0.0, %v2970
      %v2972 = vpop.f32.mrb[0].mxu0
      %2973 = vmatprep.mubr.f32.mxu0 0.0
      %2974 = vmatmul.mubr.f32.gmra.mrb[0].mxu0 %v2752
      %v2975 = vpop.f32.mrb[0].mxu0
      %v2976 = vadd.f32 0.0, %v2975
      %v2977 = vpop.f32.mrb[0].mxu0
      %2978 = vmatprep.mubr.f32.mxu0 0.0
      %2979 = vmatmul.mubr.f32.gmra.mrb[0].mxu0 %v2754
      %v2980 = vpop.f32.mrb[0].mxu0
      %v2981 = vadd.f32 0.0, %v2980
      %v2982 = vpop.f32.mrb[0].mxu0
      %2983 = vdwg.mxu0
      %v2984 = vadd.f32 %v2713, %v2826
      %v2985 = vadd.f32 %v2714, %v2831
      %v2986 = vadd.f32 %v2715, %v2836
      %v2987 = vadd.f32 %v2716, %v2841
      %v2988 = vadd.f32 %v2717, %v2846
      %v2989 = vadd.f32 %v2718, %v2851
      %v2990 = vadd.f32 %v2719, %v2856
      %v2991 = vadd.f32 %v2720, %v2861
      %v2992 = vadd.f32 %v2721, %v2866
      %v2993 = vadd.f32 %v2722, %v2871
      %v2994 = vadd.f32 %v2723, %v2876
      %v2995 = vadd.f32 %v2724, %v2881
      %v2996 = vadd.f32 %v2725, %v2886
      %v2997 = vadd.f32 %v2726, %v2891
      %v2998 = vadd.f32 %v2727, %v2896
      %v2999 = vadd.f32 %v2728, %v2901
      %v3000 = vadd.f32 %v2729, %v2906
      %v3001 = vadd.f32 %v2730, %v2911
      %v3002 = vadd.f32 %v2731, %v2916
      %v3003 = vadd.f32 %v2732, %v2921
      %v3004 = vadd.f32 %v2733, %v2926
      %v3005 = vadd.f32 %v2734, %v2931
      %v3006 = vadd.f32 %v2735, %v2936
      %v3007 = vadd.f32 %v2736, %v2941
      %v3008 = vadd.f32 %v2737, %v2946
      %v3009 = vadd.f32 %v2738, %v2951
      %v3010 = vadd.f32 %v2739, %v2956
      %v3011 = vadd.f32 %v2740, %v2961
      %v3012 = vadd.f32 %v2741, %v2966
      %v3013 = vadd.f32 %v2742, %v2971
      %v3014 = vadd.f32 %v2743, %v2976
      %v3015 = vadd.f32 %v2744, %v2981
      %vm3016 = vcmask 64512
      %v3017 = vsel %vm3016, %v2984, 0.0
      %v3018 = vsel %vm3016, %v2985, 0.0
      %v3019 = vadd.f32 %v3017, %v3018
      %v3020 = vsel %vm3016, %v2986, 0.0
      %v3021 = vadd.f32 %v3019, %v3020
      %v3022 = vsel %vm3016, %v2987, 0.0
      %v3023 = vadd.f32 %v3021, %v3022
      %v3024 = vsel %vm3016, %v2988, 0.0
      %v3025 = vadd.f32 %v3023, %v3024
      %v3026 = vsel %vm3016, %v2989, 0.0
      %v3027 = vadd.f32 %v3025, %v3026
      %v3028 = vsel %vm3016, %v2990, 0.0
      %v3029 = vadd.f32 %v3027, %v3028
      %v3030 = vsel %vm3016, %v2991, 0.0
      %v3031 = vadd.f32 %v3029, %v3030
      %v3032 = vsel %vm3016, %v2992, 0.0
      %v3033 = vadd.f32 %v3031, %v3032
      %v3034 = vsel %vm3016, %v2993, 0.0
      %v3035 = vadd.f32 %v3033, %v3034
      %v3036 = vsel %vm3016, %v2994, 0.0
      %v3037 = vadd.f32 %v3035, %v3036
      %v3038 = vsel %vm3016, %v2995, 0.0
      %v3039 = vadd.f32 %v3037, %v3038
      %v3040 = vsel %vm3016, %v2996, 0.0
      %v3041 = vadd.f32 %v3039, %v3040
      %v3042 = vsel %vm3016, %v2997, 0.0
      %v3043 = vadd.f32 %v3041, %v3042
      %v3044 = vsel %vm3016, %v2998, 0.0
      %v3045 = vadd.f32 %v3043, %v3044
      %v3046 = vsel %vm3016, %v2999, 0.0
      %v3047 = vadd.f32 %v3045, %v3046
      %v3048 = vsel %vm3016, %v3000, 0.0
      %v3049 = vadd.f32 %v3047, %v3048
      %v3050 = vsel %vm3016, %v3001, 0.0
      %v3051 = vadd.f32 %v3049, %v3050
      %v3052 = vsel %vm3016, %v3002, 0.0
      %v3053 = vadd.f32 %v3051, %v3052
      %v3054 = vsel %vm3016, %v3003, 0.0
      %v3055 = vadd.f32 %v3053, %v3054
      %v3056 = vsel %vm3016, %v3004, 0.0
      %v3057 = vadd.f32 %v3055, %v3056
      %v3058 = vsel %vm3016, %v3005, 0.0
      %v3059 = vadd.f32 %v3057, %v3058
      %v3060 = vsel %vm3016, %v3006, 0.0
      %v3061 = vadd.f32 %v3059, %v3060
      %v3062 = vsel %vm3016, %v3007, 0.0
      %v3063 = vadd.f32 %v3061, %v3062
      %v3064 = vsel %vm3016, %v3008, 0.0
      %v3065 = vadd.f32 %v3063, %v3064
      %v3066 = vsel %vm3016, %v3009, 0.0
      %v3067 = vadd.f32 %v3065, %v3066
      %v3068 = vsel %vm3016, %v3010, 0.0
      %v3069 = vadd.f32 %v3067, %v3068
      %v3070 = vsel %vm3016, %v3011, 0.0
      %v3071 = vadd.f32 %v3069, %v3070
      %v3072 = vsel %vm3016, %v3012, 0.0
      %v3073 = vadd.f32 %v3071, %v3072
      %v3074 = vsel %vm3016, %v3013, 0.0
      %v3075 = vadd.f32 %v3073, %v3074
      %v3076 = vsel %vm3016, %v3014, 0.0
      %v3077 = vadd.f32 %v3075, %v3076
      %v3078 = vsel %vm3016, %v3015, 0.0
      %v3079 = vadd.f32 %v3077, %v3078
      %v3080 = vrot.slane %v3079, 4
      %v3081 = vadd.f32 %v3079, %v3080
      %v3082 = vrot.slane %v3081, 2
      %v3083 = vadd.f32 %v3081, %v3082
      %v3084 = vrot.slane %v3083, 1
      %v3085 = vadd.f32 %v3083, %v3084
      %v3086 = vmul.f32 %v3085, 0.00390625
      %v3087 = vsub.f32 %v2984, %v3086
      %v3088 = vsub.f32 %v2985, %v3086
      %v3089 = vsub.f32 %v2986, %v3086
      %v3090 = vsub.f32 %v2987, %v3086
      %v3091 = vsub.f32 %v2988, %v3086
      %v3092 = vsub.f32 %v2989, %v3086
      %v3093 = vsub.f32 %v2990, %v3086
      %v3094 = vsub.f32 %v2991, %v3086
      %v3095 = vsub.f32 %v2992, %v3086
      %v3096 = vsub.f32 %v2993, %v3086
      %v3097 = vsub.f32 %v2994, %v3086
      %v3098 = vsub.f32 %v2995, %v3086
      %v3099 = vsub.f32 %v2996, %v3086
      %v3100 = vsub.f32 %v2997, %v3086
      %v3101 = vsub.f32 %v2998, %v3086
      %v3102 = vsub.f32 %v2999, %v3086
      %v3103 = vsub.f32 %v3000, %v3086
      %v3104 = vsub.f32 %v3001, %v3086
      %v3105 = vsub.f32 %v3002, %v3086
      %v3106 = vsub.f32 %v3003, %v3086
      %v3107 = vsub.f32 %v3004, %v3086
      %v3108 = vsub.f32 %v3005, %v3086
      %v3109 = vsub.f32 %v3006, %v3086
      %v3110 = vsub.f32 %v3007, %v3086
      %v3111 = vsub.f32 %v3008, %v3086
      %v3112 = vsub.f32 %v3009, %v3086
      %v3113 = vsub.f32 %v3010, %v3086
      %v3114 = vsub.f32 %v3011, %v3086
      %v3115 = vsub.f32 %v3012, %v3086
      %v3116 = vsub.f32 %v3013, %v3086
      %v3117 = vsub.f32 %v3014, %v3086
      %v3118 = vsub.f32 %v3015, %v3086
      %v3119 = vmul.f32 %v3087, %v3087
      %v3120 = vmul.f32 %v3088, %v3088
      %v3121 = vmul.f32 %v3089, %v3089
      %v3122 = vmul.f32 %v3090, %v3090
      %v3123 = vmul.f32 %v3091, %v3091
      %v3124 = vmul.f32 %v3092, %v3092
      %v3125 = vmul.f32 %v3093, %v3093
      %v3126 = vmul.f32 %v3094, %v3094
      %v3127 = vmul.f32 %v3095, %v3095
      %v3128 = vmul.f32 %v3096, %v3096
      %v3129 = vmul.f32 %v3097, %v3097
      %v3130 = vmul.f32 %v3098, %v3098
      %v3131 = vmul.f32 %v3099, %v3099
      %v3132 = vmul.f32 %v3100, %v3100
      %v3133 = vmul.f32 %v3101, %v3101
      %v3134 = vmul.f32 %v3102, %v3102
      %v3135 = vmul.f32 %v3103, %v3103
      %v3136 = vmul.f32 %v3104, %v3104
      %v3137 = vmul.f32 %v3105, %v3105
      %v3138 = vmul.f32 %v3106, %v3106
      %v3139 = vmul.f32 %v3107, %v3107
      %v3140 = vmul.f32 %v3108, %v3108
      %v3141 = vmul.f32 %v3109, %v3109
      %v3142 = vmul.f32 %v3110, %v3110
      %v3143 = vmul.f32 %v3111, %v3111
      %v3144 = vmul.f32 %v3112, %v3112
      %v3145 = vmul.f32 %v3113, %v3113
      %v3146 = vmul.f32 %v3114, %v3114
      %v3147 = vmul.f32 %v3115, %v3115
      %v3148 = vmul.f32 %v3116, %v3116
      %v3149 = vmul.f32 %v3117, %v3117
      %v3150 = vmul.f32 %v3118, %v3118
      %v3151 = vsel %vm3016, %v3119, 0.0
      %v3152 = vsel %vm3016, %v3120, 0.0
      %v3153 = vadd.f32 %v3151, %v3152
      %v3154 = vsel %vm3016, %v3121, 0.0
      %v3155 = vadd.f32 %v3153, %v3154
      %v3156 = vsel %vm3016, %v3122, 0.0
      %v3157 = vadd.f32 %v3155, %v3156
      %v3158 = vsel %vm3016, %v3123, 0.0
      %v3159 = vadd.f32 %v3157, %v3158
      %v3160 = vsel %vm3016, %v3124, 0.0
      %v3161 = vadd.f32 %v3159, %v3160
      %v3162 = vsel %vm3016, %v3125, 0.0
      %v3163 = vadd.f32 %v3161, %v3162
      %v3164 = vsel %vm3016, %v3126, 0.0
      %v3165 = vadd.f32 %v3163, %v3164
      %v3166 = vsel %vm3016, %v3127, 0.0
      %v3167 = vadd.f32 %v3165, %v3166
      %v3168 = vsel %vm3016, %v3128, 0.0
      %v3169 = vadd.f32 %v3167, %v3168
      %v3170 = vsel %vm3016, %v3129, 0.0
      %v3171 = vadd.f32 %v3169, %v3170
      %v3172 = vsel %vm3016, %v3130, 0.0
      %v3173 = vadd.f32 %v3171, %v3172
      %v3174 = vsel %vm3016, %v3131, 0.0
      %v3175 = vadd.f32 %v3173, %v3174
      %v3176 = vsel %vm3016, %v3132, 0.0
      %v3177 = vadd.f32 %v3175, %v3176
      %v3178 = vsel %vm3016, %v3133, 0.0
      %v3179 = vadd.f32 %v3177, %v3178
      %v3180 = vsel %vm3016, %v3134, 0.0
      %v3181 = vadd.f32 %v3179, %v3180
      %v3182 = vsel %vm3016, %v3135, 0.0
      %v3183 = vadd.f32 %v3181, %v3182
      %v3184 = vsel %vm3016, %v3136, 0.0
      %v3185 = vadd.f32 %v3183, %v3184
      %v3186 = vsel %vm3016, %v3137, 0.0
      %v3187 = vadd.f32 %v3185, %v3186
      %v3188 = vsel %vm3016, %v3138, 0.0
      %v3189 = vadd.f32 %v3187, %v3188
      %v3190 = vsel %vm3016, %v3139, 0.0
      %v3191 = vadd.f32 %v3189, %v3190
      %v3192 = vsel %vm3016, %v3140, 0.0
      %v3193 = vadd.f32 %v3191, %v3192
      %v3194 = vsel %vm3016, %v3141, 0.0
      %v3195 = vadd.f32 %v3193, %v3194
      %v3196 = vsel %vm3016, %v3142, 0.0
      %v3197 = vadd.f32 %v3195, %v3196
      %v3198 = vsel %vm3016, %v3143, 0.0
      %v3199 = vadd.f32 %v3197, %v3198
      %v3200 = vsel %vm3016, %v3144, 0.0
      %v3201 = vadd.f32 %v3199, %v3200
      %v3202 = vsel %vm3016, %v3145, 0.0
      %v3203 = vadd.f32 %v3201, %v3202
      %v3204 = vsel %vm3016, %v3146, 0.0
      %v3205 = vadd.f32 %v3203, %v3204
      %v3206 = vsel %vm3016, %v3147, 0.0
      %v3207 = vadd.f32 %v3205, %v3206
      %v3208 = vsel %vm3016, %v3148, 0.0
      %v3209 = vadd.f32 %v3207, %v3208
      %v3210 = vsel %vm3016, %v3149, 0.0
      %v3211 = vadd.f32 %v3209, %v3210
      %v3212 = vsel %vm3016, %v3150, 0.0
      %v3213 = vadd.f32 %v3211, %v3212
      %v3214 = vrot.slane %v3213, 4
      %v3215 = vadd.f32 %v3213, %v3214
      %v3216 = vrot.slane %v3215, 2
      %v3217 = vadd.f32 %v3215, %v3216
      %v3218 = vrot.slane %v3217, 1
      %v3219 = vadd.f32 %v3217, %v3218
      %3220 = vxpose.xlu0.b32.start [1/16] %v2984, 128
      %3221 = vxpose.xlu0.b32.cont [2/16] %v2985, 128
      %3222 = vxpose.xlu0.b32.cont [3/16] %v2986, 128
      %3223 = vxpose.xlu0.b32.cont [4/16] %v2987, 128
      %3224 = vxpose.xlu0.b32.cont [5/16] %v2988, 128
      %3225 = vxpose.xlu0.b32.cont [6/16] %v2989, 128
      %3226 = vxpose.xlu0.b32.cont [7/16] %v2990, 128
      %3227 = vxpose.xlu0.b32.cont [8/16] %v2991, 128
      %3228 = vxpose.xlu0.b32.cont [9/16] %v2992, 128
      %3229 = vxpose.xlu0.b32.cont [10/16] %v2993, 128
      %3230 = vxpose.xlu0.b32.cont [11/16] %v2994, 128
      %3231 = vxpose.xlu0.b32.cont [12/16] %v2995, 128
      %3232 = vxpose.xlu0.b32.cont [13/16] %v2996, 128
      %3233 = vxpose.xlu0.b32.cont [14/16] %v2997, 128
      %3234 = vxpose.xlu0.b32.cont [15/16] %v2998, 128
      %3235 = vxpose.xlu0.b32.end [16/16] %v2999, 128
      %v3236 = vpop.trf.xlu0
      %v3237 = vpop.trf.xlu0
      %v3238 = vpop.trf.xlu0
      %v3239 = vpop.trf.xlu0
      %v3240 = vpop.trf.xlu0
      %v3241 = vpop.trf.xlu0
      %v3242 = vpop.trf.xlu0
      %v3243 = vpop.trf.xlu0
      %v3244 = vpop.trf.xlu0
      %v3245 = vpop.trf.xlu0
      %v3246 = vpop.trf.xlu0
      %v3247 = vpop.trf.xlu0
      %v3248 = vpop.trf.xlu0
      %v3249 = vpop.trf.xlu0
      %v3250 = vpop.trf.xlu0
      %v3251 = vpop.trf.xlu0
      %3252 = vxpose.xlu0.b32.start [1/16] %v3000, 128
      %3253 = vxpose.xlu0.b32.cont [2/16] %v3001, 128
      %3254 = vxpose.xlu0.b32.cont [3/16] %v3002, 128
      %3255 = vxpose.xlu0.b32.cont [4/16] %v3003, 128
      %3256 = vxpose.xlu0.b32.cont [5/16] %v3004, 128
      %3257 = vxpose.xlu0.b32.cont [6/16] %v3005, 128
      %3258 = vxpose.xlu0.b32.cont [7/16] %v3006, 128
      %3259 = vxpose.xlu0.b32.cont [8/16] %v3007, 128
      %3260 = vxpose.xlu0.b32.cont [9/16] %v3008, 128
      %3261 = vxpose.xlu0.b32.cont [10/16] %v3009, 128
      %3262 = vxpose.xlu0.b32.cont [11/16] %v3010, 128
      %3263 = vxpose.xlu0.b32.cont [12/16] %v3011, 128
      %3264 = vxpose.xlu0.b32.cont [13/16] %v3012, 128
      %3265 = vxpose.xlu0.b32.cont [14/16] %v3013, 128
      %3266 = vxpose.xlu0.b32.cont [15/16] %v3014, 128
      %3267 = vxpose.xlu0.b32.end [16/16] %v3015, 128
      %v3268 = vpop.trf.xlu0
      %v3269 = vpop.trf.xlu0
      %v3270 = vpop.trf.xlu0
      %v3271 = vpop.trf.xlu0
      %v3272 = vpop.trf.xlu0
      %v3273 = vpop.trf.xlu0
      %v3274 = vpop.trf.xlu0
      %v3275 = vpop.trf.xlu0
      %v3276 = vpop.trf.xlu0
      %v3277 = vpop.trf.xlu0
      %v3278 = vpop.trf.xlu0
      %v3279 = vpop.trf.xlu0
      %v3280 = vpop.trf.xlu0
      %v3281 = vpop.trf.xlu0
      %v3282 = vpop.trf.xlu0
      %v3283 = vpop.trf.xlu0
      %3284 = vst [vmem:[%s208] sm:$0xff] %v3236
      %3285 = vst [vmem:[%s208 + $0x8] sm:$0xff] %v3268
      %vm3286 = vcmask 57344
      %3287 = vst.msk [vmem:[%s211] sm:$0x1] %vm3286, %v3085
      %3288 = vst.msk [vmem:[%s214] sm:$0x1] %vm3286, %v3219
      %p3289 = scmp.lt.s32.totalorder %s16, 1
      %s3290 = scalar_select %p3289, %s16, 1
      %s3291 = smul.addr %s3290, 2
      %s3292 = smul.addr %s3291, 8
      %s3293 = scalar_lea.vmem %s2, %s3292
      %p3294 = scmp.lt.s32.totalorder %s16, 1
      %s3295 = scalar_select %p3294, %s16, 1
      %s3296 = scalar_lea.vmem %s3, %s3295
      %p3297 = scmp.lt.s32.totalorder %s16, 1
      %s3298 = scalar_select %p3297, %s16, 1
      %s3299 = scalar_lea.vmem %s4, %s3298
      // Predicated region
      $region29: #{conv_basic_forward.2} parent=27 // pred_check
        %p3300 = pneg %p81
      $region30: #{conv_basic_forward.2} parent=27 // pred_check_branch
        %3302 = sbr.rel (%p3300) target = $region32
      $region31: #{conv_basic_forward.2} parent=27 // pred_region
        _
      $region32: #{conv_basic_forward.2} parent=27 // pred_fallthru
        _
      // Predicated region
      $region33: #{conv_basic_forward.2} parent=27 // pred_check
        %p3303 = pneg %p107
      $region34: #{conv_basic_forward.2} parent=27 // pred_check_branch
        %3305 = sbr.rel (%p3303) target = $region36
      $region35: #{conv_basic_forward.2} parent=27 // pred_region
        _
      $region36: #{conv_basic_forward.2} parent=27 // pred_fallthru
        _
      // Predicated region
      $region37: #{conv_basic_forward.2} parent=27 // pred_check
        %p3306 = pneg %p133
      $region38: #{conv_basic_forward.2} parent=27 // pred_check_branch
        %3308 = sbr.rel (%p3306) target = $region40
      $region39: #{conv_basic_forward.2} parent=27 // pred_region
        _
      $region40: #{conv_basic_forward.2} parent=27 // pred_fallthru
        _
    $region28: #{conv_basic_forward.2} parent=5 // pred_fallthru
      _
    %p3309 = scmp.le.s32.totalorder 2, %s11
    // Predicated region
    $region41: #{conv_basic_forward.2} parent=5 // pred_check
      %p3310 = pneg %p3309
    $region42: #{conv_basic_forward.2} parent=5 // pred_check_branch
      %3312 = sbr.rel (%p3310) target = $region44
    $region43: #{conv_basic_forward.2} parent=5 // pred_region
      %s3313 = ssub.s32 %s11, 2
      // Predicated region
      $region45: #{conv_basic_forward.2} parent=43 // pred_check
        %p3314 = pneg %p87
      $region46: #{conv_basic_forward.2} parent=43 // pred_check_branch
        %3316 = sbr.rel (%p3314) target = $region48
      $region47: #{conv_basic_forward.2} parent=43 // pred_region
        %p3317 = scmp.lt.s32.totalorder %s17, 1
        %s3318 = scalar_select %p3317, %s17, 1
        %s3319 = smul.addr %s3318, 2
        %s3320 = smul.addr %s3319, 8
        %s3321 = scalar_lea.vmem %s2, %s3320
      $region48: #{conv_basic_forward.2} parent=43 // pred_fallthru
        _
      // Predicated region
      $region49: #{conv_basic_forward.2} parent=43 // pred_check
        %p3322 = pneg %p113
      $region50: #{conv_basic_forward.2} parent=43 // pred_check_branch
        %3324 = sbr.rel (%p3322) target = $region52
      $region51: #{conv_basic_forward.2} parent=43 // pred_region
        %p3325 = scmp.lt.s32.totalorder %s17, 1
        %s3326 = scalar_select %p3325, %s17, 1
        %s3327 = scalar_lea.vmem %s3, %s3326
      $region52: #{conv_basic_forward.2} parent=43 // pred_fallthru
        _
      // Predicated region
      $region53: #{conv_basic_forward.2} parent=43 // pred_check
        %p3328 = pneg %p139
      $region54: #{conv_basic_forward.2} parent=43 // pred_check_branch
        %3330 = sbr.rel (%p3328) target = $region56
      $region55: #{conv_basic_forward.2} parent=43 // pred_region
        %p3331 = scmp.lt.s32.totalorder %s17, 1
        %s3332 = scalar_select %p3331, %s17, 1
        %s3333 = scalar_lea.vmem %s4, %s3332
      $region56: #{conv_basic_forward.2} parent=43 // pred_fallthru
        _
    $region44: #{conv_basic_forward.2} parent=5 // pred_fallthru
      _
  $region6: #{conv_basic_forward.2} parent=0 // loop_footer
    %s15 = sadd.s32 1, %s11
  $region7: #{conv_basic_forward.2} parent=0 // loop_footer_branch
    %10 = sbr.rel target = $region3
  $region8: #{conv_basic_forward.2} parent=0 // loop_exit
    _

</llo_original>
